<compile_context>
chip_gen: v7x
topology: tpu7x:2x2x1
jax: 0.10.0
libtpu: 0.0.40
codegen_flags: <defaults>
</compile_context>

<pallas_src>
import functools

import jax
import jax.numpy as jnp
from jax.experimental import pallas as pl
from jax.experimental.pallas import tpu as pltpu

NEG_SLOPE = 0.01      # nn.LeakyReLU default
DIM = 5               # protdim = locdim = aadim = 5
CHUNK_ROWS = 32       # in-kernel chunk: (32, 128) f32 = 4 vregs per intermediate

# ---- flat scalar-slab layout (offsets within one branch) --------------------
_O_E1W = 0                       # enc_fc1.weight  (d, 1) -> d scalars
_O_E1B = _O_E1W + DIM            # enc_fc1.bias    (d,)
_O_E2W = _O_E1B + DIM            # enc_fc2.weight  (d, d) row-major [out, in]
_O_E2B = _O_E2W + DIM * DIM      # enc_fc2.bias    (d,)
_O_D1W = _O_E2B + DIM            # dec_fc1.weight  (d, d)
_O_D1B = _O_D1W + DIM * DIM      # dec_fc1.bias    (d,)
_O_D2W = _O_D1B + DIM            # dec_fc2.weight  (1, d) -> d scalars
_O_D2B = _O_D2W + DIM            # dec_fc2.bias    (1,)
PER_BRANCH = _O_D2B + 1          # 76 f32 scalars per branch, 228 total


def _leaky(x):
    # max(x, slope*x) == LeakyReLU(x) exactly for slope in (0, 1); 2 VALU ops.
    return jnp.maximum(x, NEG_SLOPE * x)


def _cdiv(a, b):
    return -(-a // b)


def _round_up(a, m):
    return _cdiv(a, m) * m


# ----------------------------------------------------------------------------- kernel
def autoencoder_kernel(w_ref, x_ref, out_ref):
    # w_ref  : SMEM (3*PER_BRANCH,) f32 -- flat scalar weight slab.
    # x_ref  : VMEM (3, TR, 128) f32 -- batch dense on sublanes AND lanes,
    #          channel (prot/loc/aa) on the leading dim.
    # out_ref: VMEM (3, TR, 128) f32.
    n_chunks = x_ref.shape[1] // CHUNK_ROWS

    # Chunk loop bounds vreg live ranges (~48 vregs peak) so large tiles don't spill.
    @pl.loop(0, n_chunks)
    def _(c):
        r0 = pl.multiple_of(c * CHUNK_ROWS, CHUNK_ROWS)
        rows = pl.ds(r0, CHUNK_ROWS)

        for b in range(3):                       # static unroll: prot / loc / aa
            base = b * PER_BRANCH
            w = lambda off, base=base: w_ref[base + off]   # scalar SMEM read

            xb = x_ref[b, rows, :]               # (CHUNK_ROWS, 128), fully dense

            # encoder fc1: Linear(1 -> d)  -- scalar * vector FMAs (VPU only)
            h1 = [_leaky(w(_O_E1W + j) * xb + w(_O_E1B + j)) for j in range(DIM)]

            # encoder fc2: Linear(d -> d)  -- unrolled scalar FMAs, no XLU
            h2 = []
            for j in range(DIM):
                acc = w(_O_E2W + j * DIM) * h1[0]
                for k in range(1, DIM):
                    acc = acc + w(_O_E2W + j * DIM + k) * h1[k]
                h2.append(_leaky(acc + w(_O_E2B + j)))

            # decoder fc1: Linear(d -> d)
            d1 = []
            for j in range(DIM):
                acc = w(_O_D1W + j * DIM) * h2[0]
                for k in range(1, DIM):
                    acc = acc + w(_O_D1W + j * DIM + k) * h2[k]
                d1.append(_leaky(acc + w(_O_D1B + j)))

            # decoder fc2: Linear(d -> 1)  -- scalar FMAs, no cross-sublane reduce
            o = w(_O_D2W) * d1[0]
            for k in range(1, DIM):
                o = o + w(_O_D2W + k) * d1[k]

            out_ref[b, rows, :] = o + w(_O_D2B)   # fully dense store


# ----------------------------------------------------------------------------- params
def init_params(key, d=DIM):
    """Deterministic synthetic parameters, PyTorch nn.Linear layout (out, in)."""
    ks = jax.random.split(key, 8)
    s = 0.3
    return dict(
        enc_fc1_w=s * jax.random.normal(ks[0], (3, d, 1), jnp.float32),
        enc_fc1_b=s * jax.random.normal(ks[1], (3, d), jnp.float32),
        enc_fc2_w=s * jax.random.normal(ks[2], (3, d, d), jnp.float32),
        enc_fc2_b=s * jax.random.normal(ks[3], (3, d), jnp.float32),
        dec_fc1_w=s * jax.random.normal(ks[4], (3, d, d), jnp.float32),
        dec_fc1_b=s * jax.random.normal(ks[5], (3, d), jnp.float32),
        dec_fc2_w=s * jax.random.normal(ks[6], (3, 1, d), jnp.float32),
        dec_fc2_b=s * jax.random.normal(ks[7], (3, 1), jnp.float32),
    )


def pack_params(params):
    """Pack the 8 tiny parameter arrays into one flat f32 scalar slab (SMEM).

    Called ONCE outside the jitted hot path (per the performance review).
    """
    flats = []
    for b in range(3):
        flats += [
            params["enc_fc1_w"][b].reshape(-1),
            params["enc_fc1_b"][b].reshape(-1),
            params["enc_fc2_w"][b].reshape(-1),   # row-major: [out, in]
            params["enc_fc2_b"][b].reshape(-1),
            params["dec_fc1_w"][b].reshape(-1),
            params["dec_fc1_b"][b].reshape(-1),
            params["dec_fc2_w"][b].reshape(-1),
            params["dec_fc2_b"][b].reshape(-1),
        ]
    w_flat = jnp.concatenate(flats).astype(jnp.float32)
    assert w_flat.shape == (3 * PER_BRANCH,)
    return w_flat


# ----------------------------------------------------------------------------- tiling
def _choose_tiling(n, tile_rows_max):
    """Pick (tile_rows, grid, rows_padded) for batch n (all trace-time Python ints)."""
    rows = max(_cdiv(n, 128), 1)                 # rows of 128 batch elements
    grid = _cdiv(rows, tile_rows_max)
    if grid == 1 and rows > 2 * CHUNK_ROWS:
        grid = 2                                 # give both v7x TensorCores work
    elif grid > 1 and grid % 2 == 1:
        grid += 1                                # even grid: balanced 2-TC sharding
    tile_rows = _round_up(_cdiv(rows, grid), CHUNK_ROWS)
    return tile_rows, grid, grid * tile_rows


# ----------------------------------------------------------------------------- wrapper
@functools.partial(jax.jit, static_argnames=("tile_rows_max",))
def autoencoder_forward(x, w_flat, tile_rows_max=512):
    """x: (N, 3, 1) float -> (N, 3, 1) float32.  w_flat: pack_params(params)."""
    assert tile_rows_max % CHUNK_ROWS == 0
    n = x.shape[0]
    tile_rows, grid, rows_padded = _choose_tiling(n, tile_rows_max)

    # Channel-major, fully dense layout: (3, R, 128), batch on sublanes + lanes.
    # (Wrapper transpose kept: the (N, 3, 1) interface is fixed by the module.)
    x2 = x.reshape(n, 3).astype(jnp.float32).T                  # (3, n)
    x2 = jnp.pad(x2, ((0, 0), (0, rows_padded * 128 - n)))      # zero-pad tail
    x3 = x2.reshape(3, rows_padded, 128)

    grid_spec = pltpu.PrefetchScalarGridSpec(
        num_scalar_prefetch=0,
        grid=(grid,),
        in_specs=[
            # whole 228-float weight slab, resident in SMEM (scalar reads)
            pl.BlockSpec(w_flat.shape, lambda i: (0,),
                         memory_space=pltpu.MemorySpace.SMEM),
            pl.BlockSpec((3, tile_rows, 128), lambda i: (0, i, 0)),
        ],
        out_specs=pl.BlockSpec((3, tile_rows, 128), lambda i: (0, i, 0)),
    )

    # Per-step VMEM: 2 blocks x 2 buffers x 3*tile_rows*128*4 B (~3 MiB at 512
    # rows) -- well under the default scoped-VMEM limits on v5e/v6e/v7x.
    out3 = pl.pallas_call(
        autoencoder_kernel,
        out_shape=jax.ShapeDtypeStruct((3, rows_padded, 128), jnp.float32),
        grid_spec=grid_spec,
        compiler_params=pltpu.CompilerParams(
            dimension_semantics=("parallel",)),
    )(w_flat, x3)

    out2 = out3.reshape(3, rows_padded * 128)[:, :n]
    return out2.T.reshape(n, 3, 1)


# ----------------------------------------------------------------------------- reference
def autoencoder_reference(x, params):
    """Pure-JAX reference mirroring the PyTorch module (for correctness check)."""
    n = x.shape[0]
    outs = []
    for b in range(3):
        xb = x[:, b].astype(jnp.float32)                                  # (n, 1)
        h1 = _leaky(xb @ params["enc_fc1_w"][b].T + params["enc_fc1_b"][b])
        h2 = _leaky(h1 @ params["enc_fc2_w"][b].T + params["enc_fc2_b"][b])
        d1 = _leaky(h2 @ params["dec_fc1_w"][b].T + params["dec_fc1_b"][b])
        ob = d1 @ params["dec_fc2_w"][b].T + params["dec_fc2_b"][b]       # (n, 1)
        outs.append(ob)
    return jnp.concatenate(outs, axis=1).reshape(n, 3, 1)


if __name__ == "__main__":
    key = jax.random.PRNGKey(0)
    k_x, k_p = jax.random.split(key)

    N = 250  # deliberately not a multiple of 128: exercises wrapper-side padding
    x = jax.random.normal(k_x, (N, 3, 1), jnp.float32)   # (batch, [prot,loc,aa], 1)
    params = init_params(k_p, DIM)
    w_flat = pack_params(params)   # packed once, outside the jitted hot path

    out = jax.block_until_ready(autoencoder_forward(x, w_flat))

    ref = autoencoder_reference(x, params)
    assert out.shape == (N, 3, 1)
    assert jnp.allclose(out, ref, atol=1e-5, rtol=1e-5), "Pallas output mismatch vs reference"

    print("KERNEL_OK")
</pallas_src>

<mosaic_0001>
module attributes {stable_mosaic.version = 11 : i64} {
  func.func @autoencoder_kernel(%arg0: i32, %arg1: memref<228xf32, #tpu.memory_space<smem>>, %arg2: memref<3x32x128xf32, #tpu.memory_space<vmem>>, %arg3: memref<3x32x128xf32, #tpu.memory_space<vmem>>) attributes {dimension_semantics = [#tpu.dimension_semantics<parallel>], iteration_bounds = array<i64: 1>, scalar_prefetch = 0 : i64, scratch_operands = 0 : i64, tpu.core_type = #tpu.core_type<tc>, window_params = [{transform_indices = @transform_0, window_bounds = array<i64: 228>}, {transform_indices = @transform_1, window_bounds = array<i64: 3, 32, 128>}, {transform_indices = @transform_2, window_bounds = array<i64: 3, 32, 128>}]} {
    %c0_i32 = arith.constant 0 : i32
    %c1_i32 = arith.constant 1 : i32
    %0 = arith.muli %c0_i32, %c1_i32 : i32
    %c0_i32_0 = arith.constant 0 : i32
    %1 = arith.addi %c0_i32_0, %0 : i32
    %c32_i32 = arith.constant 32 : i32
    %2 = arith.muli %1, %c32_i32 : i32
    %3 = tpu.assume_multiple %2, 32 : i32
    %c0 = arith.constant 0 : index
    %4 = arith.index_cast %3 : i32 to index
    %c0_1 = arith.constant 0 : index
    %5 = vector.load %arg2[%c0, %4, %c0_1] : memref<3x32x128xf32, #tpu.memory_space<vmem>>, vector<1x32x128xf32>
    %6 = vector.shape_cast %5 : vector<1x32x128xf32> to vector<32x128xf32>
    %c0_2 = arith.constant 0 : index
    %7 = memref.load %arg1[%c0_2] : memref<228xf32, #tpu.memory_space<smem>>
    %8 = vector.broadcast %7 : f32 to vector<32x128xf32>
    %9 = arith.mulf %8, %6 : vector<32x128xf32>
    %c5 = arith.constant 5 : index
    %10 = memref.load %arg1[%c5] : memref<228xf32, #tpu.memory_space<smem>>
    %11 = vector.broadcast %10 : f32 to vector<32x128xf32>
    %12 = arith.addf %9, %11 : vector<32x128xf32>
    %cst = arith.constant 0.00999999977 : f32
    %13 = vector.broadcast %cst : f32 to vector<32x128xf32>
    %14 = arith.mulf %13, %12 : vector<32x128xf32>
    %15 = arith.maximumf %12, %14 : vector<32x128xf32>
    %c1 = arith.constant 1 : index
    %16 = memref.load %arg1[%c1] : memref<228xf32, #tpu.memory_space<smem>>
    %17 = vector.broadcast %16 : f32 to vector<32x128xf32>
    %18 = arith.mulf %17, %6 : vector<32x128xf32>
    %c6 = arith.constant 6 : index
    %19 = memref.load %arg1[%c6] : memref<228xf32, #tpu.memory_space<smem>>
    %20 = vector.broadcast %19 : f32 to vector<32x128xf32>
    %21 = arith.addf %18, %20 : vector<32x128xf32>
    %cst_3 = arith.constant 0.00999999977 : f32
    %22 = vector.broadcast %cst_3 : f32 to vector<32x128xf32>
    %23 = arith.mulf %22, %21 : vector<32x128xf32>
    %24 = arith.maximumf %21, %23 : vector<32x128xf32>
    %c2 = arith.constant 2 : index
    %25 = memref.load %arg1[%c2] : memref<228xf32, #tpu.memory_space<smem>>
    %26 = vector.broadcast %25 : f32 to vector<32x128xf32>
    %27 = arith.mulf %26, %6 : vector<32x128xf32>
    %c7 = arith.constant 7 : index
    %28 = memref.load %arg1[%c7] : memref<228xf32, #tpu.memory_space<smem>>
    %29 = vector.broadcast %28 : f32 to vector<32x128xf32>
    %30 = arith.addf %27, %29 : vector<32x128xf32>
    %cst_4 = arith.constant 0.00999999977 : f32
    %31 = vector.broadcast %cst_4 : f32 to vector<32x128xf32>
    %32 = arith.mulf %31, %30 : vector<32x128xf32>
    %33 = arith.maximumf %30, %32 : vector<32x128xf32>
    %c3 = arith.constant 3 : index
    %34 = memref.load %arg1[%c3] : memref<228xf32, #tpu.memory_space<smem>>
    %35 = vector.broadcast %34 : f32 to vector<32x128xf32>
    %36 = arith.mulf %35, %6 : vector<32x128xf32>
    %c8 = arith.constant 8 : index
    %37 = memref.load %arg1[%c8] : memref<228xf32, #tpu.memory_space<smem>>
    %38 = vector.broadcast %37 : f32 to vector<32x128xf32>
    %39 = arith.addf %36, %38 : vector<32x128xf32>
    %cst_5 = arith.constant 0.00999999977 : f32
    %40 = vector.broadcast %cst_5 : f32 to vector<32x128xf32>
    %41 = arith.mulf %40, %39 : vector<32x128xf32>
    %42 = arith.maximumf %39, %41 : vector<32x128xf32>
    %c4 = arith.constant 4 : index
    %43 = memref.load %arg1[%c4] : memref<228xf32, #tpu.memory_space<smem>>
    %44 = vector.broadcast %43 : f32 to vector<32x128xf32>
    %45 = arith.mulf %44, %6 : vector<32x128xf32>
    %c9 = arith.constant 9 : index
    %46 = memref.load %arg1[%c9] : memref<228xf32, #tpu.memory_space<smem>>
    %47 = vector.broadcast %46 : f32 to vector<32x128xf32>
    %48 = arith.addf %45, %47 : vector<32x128xf32>
    %cst_6 = arith.constant 0.00999999977 : f32
    %49 = vector.broadcast %cst_6 : f32 to vector<32x128xf32>
    %50 = arith.mulf %49, %48 : vector<32x128xf32>
    %51 = arith.maximumf %48, %50 : vector<32x128xf32>
    %c10 = arith.constant 10 : index
    %52 = memref.load %arg1[%c10] : memref<228xf32, #tpu.memory_space<smem>>
    %53 = vector.broadcast %52 : f32 to vector<32x128xf32>
    %54 = arith.mulf %53, %15 : vector<32x128xf32>
    %c11 = arith.constant 11 : index
    %55 = memref.load %arg1[%c11] : memref<228xf32, #tpu.memory_space<smem>>
    %56 = vector.broadcast %55 : f32 to vector<32x128xf32>
    %57 = arith.mulf %56, %24 : vector<32x128xf32>
    %58 = arith.addf %54, %57 : vector<32x128xf32>
    %c12 = arith.constant 12 : index
    %59 = memref.load %arg1[%c12] : memref<228xf32, #tpu.memory_space<smem>>
    %60 = vector.broadcast %59 : f32 to vector<32x128xf32>
    %61 = arith.mulf %60, %33 : vector<32x128xf32>
    %62 = arith.addf %58, %61 : vector<32x128xf32>
    %c13 = arith.constant 13 : index
    %63 = memref.load %arg1[%c13] : memref<228xf32, #tpu.memory_space<smem>>
    %64 = vector.broadcast %63 : f32 to vector<32x128xf32>
    %65 = arith.mulf %64, %42 : vector<32x128xf32>
    %66 = arith.addf %62, %65 : vector<32x128xf32>
    %c14 = arith.constant 14 : index
    %67 = memref.load %arg1[%c14] : memref<228xf32, #tpu.memory_space<smem>>
    %68 = vector.broadcast %67 : f32 to vector<32x128xf32>
    %69 = arith.mulf %68, %51 : vector<32x128xf32>
    %70 = arith.addf %66, %69 : vector<32x128xf32>
    %c35 = arith.constant 35 : index
    %71 = memref.load %arg1[%c35] : memref<228xf32, #tpu.memory_space<smem>>
    %72 = vector.broadcast %71 : f32 to vector<32x128xf32>
    %73 = arith.addf %70, %72 : vector<32x128xf32>
    %cst_7 = arith.constant 0.00999999977 : f32
    %74 = vector.broadcast %cst_7 : f32 to vector<32x128xf32>
    %75 = arith.mulf %74, %73 : vector<32x128xf32>
    %76 = arith.maximumf %73, %75 : vector<32x128xf32>
    %c15 = arith.constant 15 : index
    %77 = memref.load %arg1[%c15] : memref<228xf32, #tpu.memory_space<smem>>
    %78 = vector.broadcast %77 : f32 to vector<32x128xf32>
    %79 = arith.mulf %78, %15 : vector<32x128xf32>
    %c16 = arith.constant 16 : index
    %80 = memref.load %arg1[%c16] : memref<228xf32, #tpu.memory_space<smem>>
    %81 = vector.broadcast %80 : f32 to vector<32x128xf32>
    %82 = arith.mulf %81, %24 : vector<32x128xf32>
    %83 = arith.addf %79, %82 : vector<32x128xf32>
    %c17 = arith.constant 17 : index
    %84 = memref.load %arg1[%c17] : memref<228xf32, #tpu.memory_space<smem>>
    %85 = vector.broadcast %84 : f32 to vector<32x128xf32>
    %86 = arith.mulf %85, %33 : vector<32x128xf32>
    %87 = arith.addf %83, %86 : vector<32x128xf32>
    %c18 = arith.constant 18 : index
    %88 = memref.load %arg1[%c18] : memref<228xf32, #tpu.memory_space<smem>>
    %89 = vector.broadcast %88 : f32 to vector<32x128xf32>
    %90 = arith.mulf %89, %42 : vector<32x128xf32>
    %91 = arith.addf %87, %90 : vector<32x128xf32>
    %c19 = arith.constant 19 : index
    %92 = memref.load %arg1[%c19] : memref<228xf32, #tpu.memory_space<smem>>
    %93 = vector.broadcast %92 : f32 to vector<32x128xf32>
    %94 = arith.mulf %93, %51 : vector<32x128xf32>
    %95 = arith.addf %91, %94 : vector<32x128xf32>
    %c36 = arith.constant 36 : index
    %96 = memref.load %arg1[%c36] : memref<228xf32, #tpu.memory_space<smem>>
    %97 = vector.broadcast %96 : f32 to vector<32x128xf32>
    %98 = arith.addf %95, %97 : vector<32x128xf32>
    %cst_8 = arith.constant 0.00999999977 : f32
    %99 = vector.broadcast %cst_8 : f32 to vector<32x128xf32>
    %100 = arith.mulf %99, %98 : vector<32x128xf32>
    %101 = arith.maximumf %98, %100 : vector<32x128xf32>
    %c20 = arith.constant 20 : index
    %102 = memref.load %arg1[%c20] : memref<228xf32, #tpu.memory_space<smem>>
    %103 = vector.broadcast %102 : f32 to vector<32x128xf32>
    %104 = arith.mulf %103, %15 : vector<32x128xf32>
    %c21 = arith.constant 21 : index
    %105 = memref.load %arg1[%c21] : memref<228xf32, #tpu.memory_space<smem>>
    %106 = vector.broadcast %105 : f32 to vector<32x128xf32>
    %107 = arith.mulf %106, %24 : vector<32x128xf32>
    %108 = arith.addf %104, %107 : vector<32x128xf32>
    %c22 = arith.constant 22 : index
    %109 = memref.load %arg1[%c22] : memref<228xf32, #tpu.memory_space<smem>>
    %110 = vector.broadcast %109 : f32 to vector<32x128xf32>
    %111 = arith.mulf %110, %33 : vector<32x128xf32>
    %112 = arith.addf %108, %111 : vector<32x128xf32>
    %c23 = arith.constant 23 : index
    %113 = memref.load %arg1[%c23] : memref<228xf32, #tpu.memory_space<smem>>
    %114 = vector.broadcast %113 : f32 to vector<32x128xf32>
    %115 = arith.mulf %114, %42 : vector<32x128xf32>
    %116 = arith.addf %112, %115 : vector<32x128xf32>
    %c24 = arith.constant 24 : index
    %117 = memref.load %arg1[%c24] : memref<228xf32, #tpu.memory_space<smem>>
    %118 = vector.broadcast %117 : f32 to vector<32x128xf32>
    %119 = arith.mulf %118, %51 : vector<32x128xf32>
    %120 = arith.addf %116, %119 : vector<32x128xf32>
    %c37 = arith.constant 37 : index
    %121 = memref.load %arg1[%c37] : memref<228xf32, #tpu.memory_space<smem>>
    %122 = vector.broadcast %121 : f32 to vector<32x128xf32>
    %123 = arith.addf %120, %122 : vector<32x128xf32>
    %cst_9 = arith.constant 0.00999999977 : f32
    %124 = vector.broadcast %cst_9 : f32 to vector<32x128xf32>
    %125 = arith.mulf %124, %123 : vector<32x128xf32>
    %126 = arith.maximumf %123, %125 : vector<32x128xf32>
    %c25 = arith.constant 25 : index
    %127 = memref.load %arg1[%c25] : memref<228xf32, #tpu.memory_space<smem>>
    %128 = vector.broadcast %127 : f32 to vector<32x128xf32>
    %129 = arith.mulf %128, %15 : vector<32x128xf32>
    %c26 = arith.constant 26 : index
    %130 = memref.load %arg1[%c26] : memref<228xf32, #tpu.memory_space<smem>>
    %131 = vector.broadcast %130 : f32 to vector<32x128xf32>
    %132 = arith.mulf %131, %24 : vector<32x128xf32>
    %133 = arith.addf %129, %132 : vector<32x128xf32>
    %c27 = arith.constant 27 : index
    %134 = memref.load %arg1[%c27] : memref<228xf32, #tpu.memory_space<smem>>
    %135 = vector.broadcast %134 : f32 to vector<32x128xf32>
    %136 = arith.mulf %135, %33 : vector<32x128xf32>
    %137 = arith.addf %133, %136 : vector<32x128xf32>
    %c28 = arith.constant 28 : index
    %138 = memref.load %arg1[%c28] : memref<228xf32, #tpu.memory_space<smem>>
    %139 = vector.broadcast %138 : f32 to vector<32x128xf32>
    %140 = arith.mulf %139, %42 : vector<32x128xf32>
    %141 = arith.addf %137, %140 : vector<32x128xf32>
    %c29 = arith.constant 29 : index
    %142 = memref.load %arg1[%c29] : memref<228xf32, #tpu.memory_space<smem>>
    %143 = vector.broadcast %142 : f32 to vector<32x128xf32>
    %144 = arith.mulf %143, %51 : vector<32x128xf32>
    %145 = arith.addf %141, %144 : vector<32x128xf32>
    %c38 = arith.constant 38 : index
    %146 = memref.load %arg1[%c38] : memref<228xf32, #tpu.memory_space<smem>>
    %147 = vector.broadcast %146 : f32 to vector<32x128xf32>
    %148 = arith.addf %145, %147 : vector<32x128xf32>
    %cst_10 = arith.constant 0.00999999977 : f32
    %149 = vector.broadcast %cst_10 : f32 to vector<32x128xf32>
    %150 = arith.mulf %149, %148 : vector<32x128xf32>
    %151 = arith.maximumf %148, %150 : vector<32x128xf32>
    %c30 = arith.constant 30 : index
    %152 = memref.load %arg1[%c30] : memref<228xf32, #tpu.memory_space<smem>>
    %153 = vector.broadcast %152 : f32 to vector<32x128xf32>
    %154 = arith.mulf %153, %15 : vector<32x128xf32>
    %c31 = arith.constant 31 : index
    %155 = memref.load %arg1[%c31] : memref<228xf32, #tpu.memory_space<smem>>
    %156 = vector.broadcast %155 : f32 to vector<32x128xf32>
    %157 = arith.mulf %156, %24 : vector<32x128xf32>
    %158 = arith.addf %154, %157 : vector<32x128xf32>
    %c32 = arith.constant 32 : index
    %159 = memref.load %arg1[%c32] : memref<228xf32, #tpu.memory_space<smem>>
    %160 = vector.broadcast %159 : f32 to vector<32x128xf32>
    %161 = arith.mulf %160, %33 : vector<32x128xf32>
    %162 = arith.addf %158, %161 : vector<32x128xf32>
    %c33 = arith.constant 33 : index
    %163 = memref.load %arg1[%c33] : memref<228xf32, #tpu.memory_space<smem>>
    %164 = vector.broadcast %163 : f32 to vector<32x128xf32>
    %165 = arith.mulf %164, %42 : vector<32x128xf32>
    %166 = arith.addf %162, %165 : vector<32x128xf32>
    %c34 = arith.constant 34 : index
    %167 = memref.load %arg1[%c34] : memref<228xf32, #tpu.memory_space<smem>>
    %168 = vector.broadcast %167 : f32 to vector<32x128xf32>
    %169 = arith.mulf %168, %51 : vector<32x128xf32>
    %170 = arith.addf %166, %169 : vector<32x128xf32>
    %c39 = arith.constant 39 : index
    %171 = memref.load %arg1[%c39] : memref<228xf32, #tpu.memory_space<smem>>
    %172 = vector.broadcast %171 : f32 to vector<32x128xf32>
    %173 = arith.addf %170, %172 : vector<32x128xf32>
    %cst_11 = arith.constant 0.00999999977 : f32
    %174 = vector.broadcast %cst_11 : f32 to vector<32x128xf32>
    %175 = arith.mulf %174, %173 : vector<32x128xf32>
    %176 = arith.maximumf %173, %175 : vector<32x128xf32>
    %c40 = arith.constant 40 : index
    %177 = memref.load %arg1[%c40] : memref<228xf32, #tpu.memory_space<smem>>
    %178 = vector.broadcast %177 : f32 to vector<32x128xf32>
    %179 = arith.mulf %178, %76 : vector<32x128xf32>
    %c41 = arith.constant 41 : index
    %180 = memref.load %arg1[%c41] : memref<228xf32, #tpu.memory_space<smem>>
    %181 = vector.broadcast %180 : f32 to vector<32x128xf32>
    %182 = arith.mulf %181, %101 : vector<32x128xf32>
    %183 = arith.addf %179, %182 : vector<32x128xf32>
    %c42 = arith.constant 42 : index
    %184 = memref.load %arg1[%c42] : memref<228xf32, #tpu.memory_space<smem>>
    %185 = vector.broadcast %184 : f32 to vector<32x128xf32>
    %186 = arith.mulf %185, %126 : vector<32x128xf32>
    %187 = arith.addf %183, %186 : vector<32x128xf32>
    %c43 = arith.constant 43 : index
    %188 = memref.load %arg1[%c43] : memref<228xf32, #tpu.memory_space<smem>>
    %189 = vector.broadcast %188 : f32 to vector<32x128xf32>
    %190 = arith.mulf %189, %151 : vector<32x128xf32>
    %191 = arith.addf %187, %190 : vector<32x128xf32>
    %c44 = arith.constant 44 : index
    %192 = memref.load %arg1[%c44] : memref<228xf32, #tpu.memory_space<smem>>
    %193 = vector.broadcast %192 : f32 to vector<32x128xf32>
    %194 = arith.mulf %193, %176 : vector<32x128xf32>
    %195 = arith.addf %191, %194 : vector<32x128xf32>
    %c65 = arith.constant 65 : index
    %196 = memref.load %arg1[%c65] : memref<228xf32, #tpu.memory_space<smem>>
    %197 = vector.broadcast %196 : f32 to vector<32x128xf32>
    %198 = arith.addf %195, %197 : vector<32x128xf32>
    %cst_12 = arith.constant 0.00999999977 : f32
    %199 = vector.broadcast %cst_12 : f32 to vector<32x128xf32>
    %200 = arith.mulf %199, %198 : vector<32x128xf32>
    %201 = arith.maximumf %198, %200 : vector<32x128xf32>
    %c45 = arith.constant 45 : index
    %202 = memref.load %arg1[%c45] : memref<228xf32, #tpu.memory_space<smem>>
    %203 = vector.broadcast %202 : f32 to vector<32x128xf32>
    %204 = arith.mulf %203, %76 : vector<32x128xf32>
    %c46 = arith.constant 46 : index
    %205 = memref.load %arg1[%c46] : memref<228xf32, #tpu.memory_space<smem>>
    %206 = vector.broadcast %205 : f32 to vector<32x128xf32>
    %207 = arith.mulf %206, %101 : vector<32x128xf32>
    %208 = arith.addf %204, %207 : vector<32x128xf32>
    %c47 = arith.constant 47 : index
    %209 = memref.load %arg1[%c47] : memref<228xf32, #tpu.memory_space<smem>>
    %210 = vector.broadcast %209 : f32 to vector<32x128xf32>
    %211 = arith.mulf %210, %126 : vector<32x128xf32>
    %212 = arith.addf %208, %211 : vector<32x128xf32>
    %c48 = arith.constant 48 : index
    %213 = memref.load %arg1[%c48] : memref<228xf32, #tpu.memory_space<smem>>
    %214 = vector.broadcast %213 : f32 to vector<32x128xf32>
    %215 = arith.mulf %214, %151 : vector<32x128xf32>
    %216 = arith.addf %212, %215 : vector<32x128xf32>
    %c49 = arith.constant 49 : index
    %217 = memref.load %arg1[%c49] : memref<228xf32, #tpu.memory_space<smem>>
    %218 = vector.broadcast %217 : f32 to vector<32x128xf32>
    %219 = arith.mulf %218, %176 : vector<32x128xf32>
    %220 = arith.addf %216, %219 : vector<32x128xf32>
    %c66 = arith.constant 66 : index
    %221 = memref.load %arg1[%c66] : memref<228xf32, #tpu.memory_space<smem>>
    %222 = vector.broadcast %221 : f32 to vector<32x128xf32>
    %223 = arith.addf %220, %222 : vector<32x128xf32>
    %cst_13 = arith.constant 0.00999999977 : f32
    %224 = vector.broadcast %cst_13 : f32 to vector<32x128xf32>
    %225 = arith.mulf %224, %223 : vector<32x128xf32>
    %226 = arith.maximumf %223, %225 : vector<32x128xf32>
    %c50 = arith.constant 50 : index
    %227 = memref.load %arg1[%c50] : memref<228xf32, #tpu.memory_space<smem>>
    %228 = vector.broadcast %227 : f32 to vector<32x128xf32>
    %229 = arith.mulf %228, %76 : vector<32x128xf32>
    %c51 = arith.constant 51 : index
    %230 = memref.load %arg1[%c51] : memref<228xf32, #tpu.memory_space<smem>>
    %231 = vector.broadcast %230 : f32 to vector<32x128xf32>
    %232 = arith.mulf %231, %101 : vector<32x128xf32>
    %233 = arith.addf %229, %232 : vector<32x128xf32>
    %c52 = arith.constant 52 : index
    %234 = memref.load %arg1[%c52] : memref<228xf32, #tpu.memory_space<smem>>
    %235 = vector.broadcast %234 : f32 to vector<32x128xf32>
    %236 = arith.mulf %235, %126 : vector<32x128xf32>
    %237 = arith.addf %233, %236 : vector<32x128xf32>
    %c53 = arith.constant 53 : index
    %238 = memref.load %arg1[%c53] : memref<228xf32, #tpu.memory_space<smem>>
    %239 = vector.broadcast %238 : f32 to vector<32x128xf32>
    %240 = arith.mulf %239, %151 : vector<32x128xf32>
    %241 = arith.addf %237, %240 : vector<32x128xf32>
    %c54 = arith.constant 54 : index
    %242 = memref.load %arg1[%c54] : memref<228xf32, #tpu.memory_space<smem>>
    %243 = vector.broadcast %242 : f32 to vector<32x128xf32>
    %244 = arith.mulf %243, %176 : vector<32x128xf32>
    %245 = arith.addf %241, %244 : vector<32x128xf32>
    %c67 = arith.constant 67 : index
    %246 = memref.load %arg1[%c67] : memref<228xf32, #tpu.memory_space<smem>>
    %247 = vector.broadcast %246 : f32 to vector<32x128xf32>
    %248 = arith.addf %245, %247 : vector<32x128xf32>
    %cst_14 = arith.constant 0.00999999977 : f32
    %249 = vector.broadcast %cst_14 : f32 to vector<32x128xf32>
    %250 = arith.mulf %249, %248 : vector<32x128xf32>
    %251 = arith.maximumf %248, %250 : vector<32x128xf32>
    %c55 = arith.constant 55 : index
    %252 = memref.load %arg1[%c55] : memref<228xf32, #tpu.memory_space<smem>>
    %253 = vector.broadcast %252 : f32 to vector<32x128xf32>
    %254 = arith.mulf %253, %76 : vector<32x128xf32>
    %c56 = arith.constant 56 : index
    %255 = memref.load %arg1[%c56] : memref<228xf32, #tpu.memory_space<smem>>
    %256 = vector.broadcast %255 : f32 to vector<32x128xf32>
    %257 = arith.mulf %256, %101 : vector<32x128xf32>
    %258 = arith.addf %254, %257 : vector<32x128xf32>
    %c57 = arith.constant 57 : index
    %259 = memref.load %arg1[%c57] : memref<228xf32, #tpu.memory_space<smem>>
    %260 = vector.broadcast %259 : f32 to vector<32x128xf32>
    %261 = arith.mulf %260, %126 : vector<32x128xf32>
    %262 = arith.addf %258, %261 : vector<32x128xf32>
    %c58 = arith.constant 58 : index
    %263 = memref.load %arg1[%c58] : memref<228xf32, #tpu.memory_space<smem>>
    %264 = vector.broadcast %263 : f32 to vector<32x128xf32>
    %265 = arith.mulf %264, %151 : vector<32x128xf32>
    %266 = arith.addf %262, %265 : vector<32x128xf32>
    %c59 = arith.constant 59 : index
    %267 = memref.load %arg1[%c59] : memref<228xf32, #tpu.memory_space<smem>>
    %268 = vector.broadcast %267 : f32 to vector<32x128xf32>
    %269 = arith.mulf %268, %176 : vector<32x128xf32>
    %270 = arith.addf %266, %269 : vector<32x128xf32>
    %c68 = arith.constant 68 : index
    %271 = memref.load %arg1[%c68] : memref<228xf32, #tpu.memory_space<smem>>
    %272 = vector.broadcast %271 : f32 to vector<32x128xf32>
    %273 = arith.addf %270, %272 : vector<32x128xf32>
    %cst_15 = arith.constant 0.00999999977 : f32
    %274 = vector.broadcast %cst_15 : f32 to vector<32x128xf32>
    %275 = arith.mulf %274, %273 : vector<32x128xf32>
    %276 = arith.maximumf %273, %275 : vector<32x128xf32>
    %c60 = arith.constant 60 : index
    %277 = memref.load %arg1[%c60] : memref<228xf32, #tpu.memory_space<smem>>
    %278 = vector.broadcast %277 : f32 to vector<32x128xf32>
    %279 = arith.mulf %278, %76 : vector<32x128xf32>
    %c61 = arith.constant 61 : index
    %280 = memref.load %arg1[%c61] : memref<228xf32, #tpu.memory_space<smem>>
    %281 = vector.broadcast %280 : f32 to vector<32x128xf32>
    %282 = arith.mulf %281, %101 : vector<32x128xf32>
    %283 = arith.addf %279, %282 : vector<32x128xf32>
    %c62 = arith.constant 62 : index
    %284 = memref.load %arg1[%c62] : memref<228xf32, #tpu.memory_space<smem>>
    %285 = vector.broadcast %284 : f32 to vector<32x128xf32>
    %286 = arith.mulf %285, %126 : vector<32x128xf32>
    %287 = arith.addf %283, %286 : vector<32x128xf32>
    %c63 = arith.constant 63 : index
    %288 = memref.load %arg1[%c63] : memref<228xf32, #tpu.memory_space<smem>>
    %289 = vector.broadcast %288 : f32 to vector<32x128xf32>
    %290 = arith.mulf %289, %151 : vector<32x128xf32>
    %291 = arith.addf %287, %290 : vector<32x128xf32>
    %c64 = arith.constant 64 : index
    %292 = memref.load %arg1[%c64] : memref<228xf32, #tpu.memory_space<smem>>
    %293 = vector.broadcast %292 : f32 to vector<32x128xf32>
    %294 = arith.mulf %293, %176 : vector<32x128xf32>
    %295 = arith.addf %291, %294 : vector<32x128xf32>
    %c69 = arith.constant 69 : index
    %296 = memref.load %arg1[%c69] : memref<228xf32, #tpu.memory_space<smem>>
    %297 = vector.broadcast %296 : f32 to vector<32x128xf32>
    %298 = arith.addf %295, %297 : vector<32x128xf32>
    %cst_16 = arith.constant 0.00999999977 : f32
    %299 = vector.broadcast %cst_16 : f32 to vector<32x128xf32>
    %300 = arith.mulf %299, %298 : vector<32x128xf32>
    %301 = arith.maximumf %298, %300 : vector<32x128xf32>
    %c70 = arith.constant 70 : index
    %302 = memref.load %arg1[%c70] : memref<228xf32, #tpu.memory_space<smem>>
    %303 = vector.broadcast %302 : f32 to vector<32x128xf32>
    %304 = arith.mulf %303, %201 : vector<32x128xf32>
    %c71 = arith.constant 71 : index
    %305 = memref.load %arg1[%c71] : memref<228xf32, #tpu.memory_space<smem>>
    %306 = vector.broadcast %305 : f32 to vector<32x128xf32>
    %307 = arith.mulf %306, %226 : vector<32x128xf32>
    %308 = arith.addf %304, %307 : vector<32x128xf32>
    %c72 = arith.constant 72 : index
    %309 = memref.load %arg1[%c72] : memref<228xf32, #tpu.memory_space<smem>>
    %310 = vector.broadcast %309 : f32 to vector<32x128xf32>
    %311 = arith.mulf %310, %251 : vector<32x128xf32>
    %312 = arith.addf %308, %311 : vector<32x128xf32>
    %c73 = arith.constant 73 : index
    %313 = memref.load %arg1[%c73] : memref<228xf32, #tpu.memory_space<smem>>
    %314 = vector.broadcast %313 : f32 to vector<32x128xf32>
    %315 = arith.mulf %314, %276 : vector<32x128xf32>
    %316 = arith.addf %312, %315 : vector<32x128xf32>
    %c74 = arith.constant 74 : index
    %317 = memref.load %arg1[%c74] : memref<228xf32, #tpu.memory_space<smem>>
    %318 = vector.broadcast %317 : f32 to vector<32x128xf32>
    %319 = arith.mulf %318, %301 : vector<32x128xf32>
    %320 = arith.addf %316, %319 : vector<32x128xf32>
    %c75 = arith.constant 75 : index
    %321 = memref.load %arg1[%c75] : memref<228xf32, #tpu.memory_space<smem>>
    %322 = vector.broadcast %321 : f32 to vector<32x128xf32>
    %323 = arith.addf %320, %322 : vector<32x128xf32>
    %c0_17 = arith.constant 0 : index
    %324 = arith.index_cast %3 : i32 to index
    %c0_18 = arith.constant 0 : index
    %325 = vector.load %arg3[%c0_17, %324, %c0_18] : memref<3x32x128xf32, #tpu.memory_space<vmem>>, vector<1x32x128xf32>
    %326 = vector.shape_cast %325 : vector<1x32x128xf32> to vector<32x128xf32>
    %327 = vector.shape_cast %323 : vector<32x128xf32> to vector<1x32x128xf32>
    tpu.vector_store %arg3[%c0_17, %324, %c0_18], %327 {strides = array<i32>} : memref<3x32x128xf32, #tpu.memory_space<vmem>>, vector<1x32x128xf32>,
    %c1_19 = arith.constant 1 : index
    %328 = arith.index_cast %3 : i32 to index
    %c0_20 = arith.constant 0 : index
    %329 = vector.load %arg2[%c1_19, %328, %c0_20] : memref<3x32x128xf32, #tpu.memory_space<vmem>>, vector<1x32x128xf32>
    %330 = vector.shape_cast %329 : vector<1x32x128xf32> to vector<32x128xf32>
    %c76 = arith.constant 76 : index
    %331 = memref.load %arg1[%c76] : memref<228xf32, #tpu.memory_space<smem>>
    %332 = vector.broadcast %331 : f32 to vector<32x128xf32>
    %333 = arith.mulf %332, %330 : vector<32x128xf32>
    %c81 = arith.constant 81 : index
    %334 = memref.load %arg1[%c81] : memref<228xf32, #tpu.memory_space<smem>>
    %335 = vector.broadcast %334 : f32 to vector<32x128xf32>
    %336 = arith.addf %333, %335 : vector<32x128xf32>
    %cst_21 = arith.constant 0.00999999977 : f32
    %337 = vector.broadcast %cst_21 : f32 to vector<32x128xf32>
    %338 = arith.mulf %337, %336 : vector<32x128xf32>
    %339 = arith.maximumf %336, %338 : vector<32x128xf32>
    %c77 = arith.constant 77 : index
    %340 = memref.load %arg1[%c77] : memref<228xf32, #tpu.memory_space<smem>>
    %341 = vector.broadcast %340 : f32 to vector<32x128xf32>
    %342 = arith.mulf %341, %330 : vector<32x128xf32>
    %c82 = arith.constant 82 : index
    %343 = memref.load %arg1[%c82] : memref<228xf32, #tpu.memory_space<smem>>
    %344 = vector.broadcast %343 : f32 to vector<32x128xf32>
    %345 = arith.addf %342, %344 : vector<32x128xf32>
    %cst_22 = arith.constant 0.00999999977 : f32
    %346 = vector.broadcast %cst_22 : f32 to vector<32x128xf32>
    %347 = arith.mulf %346, %345 : vector<32x128xf32>
    %348 = arith.maximumf %345, %347 : vector<32x128xf32>
    %c78 = arith.constant 78 : index
    %349 = memref.load %arg1[%c78] : memref<228xf32, #tpu.memory_space<smem>>
    %350 = vector.broadcast %349 : f32 to vector<32x128xf32>
    %351 = arith.mulf %350, %330 : vector<32x128xf32>
    %c83 = arith.constant 83 : index
    %352 = memref.load %arg1[%c83] : memref<228xf32, #tpu.memory_space<smem>>
    %353 = vector.broadcast %352 : f32 to vector<32x128xf32>
    %354 = arith.addf %351, %353 : vector<32x128xf32>
    %cst_23 = arith.constant 0.00999999977 : f32
    %355 = vector.broadcast %cst_23 : f32 to vector<32x128xf32>
    %356 = arith.mulf %355, %354 : vector<32x128xf32>
    %357 = arith.maximumf %354, %356 : vector<32x128xf32>
    %c79 = arith.constant 79 : index
    %358 = memref.load %arg1[%c79] : memref<228xf32, #tpu.memory_space<smem>>
    %359 = vector.broadcast %358 : f32 to vector<32x128xf32>
    %360 = arith.mulf %359, %330 : vector<32x128xf32>
    %c84 = arith.constant 84 : index
    %361 = memref.load %arg1[%c84] : memref<228xf32, #tpu.memory_space<smem>>
    %362 = vector.broadcast %361 : f32 to vector<32x128xf32>
    %363 = arith.addf %360, %362 : vector<32x128xf32>
    %cst_24 = arith.constant 0.00999999977 : f32
    %364 = vector.broadcast %cst_24 : f32 to vector<32x128xf32>
    %365 = arith.mulf %364, %363 : vector<32x128xf32>
    %366 = arith.maximumf %363, %365 : vector<32x128xf32>
    %c80 = arith.constant 80 : index
    %367 = memref.load %arg1[%c80] : memref<228xf32, #tpu.memory_space<smem>>
    %368 = vector.broadcast %367 : f32 to vector<32x128xf32>
    %369 = arith.mulf %368, %330 : vector<32x128xf32>
    %c85 = arith.constant 85 : index
    %370 = memref.load %arg1[%c85] : memref<228xf32, #tpu.memory_space<smem>>
    %371 = vector.broadcast %370 : f32 to vector<32x128xf32>
    %372 = arith.addf %369, %371 : vector<32x128xf32>
    %cst_25 = arith.constant 0.00999999977 : f32
    %373 = vector.broadcast %cst_25 : f32 to vector<32x128xf32>
    %374 = arith.mulf %373, %372 : vector<32x128xf32>
    %375 = arith.maximumf %372, %374 : vector<32x128xf32>
    %c86 = arith.constant 86 : index
    %376 = memref.load %arg1[%c86] : memref<228xf32, #tpu.memory_space<smem>>
    %377 = vector.broadcast %376 : f32 to vector<32x128xf32>
    %378 = arith.mulf %377, %339 : vector<32x128xf32>
    %c87 = arith.constant 87 : index
    %379 = memref.load %arg1[%c87] : memref<228xf32, #tpu.memory_space<smem>>
    %380 = vector.broadcast %379 : f32 to vector<32x128xf32>
    %381 = arith.mulf %380, %348 : vector<32x128xf32>
    %382 = arith.addf %378, %381 : vector<32x128xf32>
    %c88 = arith.constant 88 : index
    %383 = memref.load %arg1[%c88] : memref<228xf32, #tpu.memory_space<smem>>
    %384 = vector.broadcast %383 : f32 to vector<32x128xf32>
    %385 = arith.mulf %384, %357 : vector<32x128xf32>
    %386 = arith.addf %382, %385 : vector<32x128xf32>
    %c89 = arith.constant 89 : index
    %387 = memref.load %arg1[%c89] : memref<228xf32, #tpu.memory_space<smem>>
    %388 = vector.broadcast %387 : f32 to vector<32x128xf32>
    %389 = arith.mulf %388, %366 : vector<32x128xf32>
    %390 = arith.addf %386, %389 : vector<32x128xf32>
    %c90 = arith.constant 90 : index
    %391 = memref.load %arg1[%c90] : memref<228xf32, #tpu.memory_space<smem>>
    %392 = vector.broadcast %391 : f32 to vector<32x128xf32>
    %393 = arith.mulf %392, %375 : vector<32x128xf32>
    %394 = arith.addf %390, %393 : vector<32x128xf32>
    %c111 = arith.constant 111 : index
    %395 = memref.load %arg1[%c111] : memref<228xf32, #tpu.memory_space<smem>>
    %396 = vector.broadcast %395 : f32 to vector<32x128xf32>
    %397 = arith.addf %394, %396 : vector<32x128xf32>
    %cst_26 = arith.constant 0.00999999977 : f32
    %398 = vector.broadcast %cst_26 : f32 to vector<32x128xf32>
    %399 = arith.mulf %398, %397 : vector<32x128xf32>
    %400 = arith.maximumf %397, %399 : vector<32x128xf32>
    %c91 = arith.constant 91 : index
    %401 = memref.load %arg1[%c91] : memref<228xf32, #tpu.memory_space<smem>>
    %402 = vector.broadcast %401 : f32 to vector<32x128xf32>
    %403 = arith.mulf %402, %339 : vector<32x128xf32>
    %c92 = arith.constant 92 : index
    %404 = memref.load %arg1[%c92] : memref<228xf32, #tpu.memory_space<smem>>
    %405 = vector.broadcast %404 : f32 to vector<32x128xf32>
    %406 = arith.mulf %405, %348 : vector<32x128xf32>
    %407 = arith.addf %403, %406 : vector<32x128xf32>
    %c93 = arith.constant 93 : index
    %408 = memref.load %arg1[%c93] : memref<228xf32, #tpu.memory_space<smem>>
    %409 = vector.broadcast %408 : f32 to vector<32x128xf32>
    %410 = arith.mulf %409, %357 : vector<32x128xf32>
    %411 = arith.addf %407, %410 : vector<32x128xf32>
    %c94 = arith.constant 94 : index
    %412 = memref.load %arg1[%c94] : memref<228xf32, #tpu.memory_space<smem>>
    %413 = vector.broadcast %412 : f32 to vector<32x128xf32>
    %414 = arith.mulf %413, %366 : vector<32x128xf32>
    %415 = arith.addf %411, %414 : vector<32x128xf32>
    %c95 = arith.constant 95 : index
    %416 = memref.load %arg1[%c95] : memref<228xf32, #tpu.memory_space<smem>>
    %417 = vector.broadcast %416 : f32 to vector<32x128xf32>
    %418 = arith.mulf %417, %375 : vector<32x128xf32>
    %419 = arith.addf %415, %418 : vector<32x128xf32>
    %c112 = arith.constant 112 : index
    %420 = memref.load %arg1[%c112] : memref<228xf32, #tpu.memory_space<smem>>
    %421 = vector.broadcast %420 : f32 to vector<32x128xf32>
    %422 = arith.addf %419, %421 : vector<32x128xf32>
    %cst_27 = arith.constant 0.00999999977 : f32
    %423 = vector.broadcast %cst_27 : f32 to vector<32x128xf32>
    %424 = arith.mulf %423, %422 : vector<32x128xf32>
    %425 = arith.maximumf %422, %424 : vector<32x128xf32>
    %c96 = arith.constant 96 : index
    %426 = memref.load %arg1[%c96] : memref<228xf32, #tpu.memory_space<smem>>
    %427 = vector.broadcast %426 : f32 to vector<32x128xf32>
    %428 = arith.mulf %427, %339 : vector<32x128xf32>
    %c97 = arith.constant 97 : index
    %429 = memref.load %arg1[%c97] : memref<228xf32, #tpu.memory_space<smem>>
    %430 = vector.broadcast %429 : f32 to vector<32x128xf32>
    %431 = arith.mulf %430, %348 : vector<32x128xf32>
    %432 = arith.addf %428, %431 : vector<32x128xf32>
    %c98 = arith.constant 98 : index
    %433 = memref.load %arg1[%c98] : memref<228xf32, #tpu.memory_space<smem>>
    %434 = vector.broadcast %433 : f32 to vector<32x128xf32>
    %435 = arith.mulf %434, %357 : vector<32x128xf32>
    %436 = arith.addf %432, %435 : vector<32x128xf32>
    %c99 = arith.constant 99 : index
    %437 = memref.load %arg1[%c99] : memref<228xf32, #tpu.memory_space<smem>>
    %438 = vector.broadcast %437 : f32 to vector<32x128xf32>
    %439 = arith.mulf %438, %366 : vector<32x128xf32>
    %440 = arith.addf %436, %439 : vector<32x128xf32>
    %c100 = arith.constant 100 : index
    %441 = memref.load %arg1[%c100] : memref<228xf32, #tpu.memory_space<smem>>
    %442 = vector.broadcast %441 : f32 to vector<32x128xf32>
    %443 = arith.mulf %442, %375 : vector<32x128xf32>
    %444 = arith.addf %440, %443 : vector<32x128xf32>
    %c113 = arith.constant 113 : index
    %445 = memref.load %arg1[%c113] : memref<228xf32, #tpu.memory_space<smem>>
    %446 = vector.broadcast %445 : f32 to vector<32x128xf32>
    %447 = arith.addf %444, %446 : vector<32x128xf32>
    %cst_28 = arith.constant 0.00999999977 : f32
    %448 = vector.broadcast %cst_28 : f32 to vector<32x128xf32>
    %449 = arith.mulf %448, %447 : vector<32x128xf32>
    %450 = arith.maximumf %447, %449 : vector<32x128xf32>
    %c101 = arith.constant 101 : index
    %451 = memref.load %arg1[%c101] : memref<228xf32, #tpu.memory_space<smem>>
    %452 = vector.broadcast %451 : f32 to vector<32x128xf32>
    %453 = arith.mulf %452, %339 : vector<32x128xf32>
    %c102 = arith.constant 102 : index
    %454 = memref.load %arg1[%c102] : memref<228xf32, #tpu.memory_space<smem>>
    %455 = vector.broadcast %454 : f32 to vector<32x128xf32>
    %456 = arith.mulf %455, %348 : vector<32x128xf32>
    %457 = arith.addf %453, %456 : vector<32x128xf32>
    %c103 = arith.constant 103 : index
    %458 = memref.load %arg1[%c103] : memref<228xf32, #tpu.memory_space<smem>>
    %459 = vector.broadcast %458 : f32 to vector<32x128xf32>
    %460 = arith.mulf %459, %357 : vector<32x128xf32>
    %461 = arith.addf %457, %460 : vector<32x128xf32>
    %c104 = arith.constant 104 : index
    %462 = memref.load %arg1[%c104] : memref<228xf32, #tpu.memory_space<smem>>
    %463 = vector.broadcast %462 : f32 to vector<32x128xf32>
    %464 = arith.mulf %463, %366 : vector<32x128xf32>
    %465 = arith.addf %461, %464 : vector<32x128xf32>
    %c105 = arith.constant 105 : index
    %466 = memref.load %arg1[%c105] : memref<228xf32, #tpu.memory_space<smem>>
    %467 = vector.broadcast %466 : f32 to vector<32x128xf32>
    %468 = arith.mulf %467, %375 : vector<32x128xf32>
    %469 = arith.addf %465, %468 : vector<32x128xf32>
    %c114 = arith.constant 114 : index
    %470 = memref.load %arg1[%c114] : memref<228xf32, #tpu.memory_space<smem>>
    %471 = vector.broadcast %470 : f32 to vector<32x128xf32>
    %472 = arith.addf %469, %471 : vector<32x128xf32>
    %cst_29 = arith.constant 0.00999999977 : f32
    %473 = vector.broadcast %cst_29 : f32 to vector<32x128xf32>
    %474 = arith.mulf %473, %472 : vector<32x128xf32>
    %475 = arith.maximumf %472, %474 : vector<32x128xf32>
    %c106 = arith.constant 106 : index
    %476 = memref.load %arg1[%c106] : memref<228xf32, #tpu.memory_space<smem>>
    %477 = vector.broadcast %476 : f32 to vector<32x128xf32>
    %478 = arith.mulf %477, %339 : vector<32x128xf32>
    %c107 = arith.constant 107 : index
    %479 = memref.load %arg1[%c107] : memref<228xf32, #tpu.memory_space<smem>>
    %480 = vector.broadcast %479 : f32 to vector<32x128xf32>
    %481 = arith.mulf %480, %348 : vector<32x128xf32>
    %482 = arith.addf %478, %481 : vector<32x128xf32>
    %c108 = arith.constant 108 : index
    %483 = memref.load %arg1[%c108] : memref<228xf32, #tpu.memory_space<smem>>
    %484 = vector.broadcast %483 : f32 to vector<32x128xf32>
    %485 = arith.mulf %484, %357 : vector<32x128xf32>
    %486 = arith.addf %482, %485 : vector<32x128xf32>
    %c109 = arith.constant 109 : index
    %487 = memref.load %arg1[%c109] : memref<228xf32, #tpu.memory_space<smem>>
    %488 = vector.broadcast %487 : f32 to vector<32x128xf32>
    %489 = arith.mulf %488, %366 : vector<32x128xf32>
    %490 = arith.addf %486, %489 : vector<32x128xf32>
    %c110 = arith.constant 110 : index
    %491 = memref.load %arg1[%c110] : memref<228xf32, #tpu.memory_space<smem>>
    %492 = vector.broadcast %491 : f32 to vector<32x128xf32>
    %493 = arith.mulf %492, %375 : vector<32x128xf32>
    %494 = arith.addf %490, %493 : vector<32x128xf32>
    %c115 = arith.constant 115 : index
    %495 = memref.load %arg1[%c115] : memref<228xf32, #tpu.memory_space<smem>>
    %496 = vector.broadcast %495 : f32 to vector<32x128xf32>
    %497 = arith.addf %494, %496 : vector<32x128xf32>
    %cst_30 = arith.constant 0.00999999977 : f32
    %498 = vector.broadcast %cst_30 : f32 to vector<32x128xf32>
    %499 = arith.mulf %498, %497 : vector<32x128xf32>
    %500 = arith.maximumf %497, %499 : vector<32x128xf32>
    %c116 = arith.constant 116 : index
    %501 = memref.load %arg1[%c116] : memref<228xf32, #tpu.memory_space<smem>>
    %502 = vector.broadcast %501 : f32 to vector<32x128xf32>
    %503 = arith.mulf %502, %400 : vector<32x128xf32>
    %c117 = arith.constant 117 : index
    %504 = memref.load %arg1[%c117] : memref<228xf32, #tpu.memory_space<smem>>
    %505 = vector.broadcast %504 : f32 to vector<32x128xf32>
    %506 = arith.mulf %505, %425 : vector<32x128xf32>
    %507 = arith.addf %503, %506 : vector<32x128xf32>
    %c118 = arith.constant 118 : index
    %508 = memref.load %arg1[%c118] : memref<228xf32, #tpu.memory_space<smem>>
    %509 = vector.broadcast %508 : f32 to vector<32x128xf32>
    %510 = arith.mulf %509, %450 : vector<32x128xf32>
    %511 = arith.addf %507, %510 : vector<32x128xf32>
    %c119 = arith.constant 119 : index
    %512 = memref.load %arg1[%c119] : memref<228xf32, #tpu.memory_space<smem>>
    %513 = vector.broadcast %512 : f32 to vector<32x128xf32>
    %514 = arith.mulf %513, %475 : vector<32x128xf32>
    %515 = arith.addf %511, %514 : vector<32x128xf32>
    %c120 = arith.constant 120 : index
    %516 = memref.load %arg1[%c120] : memref<228xf32, #tpu.memory_space<smem>>
    %517 = vector.broadcast %516 : f32 to vector<32x128xf32>
    %518 = arith.mulf %517, %500 : vector<32x128xf32>
    %519 = arith.addf %515, %518 : vector<32x128xf32>
    %c141 = arith.constant 141 : index
    %520 = memref.load %arg1[%c141] : memref<228xf32, #tpu.memory_space<smem>>
    %521 = vector.broadcast %520 : f32 to vector<32x128xf32>
    %522 = arith.addf %519, %521 : vector<32x128xf32>
    %cst_31 = arith.constant 0.00999999977 : f32
    %523 = vector.broadcast %cst_31 : f32 to vector<32x128xf32>
    %524 = arith.mulf %523, %522 : vector<32x128xf32>
    %525 = arith.maximumf %522, %524 : vector<32x128xf32>
    %c121 = arith.constant 121 : index
    %526 = memref.load %arg1[%c121] : memref<228xf32, #tpu.memory_space<smem>>
    %527 = vector.broadcast %526 : f32 to vector<32x128xf32>
    %528 = arith.mulf %527, %400 : vector<32x128xf32>
    %c122 = arith.constant 122 : index
    %529 = memref.load %arg1[%c122] : memref<228xf32, #tpu.memory_space<smem>>
    %530 = vector.broadcast %529 : f32 to vector<32x128xf32>
    %531 = arith.mulf %530, %425 : vector<32x128xf32>
    %532 = arith.addf %528, %531 : vector<32x128xf32>
    %c123 = arith.constant 123 : index
    %533 = memref.load %arg1[%c123] : memref<228xf32, #tpu.memory_space<smem>>
    %534 = vector.broadcast %533 : f32 to vector<32x128xf32>
    %535 = arith.mulf %534, %450 : vector<32x128xf32>
    %536 = arith.addf %532, %535 : vector<32x128xf32>
    %c124 = arith.constant 124 : index
    %537 = memref.load %arg1[%c124] : memref<228xf32, #tpu.memory_space<smem>>
    %538 = vector.broadcast %537 : f32 to vector<32x128xf32>
    %539 = arith.mulf %538, %475 : vector<32x128xf32>
    %540 = arith.addf %536, %539 : vector<32x128xf32>
    %c125 = arith.constant 125 : index
    %541 = memref.load %arg1[%c125] : memref<228xf32, #tpu.memory_space<smem>>
    %542 = vector.broadcast %541 : f32 to vector<32x128xf32>
    %543 = arith.mulf %542, %500 : vector<32x128xf32>
    %544 = arith.addf %540, %543 : vector<32x128xf32>
    %c142 = arith.constant 142 : index
    %545 = memref.load %arg1[%c142] : memref<228xf32, #tpu.memory_space<smem>>
    %546 = vector.broadcast %545 : f32 to vector<32x128xf32>
    %547 = arith.addf %544, %546 : vector<32x128xf32>
    %cst_32 = arith.constant 0.00999999977 : f32
    %548 = vector.broadcast %cst_32 : f32 to vector<32x128xf32>
    %549 = arith.mulf %548, %547 : vector<32x128xf32>
    %550 = arith.maximumf %547, %549 : vector<32x128xf32>
    %c126 = arith.constant 126 : index
    %551 = memref.load %arg1[%c126] : memref<228xf32, #tpu.memory_space<smem>>
    %552 = vector.broadcast %551 : f32 to vector<32x128xf32>
    %553 = arith.mulf %552, %400 : vector<32x128xf32>
    %c127 = arith.constant 127 : index
    %554 = memref.load %arg1[%c127] : memref<228xf32, #tpu.memory_space<smem>>
    %555 = vector.broadcast %554 : f32 to vector<32x128xf32>
    %556 = arith.mulf %555, %425 : vector<32x128xf32>
    %557 = arith.addf %553, %556 : vector<32x128xf32>
    %c128 = arith.constant 128 : index
    %558 = memref.load %arg1[%c128] : memref<228xf32, #tpu.memory_space<smem>>
    %559 = vector.broadcast %558 : f32 to vector<32x128xf32>
    %560 = arith.mulf %559, %450 : vector<32x128xf32>
    %561 = arith.addf %557, %560 : vector<32x128xf32>
    %c129 = arith.constant 129 : index
    %562 = memref.load %arg1[%c129] : memref<228xf32, #tpu.memory_space<smem>>
    %563 = vector.broadcast %562 : f32 to vector<32x128xf32>
    %564 = arith.mulf %563, %475 : vector<32x128xf32>
    %565 = arith.addf %561, %564 : vector<32x128xf32>
    %c130 = arith.constant 130 : index
    %566 = memref.load %arg1[%c130] : memref<228xf32, #tpu.memory_space<smem>>
    %567 = vector.broadcast %566 : f32 to vector<32x128xf32>
    %568 = arith.mulf %567, %500 : vector<32x128xf32>
    %569 = arith.addf %565, %568 : vector<32x128xf32>
    %c143 = arith.constant 143 : index
    %570 = memref.load %arg1[%c143] : memref<228xf32, #tpu.memory_space<smem>>
    %571 = vector.broadcast %570 : f32 to vector<32x128xf32>
    %572 = arith.addf %569, %571 : vector<32x128xf32>
    %cst_33 = arith.constant 0.00999999977 : f32
    %573 = vector.broadcast %cst_33 : f32 to vector<32x128xf32>
    %574 = arith.mulf %573, %572 : vector<32x128xf32>
    %575 = arith.maximumf %572, %574 : vector<32x128xf32>
    %c131 = arith.constant 131 : index
    %576 = memref.load %arg1[%c131] : memref<228xf32, #tpu.memory_space<smem>>
    %577 = vector.broadcast %576 : f32 to vector<32x128xf32>
    %578 = arith.mulf %577, %400 : vector<32x128xf32>
    %c132 = arith.constant 132 : index
    %579 = memref.load %arg1[%c132] : memref<228xf32, #tpu.memory_space<smem>>
    %580 = vector.broadcast %579 : f32 to vector<32x128xf32>
    %581 = arith.mulf %580, %425 : vector<32x128xf32>
    %582 = arith.addf %578, %581 : vector<32x128xf32>
    %c133 = arith.constant 133 : index
    %583 = memref.load %arg1[%c133] : memref<228xf32, #tpu.memory_space<smem>>
    %584 = vector.broadcast %583 : f32 to vector<32x128xf32>
    %585 = arith.mulf %584, %450 : vector<32x128xf32>
    %586 = arith.addf %582, %585 : vector<32x128xf32>
    %c134 = arith.constant 134 : index
    %587 = memref.load %arg1[%c134] : memref<228xf32, #tpu.memory_space<smem>>
    %588 = vector.broadcast %587 : f32 to vector<32x128xf32>
    %589 = arith.mulf %588, %475 : vector<32x128xf32>
    %590 = arith.addf %586, %589 : vector<32x128xf32>
    %c135 = arith.constant 135 : index
    %591 = memref.load %arg1[%c135] : memref<228xf32, #tpu.memory_space<smem>>
    %592 = vector.broadcast %591 : f32 to vector<32x128xf32>
    %593 = arith.mulf %592, %500 : vector<32x128xf32>
    %594 = arith.addf %590, %593 : vector<32x128xf32>
    %c144 = arith.constant 144 : index
    %595 = memref.load %arg1[%c144] : memref<228xf32, #tpu.memory_space<smem>>
    %596 = vector.broadcast %595 : f32 to vector<32x128xf32>
    %597 = arith.addf %594, %596 : vector<32x128xf32>
    %cst_34 = arith.constant 0.00999999977 : f32
    %598 = vector.broadcast %cst_34 : f32 to vector<32x128xf32>
    %599 = arith.mulf %598, %597 : vector<32x128xf32>
    %600 = arith.maximumf %597, %599 : vector<32x128xf32>
    %c136 = arith.constant 136 : index
    %601 = memref.load %arg1[%c136] : memref<228xf32, #tpu.memory_space<smem>>
    %602 = vector.broadcast %601 : f32 to vector<32x128xf32>
    %603 = arith.mulf %602, %400 : vector<32x128xf32>
    %c137 = arith.constant 137 : index
    %604 = memref.load %arg1[%c137] : memref<228xf32, #tpu.memory_space<smem>>
    %605 = vector.broadcast %604 : f32 to vector<32x128xf32>
    %606 = arith.mulf %605, %425 : vector<32x128xf32>
    %607 = arith.addf %603, %606 : vector<32x128xf32>
    %c138 = arith.constant 138 : index
    %608 = memref.load %arg1[%c138] : memref<228xf32, #tpu.memory_space<smem>>
    %609 = vector.broadcast %608 : f32 to vector<32x128xf32>
    %610 = arith.mulf %609, %450 : vector<32x128xf32>
    %611 = arith.addf %607, %610 : vector<32x128xf32>
    %c139 = arith.constant 139 : index
    %612 = memref.load %arg1[%c139] : memref<228xf32, #tpu.memory_space<smem>>
    %613 = vector.broadcast %612 : f32 to vector<32x128xf32>
    %614 = arith.mulf %613, %475 : vector<32x128xf32>
    %615 = arith.addf %611, %614 : vector<32x128xf32>
    %c140 = arith.constant 140 : index
    %616 = memref.load %arg1[%c140] : memref<228xf32, #tpu.memory_space<smem>>
    %617 = vector.broadcast %616 : f32 to vector<32x128xf32>
    %618 = arith.mulf %617, %500 : vector<32x128xf32>
    %619 = arith.addf %615, %618 : vector<32x128xf32>
    %c145 = arith.constant 145 : index
    %620 = memref.load %arg1[%c145] : memref<228xf32, #tpu.memory_space<smem>>
    %621 = vector.broadcast %620 : f32 to vector<32x128xf32>
    %622 = arith.addf %619, %621 : vector<32x128xf32>
    %cst_35 = arith.constant 0.00999999977 : f32
    %623 = vector.broadcast %cst_35 : f32 to vector<32x128xf32>
    %624 = arith.mulf %623, %622 : vector<32x128xf32>
    %625 = arith.maximumf %622, %624 : vector<32x128xf32>
    %c146 = arith.constant 146 : index
    %626 = memref.load %arg1[%c146] : memref<228xf32, #tpu.memory_space<smem>>
    %627 = vector.broadcast %626 : f32 to vector<32x128xf32>
    %628 = arith.mulf %627, %525 : vector<32x128xf32>
    %c147 = arith.constant 147 : index
    %629 = memref.load %arg1[%c147] : memref<228xf32, #tpu.memory_space<smem>>
    %630 = vector.broadcast %629 : f32 to vector<32x128xf32>
    %631 = arith.mulf %630, %550 : vector<32x128xf32>
    %632 = arith.addf %628, %631 : vector<32x128xf32>
    %c148 = arith.constant 148 : index
    %633 = memref.load %arg1[%c148] : memref<228xf32, #tpu.memory_space<smem>>
    %634 = vector.broadcast %633 : f32 to vector<32x128xf32>
    %635 = arith.mulf %634, %575 : vector<32x128xf32>
    %636 = arith.addf %632, %635 : vector<32x128xf32>
    %c149 = arith.constant 149 : index
    %637 = memref.load %arg1[%c149] : memref<228xf32, #tpu.memory_space<smem>>
    %638 = vector.broadcast %637 : f32 to vector<32x128xf32>
    %639 = arith.mulf %638, %600 : vector<32x128xf32>
    %640 = arith.addf %636, %639 : vector<32x128xf32>
    %c150 = arith.constant 150 : index
    %641 = memref.load %arg1[%c150] : memref<228xf32, #tpu.memory_space<smem>>
    %642 = vector.broadcast %641 : f32 to vector<32x128xf32>
    %643 = arith.mulf %642, %625 : vector<32x128xf32>
    %644 = arith.addf %640, %643 : vector<32x128xf32>
    %c151 = arith.constant 151 : index
    %645 = memref.load %arg1[%c151] : memref<228xf32, #tpu.memory_space<smem>>
    %646 = vector.broadcast %645 : f32 to vector<32x128xf32>
    %647 = arith.addf %644, %646 : vector<32x128xf32>
    %c1_36 = arith.constant 1 : index
    %648 = arith.index_cast %3 : i32 to index
    %c0_37 = arith.constant 0 : index
    %649 = vector.load %arg3[%c1_36, %648, %c0_37] : memref<3x32x128xf32, #tpu.memory_space<vmem>>, vector<1x32x128xf32>
    %650 = vector.shape_cast %649 : vector<1x32x128xf32> to vector<32x128xf32>
    %651 = vector.shape_cast %647 : vector<32x128xf32> to vector<1x32x128xf32>
    tpu.vector_store %arg3[%c1_36, %648, %c0_37], %651 {strides = array<i32>} : memref<3x32x128xf32, #tpu.memory_space<vmem>>, vector<1x32x128xf32>,
    %c2_38 = arith.constant 2 : index
    %652 = arith.index_cast %3 : i32 to index
    %c0_39 = arith.constant 0 : index
    %653 = vector.load %arg2[%c2_38, %652, %c0_39] : memref<3x32x128xf32, #tpu.memory_space<vmem>>, vector<1x32x128xf32>
    %654 = vector.shape_cast %653 : vector<1x32x128xf32> to vector<32x128xf32>
    %c152 = arith.constant 152 : index
    %655 = memref.load %arg1[%c152] : memref<228xf32, #tpu.memory_space<smem>>
    %656 = vector.broadcast %655 : f32 to vector<32x128xf32>
    %657 = arith.mulf %656, %654 : vector<32x128xf32>
    %c157 = arith.constant 157 : index
    %658 = memref.load %arg1[%c157] : memref<228xf32, #tpu.memory_space<smem>>
    %659 = vector.broadcast %658 : f32 to vector<32x128xf32>
    %660 = arith.addf %657, %659 : vector<32x128xf32>
    %cst_40 = arith.constant 0.00999999977 : f32
    %661 = vector.broadcast %cst_40 : f32 to vector<32x128xf32>
    %662 = arith.mulf %661, %660 : vector<32x128xf32>
    %663 = arith.maximumf %660, %662 : vector<32x128xf32>
    %c153 = arith.constant 153 : index
    %664 = memref.load %arg1[%c153] : memref<228xf32, #tpu.memory_space<smem>>
    %665 = vector.broadcast %664 : f32 to vector<32x128xf32>
    %666 = arith.mulf %665, %654 : vector<32x128xf32>
    %c158 = arith.constant 158 : index
    %667 = memref.load %arg1[%c158] : memref<228xf32, #tpu.memory_space<smem>>
    %668 = vector.broadcast %667 : f32 to vector<32x128xf32>
    %669 = arith.addf %666, %668 : vector<32x128xf32>
    %cst_41 = arith.constant 0.00999999977 : f32
    %670 = vector.broadcast %cst_41 : f32 to vector<32x128xf32>
    %671 = arith.mulf %670, %669 : vector<32x128xf32>
    %672 = arith.maximumf %669, %671 : vector<32x128xf32>
    %c154 = arith.constant 154 : index
    %673 = memref.load %arg1[%c154] : memref<228xf32, #tpu.memory_space<smem>>
    %674 = vector.broadcast %673 : f32 to vector<32x128xf32>
    %675 = arith.mulf %674, %654 : vector<32x128xf32>
    %c159 = arith.constant 159 : index
    %676 = memref.load %arg1[%c159] : memref<228xf32, #tpu.memory_space<smem>>
    %677 = vector.broadcast %676 : f32 to vector<32x128xf32>
    %678 = arith.addf %675, %677 : vector<32x128xf32>
    %cst_42 = arith.constant 0.00999999977 : f32
    %679 = vector.broadcast %cst_42 : f32 to vector<32x128xf32>
    %680 = arith.mulf %679, %678 : vector<32x128xf32>
    %681 = arith.maximumf %678, %680 : vector<32x128xf32>
    %c155 = arith.constant 155 : index
    %682 = memref.load %arg1[%c155] : memref<228xf32, #tpu.memory_space<smem>>
    %683 = vector.broadcast %682 : f32 to vector<32x128xf32>
    %684 = arith.mulf %683, %654 : vector<32x128xf32>
    %c160 = arith.constant 160 : index
    %685 = memref.load %arg1[%c160] : memref<228xf32, #tpu.memory_space<smem>>
    %686 = vector.broadcast %685 : f32 to vector<32x128xf32>
    %687 = arith.addf %684, %686 : vector<32x128xf32>
    %cst_43 = arith.constant 0.00999999977 : f32
    %688 = vector.broadcast %cst_43 : f32 to vector<32x128xf32>
    %689 = arith.mulf %688, %687 : vector<32x128xf32>
    %690 = arith.maximumf %687, %689 : vector<32x128xf32>
    %c156 = arith.constant 156 : index
    %691 = memref.load %arg1[%c156] : memref<228xf32, #tpu.memory_space<smem>>
    %692 = vector.broadcast %691 : f32 to vector<32x128xf32>
    %693 = arith.mulf %692, %654 : vector<32x128xf32>
    %c161 = arith.constant 161 : index
    %694 = memref.load %arg1[%c161] : memref<228xf32, #tpu.memory_space<smem>>
    %695 = vector.broadcast %694 : f32 to vector<32x128xf32>
    %696 = arith.addf %693, %695 : vector<32x128xf32>
    %cst_44 = arith.constant 0.00999999977 : f32
    %697 = vector.broadcast %cst_44 : f32 to vector<32x128xf32>
    %698 = arith.mulf %697, %696 : vector<32x128xf32>
    %699 = arith.maximumf %696, %698 : vector<32x128xf32>
    %c162 = arith.constant 162 : index
    %700 = memref.load %arg1[%c162] : memref<228xf32, #tpu.memory_space<smem>>
    %701 = vector.broadcast %700 : f32 to vector<32x128xf32>
    %702 = arith.mulf %701, %663 : vector<32x128xf32>
    %c163 = arith.constant 163 : index
    %703 = memref.load %arg1[%c163] : memref<228xf32, #tpu.memory_space<smem>>
    %704 = vector.broadcast %703 : f32 to vector<32x128xf32>
    %705 = arith.mulf %704, %672 : vector<32x128xf32>
    %706 = arith.addf %702, %705 : vector<32x128xf32>
    %c164 = arith.constant 164 : index
    %707 = memref.load %arg1[%c164] : memref<228xf32, #tpu.memory_space<smem>>
    %708 = vector.broadcast %707 : f32 to vector<32x128xf32>
    %709 = arith.mulf %708, %681 : vector<32x128xf32>
    %710 = arith.addf %706, %709 : vector<32x128xf32>
    %c165 = arith.constant 165 : index
    %711 = memref.load %arg1[%c165] : memref<228xf32, #tpu.memory_space<smem>>
    %712 = vector.broadcast %711 : f32 to vector<32x128xf32>
    %713 = arith.mulf %712, %690 : vector<32x128xf32>
    %714 = arith.addf %710, %713 : vector<32x128xf32>
    %c166 = arith.constant 166 : index
    %715 = memref.load %arg1[%c166] : memref<228xf32, #tpu.memory_space<smem>>
    %716 = vector.broadcast %715 : f32 to vector<32x128xf32>
    %717 = arith.mulf %716, %699 : vector<32x128xf32>
    %718 = arith.addf %714, %717 : vector<32x128xf32>
    %c187 = arith.constant 187 : index
    %719 = memref.load %arg1[%c187] : memref<228xf32, #tpu.memory_space<smem>>
    %720 = vector.broadcast %719 : f32 to vector<32x128xf32>
    %721 = arith.addf %718, %720 : vector<32x128xf32>
    %cst_45 = arith.constant 0.00999999977 : f32
    %722 = vector.broadcast %cst_45 : f32 to vector<32x128xf32>
    %723 = arith.mulf %722, %721 : vector<32x128xf32>
    %724 = arith.maximumf %721, %723 : vector<32x128xf32>
    %c167 = arith.constant 167 : index
    %725 = memref.load %arg1[%c167] : memref<228xf32, #tpu.memory_space<smem>>
    %726 = vector.broadcast %725 : f32 to vector<32x128xf32>
    %727 = arith.mulf %726, %663 : vector<32x128xf32>
    %c168 = arith.constant 168 : index
    %728 = memref.load %arg1[%c168] : memref<228xf32, #tpu.memory_space<smem>>
    %729 = vector.broadcast %728 : f32 to vector<32x128xf32>
    %730 = arith.mulf %729, %672 : vector<32x128xf32>
    %731 = arith.addf %727, %730 : vector<32x128xf32>
    %c169 = arith.constant 169 : index
    %732 = memref.load %arg1[%c169] : memref<228xf32, #tpu.memory_space<smem>>
    %733 = vector.broadcast %732 : f32 to vector<32x128xf32>
    %734 = arith.mulf %733, %681 : vector<32x128xf32>
    %735 = arith.addf %731, %734 : vector<32x128xf32>
    %c170 = arith.constant 170 : index
    %736 = memref.load %arg1[%c170] : memref<228xf32, #tpu.memory_space<smem>>
    %737 = vector.broadcast %736 : f32 to vector<32x128xf32>
    %738 = arith.mulf %737, %690 : vector<32x128xf32>
    %739 = arith.addf %735, %738 : vector<32x128xf32>
    %c171 = arith.constant 171 : index
    %740 = memref.load %arg1[%c171] : memref<228xf32, #tpu.memory_space<smem>>
    %741 = vector.broadcast %740 : f32 to vector<32x128xf32>
    %742 = arith.mulf %741, %699 : vector<32x128xf32>
    %743 = arith.addf %739, %742 : vector<32x128xf32>
    %c188 = arith.constant 188 : index
    %744 = memref.load %arg1[%c188] : memref<228xf32, #tpu.memory_space<smem>>
    %745 = vector.broadcast %744 : f32 to vector<32x128xf32>
    %746 = arith.addf %743, %745 : vector<32x128xf32>
    %cst_46 = arith.constant 0.00999999977 : f32
    %747 = vector.broadcast %cst_46 : f32 to vector<32x128xf32>
    %748 = arith.mulf %747, %746 : vector<32x128xf32>
    %749 = arith.maximumf %746, %748 : vector<32x128xf32>
    %c172 = arith.constant 172 : index
    %750 = memref.load %arg1[%c172] : memref<228xf32, #tpu.memory_space<smem>>
    %751 = vector.broadcast %750 : f32 to vector<32x128xf32>
    %752 = arith.mulf %751, %663 : vector<32x128xf32>
    %c173 = arith.constant 173 : index
    %753 = memref.load %arg1[%c173] : memref<228xf32, #tpu.memory_space<smem>>
    %754 = vector.broadcast %753 : f32 to vector<32x128xf32>
    %755 = arith.mulf %754, %672 : vector<32x128xf32>
    %756 = arith.addf %752, %755 : vector<32x128xf32>
    %c174 = arith.constant 174 : index
    %757 = memref.load %arg1[%c174] : memref<228xf32, #tpu.memory_space<smem>>
    %758 = vector.broadcast %757 : f32 to vector<32x128xf32>
    %759 = arith.mulf %758, %681 : vector<32x128xf32>
    %760 = arith.addf %756, %759 : vector<32x128xf32>
    %c175 = arith.constant 175 : index
    %761 = memref.load %arg1[%c175] : memref<228xf32, #tpu.memory_space<smem>>
    %762 = vector.broadcast %761 : f32 to vector<32x128xf32>
    %763 = arith.mulf %762, %690 : vector<32x128xf32>
    %764 = arith.addf %760, %763 : vector<32x128xf32>
    %c176 = arith.constant 176 : index
    %765 = memref.load %arg1[%c176] : memref<228xf32, #tpu.memory_space<smem>>
    %766 = vector.broadcast %765 : f32 to vector<32x128xf32>
    %767 = arith.mulf %766, %699 : vector<32x128xf32>
    %768 = arith.addf %764, %767 : vector<32x128xf32>
    %c189 = arith.constant 189 : index
    %769 = memref.load %arg1[%c189] : memref<228xf32, #tpu.memory_space<smem>>
    %770 = vector.broadcast %769 : f32 to vector<32x128xf32>
    %771 = arith.addf %768, %770 : vector<32x128xf32>
    %cst_47 = arith.constant 0.00999999977 : f32
    %772 = vector.broadcast %cst_47 : f32 to vector<32x128xf32>
    %773 = arith.mulf %772, %771 : vector<32x128xf32>
    %774 = arith.maximumf %771, %773 : vector<32x128xf32>
    %c177 = arith.constant 177 : index
    %775 = memref.load %arg1[%c177] : memref<228xf32, #tpu.memory_space<smem>>
    %776 = vector.broadcast %775 : f32 to vector<32x128xf32>
    %777 = arith.mulf %776, %663 : vector<32x128xf32>
    %c178 = arith.constant 178 : index
    %778 = memref.load %arg1[%c178] : memref<228xf32, #tpu.memory_space<smem>>
    %779 = vector.broadcast %778 : f32 to vector<32x128xf32>
    %780 = arith.mulf %779, %672 : vector<32x128xf32>
    %781 = arith.addf %777, %780 : vector<32x128xf32>
    %c179 = arith.constant 179 : index
    %782 = memref.load %arg1[%c179] : memref<228xf32, #tpu.memory_space<smem>>
    %783 = vector.broadcast %782 : f32 to vector<32x128xf32>
    %784 = arith.mulf %783, %681 : vector<32x128xf32>
    %785 = arith.addf %781, %784 : vector<32x128xf32>
    %c180 = arith.constant 180 : index
    %786 = memref.load %arg1[%c180] : memref<228xf32, #tpu.memory_space<smem>>
    %787 = vector.broadcast %786 : f32 to vector<32x128xf32>
    %788 = arith.mulf %787, %690 : vector<32x128xf32>
    %789 = arith.addf %785, %788 : vector<32x128xf32>
    %c181 = arith.constant 181 : index
    %790 = memref.load %arg1[%c181] : memref<228xf32, #tpu.memory_space<smem>>
    %791 = vector.broadcast %790 : f32 to vector<32x128xf32>
    %792 = arith.mulf %791, %699 : vector<32x128xf32>
    %793 = arith.addf %789, %792 : vector<32x128xf32>
    %c190 = arith.constant 190 : index
    %794 = memref.load %arg1[%c190] : memref<228xf32, #tpu.memory_space<smem>>
    %795 = vector.broadcast %794 : f32 to vector<32x128xf32>
    %796 = arith.addf %793, %795 : vector<32x128xf32>
    %cst_48 = arith.constant 0.00999999977 : f32
    %797 = vector.broadcast %cst_48 : f32 to vector<32x128xf32>
    %798 = arith.mulf %797, %796 : vector<32x128xf32>
    %799 = arith.maximumf %796, %798 : vector<32x128xf32>
    %c182 = arith.constant 182 : index
    %800 = memref.load %arg1[%c182] : memref<228xf32, #tpu.memory_space<smem>>
    %801 = vector.broadcast %800 : f32 to vector<32x128xf32>
    %802 = arith.mulf %801, %663 : vector<32x128xf32>
    %c183 = arith.constant 183 : index
    %803 = memref.load %arg1[%c183] : memref<228xf32, #tpu.memory_space<smem>>
    %804 = vector.broadcast %803 : f32 to vector<32x128xf32>
    %805 = arith.mulf %804, %672 : vector<32x128xf32>
    %806 = arith.addf %802, %805 : vector<32x128xf32>
    %c184 = arith.constant 184 : index
    %807 = memref.load %arg1[%c184] : memref<228xf32, #tpu.memory_space<smem>>
    %808 = vector.broadcast %807 : f32 to vector<32x128xf32>
    %809 = arith.mulf %808, %681 : vector<32x128xf32>
    %810 = arith.addf %806, %809 : vector<32x128xf32>
    %c185 = arith.constant 185 : index
    %811 = memref.load %arg1[%c185] : memref<228xf32, #tpu.memory_space<smem>>
    %812 = vector.broadcast %811 : f32 to vector<32x128xf32>
    %813 = arith.mulf %812, %690 : vector<32x128xf32>
    %814 = arith.addf %810, %813 : vector<32x128xf32>
    %c186 = arith.constant 186 : index
    %815 = memref.load %arg1[%c186] : memref<228xf32, #tpu.memory_space<smem>>
    %816 = vector.broadcast %815 : f32 to vector<32x128xf32>
    %817 = arith.mulf %816, %699 : vector<32x128xf32>
    %818 = arith.addf %814, %817 : vector<32x128xf32>
    %c191 = arith.constant 191 : index
    %819 = memref.load %arg1[%c191] : memref<228xf32, #tpu.memory_space<smem>>
    %820 = vector.broadcast %819 : f32 to vector<32x128xf32>
    %821 = arith.addf %818, %820 : vector<32x128xf32>
    %cst_49 = arith.constant 0.00999999977 : f32
    %822 = vector.broadcast %cst_49 : f32 to vector<32x128xf32>
    %823 = arith.mulf %822, %821 : vector<32x128xf32>
    %824 = arith.maximumf %821, %823 : vector<32x128xf32>
    %c192 = arith.constant 192 : index
    %825 = memref.load %arg1[%c192] : memref<228xf32, #tpu.memory_space<smem>>
    %826 = vector.broadcast %825 : f32 to vector<32x128xf32>
    %827 = arith.mulf %826, %724 : vector<32x128xf32>
    %c193 = arith.constant 193 : index
    %828 = memref.load %arg1[%c193] : memref<228xf32, #tpu.memory_space<smem>>
    %829 = vector.broadcast %828 : f32 to vector<32x128xf32>
    %830 = arith.mulf %829, %749 : vector<32x128xf32>
    %831 = arith.addf %827, %830 : vector<32x128xf32>
    %c194 = arith.constant 194 : index
    %832 = memref.load %arg1[%c194] : memref<228xf32, #tpu.memory_space<smem>>
    %833 = vector.broadcast %832 : f32 to vector<32x128xf32>
    %834 = arith.mulf %833, %774 : vector<32x128xf32>
    %835 = arith.addf %831, %834 : vector<32x128xf32>
    %c195 = arith.constant 195 : index
    %836 = memref.load %arg1[%c195] : memref<228xf32, #tpu.memory_space<smem>>
    %837 = vector.broadcast %836 : f32 to vector<32x128xf32>
    %838 = arith.mulf %837, %799 : vector<32x128xf32>
    %839 = arith.addf %835, %838 : vector<32x128xf32>
    %c196 = arith.constant 196 : index
    %840 = memref.load %arg1[%c196] : memref<228xf32, #tpu.memory_space<smem>>
    %841 = vector.broadcast %840 : f32 to vector<32x128xf32>
    %842 = arith.mulf %841, %824 : vector<32x128xf32>
    %843 = arith.addf %839, %842 : vector<32x128xf32>
    %c217 = arith.constant 217 : index
    %844 = memref.load %arg1[%c217] : memref<228xf32, #tpu.memory_space<smem>>
    %845 = vector.broadcast %844 : f32 to vector<32x128xf32>
    %846 = arith.addf %843, %845 : vector<32x128xf32>
    %cst_50 = arith.constant 0.00999999977 : f32
    %847 = vector.broadcast %cst_50 : f32 to vector<32x128xf32>
    %848 = arith.mulf %847, %846 : vector<32x128xf32>
    %849 = arith.maximumf %846, %848 : vector<32x128xf32>
    %c197 = arith.constant 197 : index
    %850 = memref.load %arg1[%c197] : memref<228xf32, #tpu.memory_space<smem>>
    %851 = vector.broadcast %850 : f32 to vector<32x128xf32>
    %852 = arith.mulf %851, %724 : vector<32x128xf32>
    %c198 = arith.constant 198 : index
    %853 = memref.load %arg1[%c198] : memref<228xf32, #tpu.memory_space<smem>>
    %854 = vector.broadcast %853 : f32 to vector<32x128xf32>
    %855 = arith.mulf %854, %749 : vector<32x128xf32>
    %856 = arith.addf %852, %855 : vector<32x128xf32>
    %c199 = arith.constant 199 : index
    %857 = memref.load %arg1[%c199] : memref<228xf32, #tpu.memory_space<smem>>
    %858 = vector.broadcast %857 : f32 to vector<32x128xf32>
    %859 = arith.mulf %858, %774 : vector<32x128xf32>
    %860 = arith.addf %856, %859 : vector<32x128xf32>
    %c200 = arith.constant 200 : index
    %861 = memref.load %arg1[%c200] : memref<228xf32, #tpu.memory_space<smem>>
    %862 = vector.broadcast %861 : f32 to vector<32x128xf32>
    %863 = arith.mulf %862, %799 : vector<32x128xf32>
    %864 = arith.addf %860, %863 : vector<32x128xf32>
    %c201 = arith.constant 201 : index
    %865 = memref.load %arg1[%c201] : memref<228xf32, #tpu.memory_space<smem>>
    %866 = vector.broadcast %865 : f32 to vector<32x128xf32>
    %867 = arith.mulf %866, %824 : vector<32x128xf32>
    %868 = arith.addf %864, %867 : vector<32x128xf32>
    %c218 = arith.constant 218 : index
    %869 = memref.load %arg1[%c218] : memref<228xf32, #tpu.memory_space<smem>>
    %870 = vector.broadcast %869 : f32 to vector<32x128xf32>
    %871 = arith.addf %868, %870 : vector<32x128xf32>
    %cst_51 = arith.constant 0.00999999977 : f32
    %872 = vector.broadcast %cst_51 : f32 to vector<32x128xf32>
    %873 = arith.mulf %872, %871 : vector<32x128xf32>
    %874 = arith.maximumf %871, %873 : vector<32x128xf32>
    %c202 = arith.constant 202 : index
    %875 = memref.load %arg1[%c202] : memref<228xf32, #tpu.memory_space<smem>>
    %876 = vector.broadcast %875 : f32 to vector<32x128xf32>
    %877 = arith.mulf %876, %724 : vector<32x128xf32>
    %c203 = arith.constant 203 : index
    %878 = memref.load %arg1[%c203] : memref<228xf32, #tpu.memory_space<smem>>
    %879 = vector.broadcast %878 : f32 to vector<32x128xf32>
    %880 = arith.mulf %879, %749 : vector<32x128xf32>
    %881 = arith.addf %877, %880 : vector<32x128xf32>
    %c204 = arith.constant 204 : index
    %882 = memref.load %arg1[%c204] : memref<228xf32, #tpu.memory_space<smem>>
    %883 = vector.broadcast %882 : f32 to vector<32x128xf32>
    %884 = arith.mulf %883, %774 : vector<32x128xf32>
    %885 = arith.addf %881, %884 : vector<32x128xf32>
    %c205 = arith.constant 205 : index
    %886 = memref.load %arg1[%c205] : memref<228xf32, #tpu.memory_space<smem>>
    %887 = vector.broadcast %886 : f32 to vector<32x128xf32>
    %888 = arith.mulf %887, %799 : vector<32x128xf32>
    %889 = arith.addf %885, %888 : vector<32x128xf32>
    %c206 = arith.constant 206 : index
    %890 = memref.load %arg1[%c206] : memref<228xf32, #tpu.memory_space<smem>>
    %891 = vector.broadcast %890 : f32 to vector<32x128xf32>
    %892 = arith.mulf %891, %824 : vector<32x128xf32>
    %893 = arith.addf %889, %892 : vector<32x128xf32>
    %c219 = arith.constant 219 : index
    %894 = memref.load %arg1[%c219] : memref<228xf32, #tpu.memory_space<smem>>
    %895 = vector.broadcast %894 : f32 to vector<32x128xf32>
    %896 = arith.addf %893, %895 : vector<32x128xf32>
    %cst_52 = arith.constant 0.00999999977 : f32
    %897 = vector.broadcast %cst_52 : f32 to vector<32x128xf32>
    %898 = arith.mulf %897, %896 : vector<32x128xf32>
    %899 = arith.maximumf %896, %898 : vector<32x128xf32>
    %c207 = arith.constant 207 : index
    %900 = memref.load %arg1[%c207] : memref<228xf32, #tpu.memory_space<smem>>
    %901 = vector.broadcast %900 : f32 to vector<32x128xf32>
    %902 = arith.mulf %901, %724 : vector<32x128xf32>
    %c208 = arith.constant 208 : index
    %903 = memref.load %arg1[%c208] : memref<228xf32, #tpu.memory_space<smem>>
    %904 = vector.broadcast %903 : f32 to vector<32x128xf32>
    %905 = arith.mulf %904, %749 : vector<32x128xf32>
    %906 = arith.addf %902, %905 : vector<32x128xf32>
    %c209 = arith.constant 209 : index
    %907 = memref.load %arg1[%c209] : memref<228xf32, #tpu.memory_space<smem>>
    %908 = vector.broadcast %907 : f32 to vector<32x128xf32>
    %909 = arith.mulf %908, %774 : vector<32x128xf32>
    %910 = arith.addf %906, %909 : vector<32x128xf32>
    %c210 = arith.constant 210 : index
    %911 = memref.load %arg1[%c210] : memref<228xf32, #tpu.memory_space<smem>>
    %912 = vector.broadcast %911 : f32 to vector<32x128xf32>
    %913 = arith.mulf %912, %799 : vector<32x128xf32>
    %914 = arith.addf %910, %913 : vector<32x128xf32>
    %c211 = arith.constant 211 : index
    %915 = memref.load %arg1[%c211] : memref<228xf32, #tpu.memory_space<smem>>
    %916 = vector.broadcast %915 : f32 to vector<32x128xf32>
    %917 = arith.mulf %916, %824 : vector<32x128xf32>
    %918 = arith.addf %914, %917 : vector<32x128xf32>
    %c220 = arith.constant 220 : index
    %919 = memref.load %arg1[%c220] : memref<228xf32, #tpu.memory_space<smem>>
    %920 = vector.broadcast %919 : f32 to vector<32x128xf32>
    %921 = arith.addf %918, %920 : vector<32x128xf32>
    %cst_53 = arith.constant 0.00999999977 : f32
    %922 = vector.broadcast %cst_53 : f32 to vector<32x128xf32>
    %923 = arith.mulf %922, %921 : vector<32x128xf32>
    %924 = arith.maximumf %921, %923 : vector<32x128xf32>
    %c212 = arith.constant 212 : index
    %925 = memref.load %arg1[%c212] : memref<228xf32, #tpu.memory_space<smem>>
    %926 = vector.broadcast %925 : f32 to vector<32x128xf32>
    %927 = arith.mulf %926, %724 : vector<32x128xf32>
    %c213 = arith.constant 213 : index
    %928 = memref.load %arg1[%c213] : memref<228xf32, #tpu.memory_space<smem>>
    %929 = vector.broadcast %928 : f32 to vector<32x128xf32>
    %930 = arith.mulf %929, %749 : vector<32x128xf32>
    %931 = arith.addf %927, %930 : vector<32x128xf32>
    %c214 = arith.constant 214 : index
    %932 = memref.load %arg1[%c214] : memref<228xf32, #tpu.memory_space<smem>>
    %933 = vector.broadcast %932 : f32 to vector<32x128xf32>
    %934 = arith.mulf %933, %774 : vector<32x128xf32>
    %935 = arith.addf %931, %934 : vector<32x128xf32>
    %c215 = arith.constant 215 : index
    %936 = memref.load %arg1[%c215] : memref<228xf32, #tpu.memory_space<smem>>
    %937 = vector.broadcast %936 : f32 to vector<32x128xf32>
    %938 = arith.mulf %937, %799 : vector<32x128xf32>
    %939 = arith.addf %935, %938 : vector<32x128xf32>
    %c216 = arith.constant 216 : index
    %940 = memref.load %arg1[%c216] : memref<228xf32, #tpu.memory_space<smem>>
    %941 = vector.broadcast %940 : f32 to vector<32x128xf32>
    %942 = arith.mulf %941, %824 : vector<32x128xf32>
    %943 = arith.addf %939, %942 : vector<32x128xf32>
    %c221 = arith.constant 221 : index
    %944 = memref.load %arg1[%c221] : memref<228xf32, #tpu.memory_space<smem>>
    %945 = vector.broadcast %944 : f32 to vector<32x128xf32>
    %946 = arith.addf %943, %945 : vector<32x128xf32>
    %cst_54 = arith.constant 0.00999999977 : f32
    %947 = vector.broadcast %cst_54 : f32 to vector<32x128xf32>
    %948 = arith.mulf %947, %946 : vector<32x128xf32>
    %949 = arith.maximumf %946, %948 : vector<32x128xf32>
    %c222 = arith.constant 222 : index
    %950 = memref.load %arg1[%c222] : memref<228xf32, #tpu.memory_space<smem>>
    %951 = vector.broadcast %950 : f32 to vector<32x128xf32>
    %952 = arith.mulf %951, %849 : vector<32x128xf32>
    %c223 = arith.constant 223 : index
    %953 = memref.load %arg1[%c223] : memref<228xf32, #tpu.memory_space<smem>>
    %954 = vector.broadcast %953 : f32 to vector<32x128xf32>
    %955 = arith.mulf %954, %874 : vector<32x128xf32>
    %956 = arith.addf %952, %955 : vector<32x128xf32>
    %c224 = arith.constant 224 : index
    %957 = memref.load %arg1[%c224] : memref<228xf32, #tpu.memory_space<smem>>
    %958 = vector.broadcast %957 : f32 to vector<32x128xf32>
    %959 = arith.mulf %958, %899 : vector<32x128xf32>
    %960 = arith.addf %956, %959 : vector<32x128xf32>
    %c225 = arith.constant 225 : index
    %961 = memref.load %arg1[%c225] : memref<228xf32, #tpu.memory_space<smem>>
    %962 = vector.broadcast %961 : f32 to vector<32x128xf32>
    %963 = arith.mulf %962, %924 : vector<32x128xf32>
    %964 = arith.addf %960, %963 : vector<32x128xf32>
    %c226 = arith.constant 226 : index
    %965 = memref.load %arg1[%c226] : memref<228xf32, #tpu.memory_space<smem>>
    %966 = vector.broadcast %965 : f32 to vector<32x128xf32>
    %967 = arith.mulf %966, %949 : vector<32x128xf32>
    %968 = arith.addf %964, %967 : vector<32x128xf32>
    %c227 = arith.constant 227 : index
    %969 = memref.load %arg1[%c227] : memref<228xf32, #tpu.memory_space<smem>>
    %970 = vector.broadcast %969 : f32 to vector<32x128xf32>
    %971 = arith.addf %968, %970 : vector<32x128xf32>
    %c2_55 = arith.constant 2 : index
    %972 = arith.index_cast %3 : i32 to index
    %c0_56 = arith.constant 0 : index
    %973 = vector.load %arg3[%c2_55, %972, %c0_56] : memref<3x32x128xf32, #tpu.memory_space<vmem>>, vector<1x32x128xf32>
    %974 = vector.shape_cast %973 : vector<1x32x128xf32> to vector<32x128xf32>
    %975 = vector.shape_cast %971 : vector<32x128xf32> to vector<1x32x128xf32>
    tpu.vector_store %arg3[%c2_55, %972, %c0_56], %975 {strides = array<i32>} : memref<3x32x128xf32, #tpu.memory_space<vmem>>, vector<1x32x128xf32>,
    %c1_i32_57 = arith.constant 1 : i32
    return
  }
  func.func @transform_0(%arg0: i32) -> i32 {
    %c0_i32 = arith.constant 0 : i32
    %c0_i32_0 = arith.constant 0 : i32
    return %c0_i32 : i32
  }
  func.func @transform_1(%arg0: i32) -> (i32, i32, i32) {
    %c0_i32 = arith.constant 0 : i32
    %c0_i32_0 = arith.constant 0 : i32
    %c0_i32_1 = arith.constant 0 : i32
    return %c0_i32, %arg0, %c0_i32_0 : i32, i32, i32
  }
  func.func @transform_2(%arg0: i32) -> (i32, i32, i32) {
    %c0_i32 = arith.constant 0 : i32
    %c0_i32_0 = arith.constant 0 : i32
    %c0_i32_1 = arith.constant 0 : i32
    return %c0_i32, %arg0, %c0_i32_0 : i32, i32, i32
  }
}

</mosaic_0001>

<llo_original>
// kernel: autoencoder_forward.1
$region0: #{autoencoder_forward.1}
  #allocation0 [shape = 'u32[]', space=smem, size = 0x4, offset = 0x4, fixed_abs, tag = 'smem constant byte address 0x4 - core index']
  #allocation1 [shape = 'u32[144,128]{1,0:T(1,128)}', space=vmem, size = 0x12000, scoped, tag = 'internal scratch']
  %s0 = inlined_call_operand.vmem [shape: f32[228], index: 0, kind: input, shape index: {}]
  %s1 = inlined_call_operand.vmem [shape: f32[3,32,128], index: 1, kind: input, shape index: {}]
  %s2 = inlined_call_operand.vmem [shape: f32[3,32,128], index: 2, kind: output, shape index: {}]
  %s3 = sld [smem:[#allocation0]]
  $region22: #{autoencoder_forward.1} parent=0
    _
  %s5 = ssub.s32 1, %s3
  %s6 = scalar_select 0, %s5, %s3
  $region1: #{autoencoder_forward.1} parent=0
    #allocation2 [shape = 'u8[1024]{0}', space=smem, size = 0x400, scoped, tag = 'input window, operand 0, single buffered']
    #allocation3 [shape = 's32[1]{0}', space=sflag, size = 0x4, scoped, tag = 'scoped memory for autoencoder_forward.1']
    %7 = vsyncpa [#allocation3], 0
    // Predicated region
    $region2: #{autoencoder_forward.1} parent=1 // pred_check
      _
    $region3: #{autoencoder_forward.1} parent=1 // pred_check_branch
      %9 = sbr.rel (0) target = $region5
    $region4: #{autoencoder_forward.1} parent=1 // pred_region
      %s11 = ssub.s32 32, 32
      %12 = vsyncadd [#allocation3], %s11
      %s14 = sshll.u32 %s0, 4
      %s15 = int_to_ptr.vmem [resolvable:$true] %s14
      %17 = dma.vmem_to_smem %s15, 32, [#allocation2], [#allocation3]
    $region5: #{autoencoder_forward.1} parent=1 // pred_fallthru
      _
    // Predicated region
    $region6: #{autoencoder_forward.1} parent=1 // pred_check
      _
    $region7: #{autoencoder_forward.1} parent=1 // pred_check_branch
      %19 = sbr.rel (0) target = $region9
    $region8: #{autoencoder_forward.1} parent=1 // pred_region
      _
    $region9: #{autoencoder_forward.1} parent=1 // pred_fallthru
      _
    // Predicated region
    $region10: #{autoencoder_forward.1} parent=1 // pred_check
      _
    $region11: #{autoencoder_forward.1} parent=1 // pred_check_branch
      %21 = sbr.rel (0) target = $region13
    $region12: #{autoencoder_forward.1} parent=1 // pred_region
      %22 = dma.done [#allocation3], 32
    $region13: #{autoencoder_forward.1} parent=1 // pred_fallthru
      _
    %23 = sfence
    %v24 = vld [vmem:[%s1] sm:$0xff]
    %v25 = vld [vmem:[%s1 + $0x8] sm:$0xff]
    %v26 = vld [vmem:[%s1 + $0x10] sm:$0xff]
    %v27 = vld [vmem:[%s1 + $0x18] sm:$0xff]
    %s28 = sld [smem:[#allocation2]]
    %v29 = vstv %s28
    %v30 = vmul.f32 %v29, %v24
    %v31 = vmul.f32 %v29, %v25
    %v32 = vmul.f32 %v29, %v26
    %v33 = vmul.f32 %v29, %v27
    %s34 = sld [smem:[#allocation2 + $0x5]]
    %v35 = vstv %s34
    %v36 = vadd.f32 %v30, %v35
    %v37 = vadd.f32 %v31, %v35
    %v38 = vadd.f32 %v32, %v35
    %v39 = vadd.f32 %v33, %v35
    %v40 = vmul.f32 %v36, 0.01
    %v41 = vmul.f32 %v37, 0.01
    %v42 = vmul.f32 %v38, 0.01
    %v43 = vmul.f32 %v39, 0.01
    %v44 = vmax.f32 %v36, %v40
    %v45 = vmax.f32 %v37, %v41
    %v46 = vmax.f32 %v38, %v42
    %v47 = vmax.f32 %v39, %v43
    %s48 = sld [smem:[#allocation2 + $0x1]]
    %v49 = vstv %s48
    %v50 = vmul.f32 %v49, %v24
    %v51 = vmul.f32 %v49, %v25
    %v52 = vmul.f32 %v49, %v26
    %v53 = vmul.f32 %v49, %v27
    %s54 = sld [smem:[#allocation2 + $0x6]]
    %v55 = vstv %s54
    %v56 = vadd.f32 %v50, %v55
    %v57 = vadd.f32 %v51, %v55
    %v58 = vadd.f32 %v52, %v55
    %v59 = vadd.f32 %v53, %v55
    %v60 = vmul.f32 %v56, 0.01
    %v61 = vmul.f32 %v57, 0.01
    %v62 = vmul.f32 %v58, 0.01
    %v63 = vmul.f32 %v59, 0.01
    %v64 = vmax.f32 %v56, %v60
    %v65 = vmax.f32 %v57, %v61
    %v66 = vmax.f32 %v58, %v62
    %v67 = vmax.f32 %v59, %v63
    %s68 = sld [smem:[#allocation2 + $0x2]]
    %v69 = vstv %s68
    %v70 = vmul.f32 %v69, %v24
    %v71 = vmul.f32 %v69, %v25
    %v72 = vmul.f32 %v69, %v26
    %v73 = vmul.f32 %v69, %v27
    %s74 = sld [smem:[#allocation2 + $0x7]]
    %v75 = vstv %s74
    %v76 = vadd.f32 %v70, %v75
    %v77 = vadd.f32 %v71, %v75
    %v78 = vadd.f32 %v72, %v75
    %v79 = vadd.f32 %v73, %v75
    %v80 = vmul.f32 %v76, 0.01
    %v81 = vmul.f32 %v77, 0.01
    %v82 = vmul.f32 %v78, 0.01
    %v83 = vmul.f32 %v79, 0.01
    %v84 = vmax.f32 %v76, %v80
    %v85 = vmax.f32 %v77, %v81
    %v86 = vmax.f32 %v78, %v82
    %v87 = vmax.f32 %v79, %v83
    %s88 = sld [smem:[#allocation2 + $0x3]]
    %v89 = vstv %s88
    %v90 = vmul.f32 %v89, %v24
    %v91 = vmul.f32 %v89, %v25
    %v92 = vmul.f32 %v89, %v26
    %v93 = vmul.f32 %v89, %v27
    %s94 = sld [smem:[#allocation2 + $0x8]]
    %v95 = vstv %s94
    %v96 = vadd.f32 %v90, %v95
    %v97 = vadd.f32 %v91, %v95
    %v98 = vadd.f32 %v92, %v95
    %v99 = vadd.f32 %v93, %v95
    %v100 = vmul.f32 %v96, 0.01
    %v101 = vmul.f32 %v97, 0.01
    %v102 = vmul.f32 %v98, 0.01
    %v103 = vmul.f32 %v99, 0.01
    %v104 = vmax.f32 %v96, %v100
    %v105 = vmax.f32 %v97, %v101
    %v106 = vmax.f32 %v98, %v102
    %v107 = vmax.f32 %v99, %v103
    %s108 = sld [smem:[#allocation2 + $0x4]]
    %v109 = vstv %s108
    %v110 = vmul.f32 %v109, %v24
    %v111 = vmul.f32 %v109, %v25
    %v112 = vmul.f32 %v109, %v26
    %v113 = vmul.f32 %v109, %v27
    %s114 = sld [smem:[#allocation2 + $0x9]]
    %v115 = vstv %s114
    %v116 = vadd.f32 %v110, %v115
    %v117 = vadd.f32 %v111, %v115
    %v118 = vadd.f32 %v112, %v115
    %v119 = vadd.f32 %v113, %v115
    %v120 = vmul.f32 %v116, 0.01
    %v121 = vmul.f32 %v117, 0.01
    %v122 = vmul.f32 %v118, 0.01
    %v123 = vmul.f32 %v119, 0.01
    %v124 = vmax.f32 %v116, %v120
    %v125 = vmax.f32 %v117, %v121
    %v126 = vmax.f32 %v118, %v122
    %v127 = vmax.f32 %v119, %v123
    %s128 = sld [smem:[#allocation2 + $0xa]]
    %v129 = vstv %s128
    %v130 = vmul.f32 %v129, %v44
    %v131 = vmul.f32 %v129, %v45
    %v132 = vmul.f32 %v129, %v46
    %v133 = vmul.f32 %v129, %v47
    %s134 = sld [smem:[#allocation2 + $0xb]]
    %v135 = vstv %s134
    %v136 = vmul.f32 %v135, %v64
    %v137 = vmul.f32 %v135, %v65
    %v138 = vmul.f32 %v135, %v66
    %v139 = vmul.f32 %v135, %v67
    %v140 = vadd.f32 %v130, %v136
    %v141 = vadd.f32 %v131, %v137
    %v142 = vadd.f32 %v132, %v138
    %v143 = vadd.f32 %v133, %v139
    %s144 = sld [smem:[#allocation2 + $0xc]]
    %v145 = vstv %s144
    %v146 = vmul.f32 %v145, %v84
    %v147 = vmul.f32 %v145, %v85
    %v148 = vmul.f32 %v145, %v86
    %v149 = vmul.f32 %v145, %v87
    %v150 = vadd.f32 %v140, %v146
    %v151 = vadd.f32 %v141, %v147
    %v152 = vadd.f32 %v142, %v148
    %v153 = vadd.f32 %v143, %v149
    %s154 = sld [smem:[#allocation2 + $0xd]]
    %v155 = vstv %s154
    %v156 = vmul.f32 %v155, %v104
    %v157 = vmul.f32 %v155, %v105
    %v158 = vmul.f32 %v155, %v106
    %v159 = vmul.f32 %v155, %v107
    %v160 = vadd.f32 %v150, %v156
    %v161 = vadd.f32 %v151, %v157
    %v162 = vadd.f32 %v152, %v158
    %v163 = vadd.f32 %v153, %v159
    %s164 = sld [smem:[#allocation2 + $0xe]]
    %v165 = vstv %s164
    %v166 = vmul.f32 %v165, %v124
    %v167 = vmul.f32 %v165, %v125
    %v168 = vmul.f32 %v165, %v126
    %v169 = vmul.f32 %v165, %v127
    %v170 = vadd.f32 %v160, %v166
    %v171 = vadd.f32 %v161, %v167
    %v172 = vadd.f32 %v162, %v168
    %v173 = vadd.f32 %v163, %v169
    %s174 = sld [smem:[#allocation2 + $0x23]]
    %v175 = vstv %s174
    %v176 = vadd.f32 %v170, %v175
    %v177 = vadd.f32 %v171, %v175
    %v178 = vadd.f32 %v172, %v175
    %v179 = vadd.f32 %v173, %v175
    %v180 = vmul.f32 %v176, 0.01
    %v181 = vmul.f32 %v177, 0.01
    %v182 = vmul.f32 %v178, 0.01
    %v183 = vmul.f32 %v179, 0.01
    %v184 = vmax.f32 %v176, %v180
    %v185 = vmax.f32 %v177, %v181
    %v186 = vmax.f32 %v178, %v182
    %v187 = vmax.f32 %v179, %v183
    %s188 = sld [smem:[#allocation2 + $0xf]]
    %v189 = vstv %s188
    %v190 = vmul.f32 %v189, %v44
    %v191 = vmul.f32 %v189, %v45
    %v192 = vmul.f32 %v189, %v46
    %v193 = vmul.f32 %v189, %v47
    %s194 = sld [smem:[#allocation2 + $0x10]]
    %v195 = vstv %s194
    %v196 = vmul.f32 %v195, %v64
    %v197 = vmul.f32 %v195, %v65
    %v198 = vmul.f32 %v195, %v66
    %v199 = vmul.f32 %v195, %v67
    %v200 = vadd.f32 %v190, %v196
    %v201 = vadd.f32 %v191, %v197
    %v202 = vadd.f32 %v192, %v198
    %v203 = vadd.f32 %v193, %v199
    %s204 = sld [smem:[#allocation2 + $0x11]]
    %v205 = vstv %s204
    %v206 = vmul.f32 %v205, %v84
    %v207 = vmul.f32 %v205, %v85
    %v208 = vmul.f32 %v205, %v86
    %v209 = vmul.f32 %v205, %v87
    %v210 = vadd.f32 %v200, %v206
    %v211 = vadd.f32 %v201, %v207
    %v212 = vadd.f32 %v202, %v208
    %v213 = vadd.f32 %v203, %v209
    %s214 = sld [smem:[#allocation2 + $0x12]]
    %v215 = vstv %s214
    %v216 = vmul.f32 %v215, %v104
    %v217 = vmul.f32 %v215, %v105
    %v218 = vmul.f32 %v215, %v106
    %v219 = vmul.f32 %v215, %v107
    %v220 = vadd.f32 %v210, %v216
    %v221 = vadd.f32 %v211, %v217
    %v222 = vadd.f32 %v212, %v218
    %v223 = vadd.f32 %v213, %v219
    %s224 = sld [smem:[#allocation2 + $0x13]]
    %v225 = vstv %s224
    %v226 = vmul.f32 %v225, %v124
    %v227 = vmul.f32 %v225, %v125
    %v228 = vmul.f32 %v225, %v126
    %v229 = vmul.f32 %v225, %v127
    %v230 = vadd.f32 %v220, %v226
    %v231 = vadd.f32 %v221, %v227
    %v232 = vadd.f32 %v222, %v228
    %v233 = vadd.f32 %v223, %v229
    %s234 = sld [smem:[#allocation2 + $0x24]]
    %v235 = vstv %s234
    %v236 = vadd.f32 %v230, %v235
    %v237 = vadd.f32 %v231, %v235
    %v238 = vadd.f32 %v232, %v235
    %v239 = vadd.f32 %v233, %v235
    %v240 = vmul.f32 %v236, 0.01
    %v241 = vmul.f32 %v237, 0.01
    %v242 = vmul.f32 %v238, 0.01
    %v243 = vmul.f32 %v239, 0.01
    %v244 = vmax.f32 %v236, %v240
    %v245 = vmax.f32 %v237, %v241
    %v246 = vmax.f32 %v238, %v242
    %v247 = vmax.f32 %v239, %v243
    %s248 = sld [smem:[#allocation2 + $0x14]]
    %v249 = vstv %s248
    %v250 = vmul.f32 %v249, %v44
    %v251 = vmul.f32 %v249, %v45
    %v252 = vmul.f32 %v249, %v46
    %v253 = vmul.f32 %v249, %v47
    %s254 = sld [smem:[#allocation2 + $0x15]]
    %v255 = vstv %s254
    %v256 = vmul.f32 %v255, %v64
    %v257 = vmul.f32 %v255, %v65
    %v258 = vmul.f32 %v255, %v66
    %v259 = vmul.f32 %v255, %v67
    %v260 = vadd.f32 %v250, %v256
    %v261 = vadd.f32 %v251, %v257
    %v262 = vadd.f32 %v252, %v258
    %v263 = vadd.f32 %v253, %v259
    %s264 = sld [smem:[#allocation2 + $0x16]]
    %v265 = vstv %s264
    %v266 = vmul.f32 %v265, %v84
    %v267 = vmul.f32 %v265, %v85
    %v268 = vmul.f32 %v265, %v86
    %v269 = vmul.f32 %v265, %v87
    %v270 = vadd.f32 %v260, %v266
    %v271 = vadd.f32 %v261, %v267
    %v272 = vadd.f32 %v262, %v268
    %v273 = vadd.f32 %v263, %v269
    %s274 = sld [smem:[#allocation2 + $0x17]]
    %v275 = vstv %s274
    %v276 = vmul.f32 %v275, %v104
    %v277 = vmul.f32 %v275, %v105
    %v278 = vmul.f32 %v275, %v106
    %v279 = vmul.f32 %v275, %v107
    %v280 = vadd.f32 %v270, %v276
    %v281 = vadd.f32 %v271, %v277
    %v282 = vadd.f32 %v272, %v278
    %v283 = vadd.f32 %v273, %v279
    %s284 = sld [smem:[#allocation2 + $0x18]]
    %v285 = vstv %s284
    %v286 = vmul.f32 %v285, %v124
    %v287 = vmul.f32 %v285, %v125
    %v288 = vmul.f32 %v285, %v126
    %v289 = vmul.f32 %v285, %v127
    %v290 = vadd.f32 %v280, %v286
    %v291 = vadd.f32 %v281, %v287
    %v292 = vadd.f32 %v282, %v288
    %v293 = vadd.f32 %v283, %v289
    %s294 = sld [smem:[#allocation2 + $0x25]]
    %v295 = vstv %s294
    %v296 = vadd.f32 %v290, %v295
    %v297 = vadd.f32 %v291, %v295
    %v298 = vadd.f32 %v292, %v295
    %v299 = vadd.f32 %v293, %v295
    %v300 = vmul.f32 %v296, 0.01
    %v301 = vmul.f32 %v297, 0.01
    %v302 = vmul.f32 %v298, 0.01
    %v303 = vmul.f32 %v299, 0.01
    %v304 = vmax.f32 %v296, %v300
    %v305 = vmax.f32 %v297, %v301
    %v306 = vmax.f32 %v298, %v302
    %v307 = vmax.f32 %v299, %v303
    %s308 = sld [smem:[#allocation2 + $0x19]]
    %v309 = vstv %s308
    %v310 = vmul.f32 %v309, %v44
    %v311 = vmul.f32 %v309, %v45
    %v312 = vmul.f32 %v309, %v46
    %v313 = vmul.f32 %v309, %v47
    %s314 = sld [smem:[#allocation2 + $0x1a]]
    %v315 = vstv %s314
    %v316 = vmul.f32 %v315, %v64
    %v317 = vmul.f32 %v315, %v65
    %v318 = vmul.f32 %v315, %v66
    %v319 = vmul.f32 %v315, %v67
    %v320 = vadd.f32 %v310, %v316
    %v321 = vadd.f32 %v311, %v317
    %v322 = vadd.f32 %v312, %v318
    %v323 = vadd.f32 %v313, %v319
    %s324 = sld [smem:[#allocation2 + $0x1b]]
    %v325 = vstv %s324
    %v326 = vmul.f32 %v325, %v84
    %v327 = vmul.f32 %v325, %v85
    %v328 = vmul.f32 %v325, %v86
    %v329 = vmul.f32 %v325, %v87
    %v330 = vadd.f32 %v320, %v326
    %v331 = vadd.f32 %v321, %v327
    %v332 = vadd.f32 %v322, %v328
    %v333 = vadd.f32 %v323, %v329
    %s334 = sld [smem:[#allocation2 + $0x1c]]
    %v335 = vstv %s334
    %v336 = vmul.f32 %v335, %v104
    %v337 = vmul.f32 %v335, %v105
    %v338 = vmul.f32 %v335, %v106
    %v339 = vmul.f32 %v335, %v107
    %v340 = vadd.f32 %v330, %v336
    %v341 = vadd.f32 %v331, %v337
    %v342 = vadd.f32 %v332, %v338
    %v343 = vadd.f32 %v333, %v339
    %s344 = sld [smem:[#allocation2 + $0x1d]]
    %v345 = vstv %s344
    %v346 = vmul.f32 %v345, %v124
    %v347 = vmul.f32 %v345, %v125
    %v348 = vmul.f32 %v345, %v126
    %v349 = vmul.f32 %v345, %v127
    %v350 = vadd.f32 %v340, %v346
    %v351 = vadd.f32 %v341, %v347
    %v352 = vadd.f32 %v342, %v348
    %v353 = vadd.f32 %v343, %v349
    %s354 = sld [smem:[#allocation2 + $0x26]]
    %v355 = vstv %s354
    %v356 = vadd.f32 %v350, %v355
    %v357 = vadd.f32 %v351, %v355
    %v358 = vadd.f32 %v352, %v355
    %v359 = vadd.f32 %v353, %v355
    %v360 = vmul.f32 %v356, 0.01
    %v361 = vmul.f32 %v357, 0.01
    %v362 = vmul.f32 %v358, 0.01
    %v363 = vmul.f32 %v359, 0.01
    %v364 = vmax.f32 %v356, %v360
    %v365 = vmax.f32 %v357, %v361
    %v366 = vmax.f32 %v358, %v362
    %v367 = vmax.f32 %v359, %v363
    %s368 = sld [smem:[#allocation2 + $0x1e]]
    %v369 = vstv %s368
    %v370 = vmul.f32 %v369, %v44
    %v371 = vmul.f32 %v369, %v45
    %v372 = vmul.f32 %v369, %v46
    %v373 = vmul.f32 %v369, %v47
    %s374 = sld [smem:[#allocation2 + $0x1f]]
    %v375 = vstv %s374
    %v376 = vmul.f32 %v375, %v64
    %v377 = vmul.f32 %v375, %v65
    %v378 = vmul.f32 %v375, %v66
    %v379 = vmul.f32 %v375, %v67
    %v380 = vadd.f32 %v370, %v376
    %v381 = vadd.f32 %v371, %v377
    %v382 = vadd.f32 %v372, %v378
    %v383 = vadd.f32 %v373, %v379
    %s384 = sld [smem:[#allocation2 + $0x20]]
    %v385 = vstv %s384
    %v386 = vmul.f32 %v385, %v84
    %v387 = vmul.f32 %v385, %v85
    %v388 = vmul.f32 %v385, %v86
    %v389 = vmul.f32 %v385, %v87
    %v390 = vadd.f32 %v380, %v386
    %v391 = vadd.f32 %v381, %v387
    %v392 = vadd.f32 %v382, %v388
    %v393 = vadd.f32 %v383, %v389
    %s394 = sld [smem:[#allocation2 + $0x21]]
    %v395 = vstv %s394
    %v396 = vmul.f32 %v395, %v104
    %v397 = vmul.f32 %v395, %v105
    %v398 = vmul.f32 %v395, %v106
    %v399 = vmul.f32 %v395, %v107
    %v400 = vadd.f32 %v390, %v396
    %v401 = vadd.f32 %v391, %v397
    %v402 = vadd.f32 %v392, %v398
    %v403 = vadd.f32 %v393, %v399
    %s404 = sld [smem:[#allocation2 + $0x22]]
    %v405 = vstv %s404
    %v406 = vmul.f32 %v405, %v124
    %v407 = vmul.f32 %v405, %v125
    %v408 = vmul.f32 %v405, %v126
    %v409 = vmul.f32 %v405, %v127
    %v410 = vadd.f32 %v400, %v406
    %v411 = vadd.f32 %v401, %v407
    %v412 = vadd.f32 %v402, %v408
    %v413 = vadd.f32 %v403, %v409
    %s414 = sld [smem:[#allocation2 + $0x27]]
    %v415 = vstv %s414
    %v416 = vadd.f32 %v410, %v415
    %v417 = vadd.f32 %v411, %v415
    %v418 = vadd.f32 %v412, %v415
    %v419 = vadd.f32 %v413, %v415
    %v420 = vmul.f32 %v416, 0.01
    %v421 = vmul.f32 %v417, 0.01
    %v422 = vmul.f32 %v418, 0.01
    %v423 = vmul.f32 %v419, 0.01
    %v424 = vmax.f32 %v416, %v420
    %v425 = vmax.f32 %v417, %v421
    %v426 = vmax.f32 %v418, %v422
    %v427 = vmax.f32 %v419, %v423
    %s428 = sld [smem:[#allocation2 + $0x28]]
    %v429 = vstv %s428
    %v430 = vmul.f32 %v429, %v184
    %v431 = vmul.f32 %v429, %v185
    %v432 = vmul.f32 %v429, %v186
    %v433 = vmul.f32 %v429, %v187
    %s434 = sld [smem:[#allocation2 + $0x29]]
    %v435 = vstv %s434
    %v436 = vmul.f32 %v435, %v244
    %v437 = vmul.f32 %v435, %v245
    %v438 = vmul.f32 %v435, %v246
    %v439 = vmul.f32 %v435, %v247
    %v440 = vadd.f32 %v430, %v436
    %v441 = vadd.f32 %v431, %v437
    %v442 = vadd.f32 %v432, %v438
    %v443 = vadd.f32 %v433, %v439
    %s444 = sld [smem:[#allocation2 + $0x2a]]
    %v445 = vstv %s444
    %v446 = vmul.f32 %v445, %v304
    %v447 = vmul.f32 %v445, %v305
    %v448 = vmul.f32 %v445, %v306
    %v449 = vmul.f32 %v445, %v307
    %v450 = vadd.f32 %v440, %v446
    %v451 = vadd.f32 %v441, %v447
    %v452 = vadd.f32 %v442, %v448
    %v453 = vadd.f32 %v443, %v449
    %s454 = sld [smem:[#allocation2 + $0x2b]]
    %v455 = vstv %s454
    %v456 = vmul.f32 %v455, %v364
    %v457 = vmul.f32 %v455, %v365
    %v458 = vmul.f32 %v455, %v366
    %v459 = vmul.f32 %v455, %v367
    %v460 = vadd.f32 %v450, %v456
    %v461 = vadd.f32 %v451, %v457
    %v462 = vadd.f32 %v452, %v458
    %v463 = vadd.f32 %v453, %v459
    %s464 = sld [smem:[#allocation2 + $0x2c]]
    %v465 = vstv %s464
    %v466 = vmul.f32 %v465, %v424
    %v467 = vmul.f32 %v465, %v425
    %v468 = vmul.f32 %v465, %v426
    %v469 = vmul.f32 %v465, %v427
    %v470 = vadd.f32 %v460, %v466
    %v471 = vadd.f32 %v461, %v467
    %v472 = vadd.f32 %v462, %v468
    %v473 = vadd.f32 %v463, %v469
    %s474 = sld [smem:[#allocation2 + $0x41]]
    %v475 = vstv %s474
    %v476 = vadd.f32 %v470, %v475
    %v477 = vadd.f32 %v471, %v475
    %v478 = vadd.f32 %v472, %v475
    %v479 = vadd.f32 %v473, %v475
    %v480 = vmul.f32 %v476, 0.01
    %v481 = vmul.f32 %v477, 0.01
    %v482 = vmul.f32 %v478, 0.01
    %v483 = vmul.f32 %v479, 0.01
    %v484 = vmax.f32 %v476, %v480
    %v485 = vmax.f32 %v477, %v481
    %v486 = vmax.f32 %v478, %v482
    %v487 = vmax.f32 %v479, %v483
    %s488 = sld [smem:[#allocation2 + $0x2d]]
    %v489 = vstv %s488
    %v490 = vmul.f32 %v489, %v184
    %v491 = vmul.f32 %v489, %v185
    %v492 = vmul.f32 %v489, %v186
    %v493 = vmul.f32 %v489, %v187
    %s494 = sld [smem:[#allocation2 + $0x2e]]
    %v495 = vstv %s494
    %v496 = vmul.f32 %v495, %v244
    %v497 = vmul.f32 %v495, %v245
    %v498 = vmul.f32 %v495, %v246
    %v499 = vmul.f32 %v495, %v247
    %v500 = vadd.f32 %v490, %v496
    %v501 = vadd.f32 %v491, %v497
    %v502 = vadd.f32 %v492, %v498
    %v503 = vadd.f32 %v493, %v499
    %s504 = sld [smem:[#allocation2 + $0x2f]]
    %v505 = vstv %s504
    %v506 = vmul.f32 %v505, %v304
    %v507 = vmul.f32 %v505, %v305
    %v508 = vmul.f32 %v505, %v306
    %v509 = vmul.f32 %v505, %v307
    %v510 = vadd.f32 %v500, %v506
    %v511 = vadd.f32 %v501, %v507
    %v512 = vadd.f32 %v502, %v508
    %v513 = vadd.f32 %v503, %v509
    %s514 = sld [smem:[#allocation2 + $0x30]]
    %v515 = vstv %s514
    %v516 = vmul.f32 %v515, %v364
    %v517 = vmul.f32 %v515, %v365
    %v518 = vmul.f32 %v515, %v366
    %v519 = vmul.f32 %v515, %v367
    %v520 = vadd.f32 %v510, %v516
    %v521 = vadd.f32 %v511, %v517
    %v522 = vadd.f32 %v512, %v518
    %v523 = vadd.f32 %v513, %v519
    %s524 = sld [smem:[#allocation2 + $0x31]]
    %v525 = vstv %s524
    %v526 = vmul.f32 %v525, %v424
    %v527 = vmul.f32 %v525, %v425
    %v528 = vmul.f32 %v525, %v426
    %v529 = vmul.f32 %v525, %v427
    %v530 = vadd.f32 %v520, %v526
    %v531 = vadd.f32 %v521, %v527
    %v532 = vadd.f32 %v522, %v528
    %v533 = vadd.f32 %v523, %v529
    %s534 = sld [smem:[#allocation2 + $0x42]]
    %v535 = vstv %s534
    %v536 = vadd.f32 %v530, %v535
    %v537 = vadd.f32 %v531, %v535
    %v538 = vadd.f32 %v532, %v535
    %v539 = vadd.f32 %v533, %v535
    %v540 = vmul.f32 %v536, 0.01
    %v541 = vmul.f32 %v537, 0.01
    %v542 = vmul.f32 %v538, 0.01
    %v543 = vmul.f32 %v539, 0.01
    %v544 = vmax.f32 %v536, %v540
    %v545 = vmax.f32 %v537, %v541
    %v546 = vmax.f32 %v538, %v542
    %v547 = vmax.f32 %v539, %v543
    %s548 = sld [smem:[#allocation2 + $0x32]]
    %v549 = vstv %s548
    %v550 = vmul.f32 %v549, %v184
    %v551 = vmul.f32 %v549, %v185
    %v552 = vmul.f32 %v549, %v186
    %v553 = vmul.f32 %v549, %v187
    %s554 = sld [smem:[#allocation2 + $0x33]]
    %v555 = vstv %s554
    %v556 = vmul.f32 %v555, %v244
    %v557 = vmul.f32 %v555, %v245
    %v558 = vmul.f32 %v555, %v246
    %v559 = vmul.f32 %v555, %v247
    %v560 = vadd.f32 %v550, %v556
    %v561 = vadd.f32 %v551, %v557
    %v562 = vadd.f32 %v552, %v558
    %v563 = vadd.f32 %v553, %v559
    %s564 = sld [smem:[#allocation2 + $0x34]]
    %v565 = vstv %s564
    %v566 = vmul.f32 %v565, %v304
    %v567 = vmul.f32 %v565, %v305
    %v568 = vmul.f32 %v565, %v306
    %v569 = vmul.f32 %v565, %v307
    %v570 = vadd.f32 %v560, %v566
    %v571 = vadd.f32 %v561, %v567
    %v572 = vadd.f32 %v562, %v568
    %v573 = vadd.f32 %v563, %v569
    %s574 = sld [smem:[#allocation2 + $0x35]]
    %v575 = vstv %s574
    %v576 = vmul.f32 %v575, %v364
    %v577 = vmul.f32 %v575, %v365
    %v578 = vmul.f32 %v575, %v366
    %v579 = vmul.f32 %v575, %v367
    %v580 = vadd.f32 %v570, %v576
    %v581 = vadd.f32 %v571, %v577
    %v582 = vadd.f32 %v572, %v578
    %v583 = vadd.f32 %v573, %v579
    %s584 = sld [smem:[#allocation2 + $0x36]]
    %v585 = vstv %s584
    %v586 = vmul.f32 %v585, %v424
    %v587 = vmul.f32 %v585, %v425
    %v588 = vmul.f32 %v585, %v426
    %v589 = vmul.f32 %v585, %v427
    %v590 = vadd.f32 %v580, %v586
    %v591 = vadd.f32 %v581, %v587
    %v592 = vadd.f32 %v582, %v588
    %v593 = vadd.f32 %v583, %v589
    %s594 = sld [smem:[#allocation2 + $0x43]]
    %v595 = vstv %s594
    %v596 = vadd.f32 %v590, %v595
    %v597 = vadd.f32 %v591, %v595
    %v598 = vadd.f32 %v592, %v595
    %v599 = vadd.f32 %v593, %v595
    %v600 = vmul.f32 %v596, 0.01
    %v601 = vmul.f32 %v597, 0.01
    %v602 = vmul.f32 %v598, 0.01
    %v603 = vmul.f32 %v599, 0.01
    %v604 = vmax.f32 %v596, %v600
    %v605 = vmax.f32 %v597, %v601
    %v606 = vmax.f32 %v598, %v602
    %v607 = vmax.f32 %v599, %v603
    %s608 = sld [smem:[#allocation2 + $0x37]]
    %v609 = vstv %s608
    %v610 = vmul.f32 %v609, %v184
    %v611 = vmul.f32 %v609, %v185
    %v612 = vmul.f32 %v609, %v186
    %v613 = vmul.f32 %v609, %v187
    %s614 = sld [smem:[#allocation2 + $0x38]]
    %v615 = vstv %s614
    %v616 = vmul.f32 %v615, %v244
    %v617 = vmul.f32 %v615, %v245
    %v618 = vmul.f32 %v615, %v246
    %v619 = vmul.f32 %v615, %v247
    %v620 = vadd.f32 %v610, %v616
    %v621 = vadd.f32 %v611, %v617
    %v622 = vadd.f32 %v612, %v618
    %v623 = vadd.f32 %v613, %v619
    %s624 = sld [smem:[#allocation2 + $0x39]]
    %v625 = vstv %s624
    %v626 = vmul.f32 %v625, %v304
    %v627 = vmul.f32 %v625, %v305
    %v628 = vmul.f32 %v625, %v306
    %v629 = vmul.f32 %v625, %v307
    %v630 = vadd.f32 %v620, %v626
    %v631 = vadd.f32 %v621, %v627
    %v632 = vadd.f32 %v622, %v628
    %v633 = vadd.f32 %v623, %v629
    %s634 = sld [smem:[#allocation2 + $0x3a]]
    %v635 = vstv %s634
    %v636 = vmul.f32 %v635, %v364
    %v637 = vmul.f32 %v635, %v365
    %v638 = vmul.f32 %v635, %v366
    %v639 = vmul.f32 %v635, %v367
    %v640 = vadd.f32 %v630, %v636
    %v641 = vadd.f32 %v631, %v637
    %v642 = vadd.f32 %v632, %v638
    %v643 = vadd.f32 %v633, %v639
    %s644 = sld [smem:[#allocation2 + $0x3b]]
    %v645 = vstv %s644
    %v646 = vmul.f32 %v645, %v424
    %v647 = vmul.f32 %v645, %v425
    %v648 = vmul.f32 %v645, %v426
    %v649 = vmul.f32 %v645, %v427
    %v650 = vadd.f32 %v640, %v646
    %v651 = vadd.f32 %v641, %v647
    %v652 = vadd.f32 %v642, %v648
    %v653 = vadd.f32 %v643, %v649
    %s654 = sld [smem:[#allocation2 + $0x44]]
    %v655 = vstv %s654
    %v656 = vadd.f32 %v650, %v655
    %v657 = vadd.f32 %v651, %v655
    %v658 = vadd.f32 %v652, %v655
    %v659 = vadd.f32 %v653, %v655
    %v660 = vmul.f32 %v656, 0.01
    %v661 = vmul.f32 %v657, 0.01
    %v662 = vmul.f32 %v658, 0.01
    %v663 = vmul.f32 %v659, 0.01
    %v664 = vmax.f32 %v656, %v660
    %v665 = vmax.f32 %v657, %v661
    %v666 = vmax.f32 %v658, %v662
    %v667 = vmax.f32 %v659, %v663
    %s668 = sld [smem:[#allocation2 + $0x3c]]
    %v669 = vstv %s668
    %v670 = vmul.f32 %v669, %v184
    %v671 = vmul.f32 %v669, %v185
    %v672 = vmul.f32 %v669, %v186
    %v673 = vmul.f32 %v669, %v187
    %s674 = sld [smem:[#allocation2 + $0x3d]]
    %v675 = vstv %s674
    %v676 = vmul.f32 %v675, %v244
    %v677 = vmul.f32 %v675, %v245
    %v678 = vmul.f32 %v675, %v246
    %v679 = vmul.f32 %v675, %v247
    %v680 = vadd.f32 %v670, %v676
    %v681 = vadd.f32 %v671, %v677
    %v682 = vadd.f32 %v672, %v678
    %v683 = vadd.f32 %v673, %v679
    %s684 = sld [smem:[#allocation2 + $0x3e]]
    %v685 = vstv %s684
    %v686 = vmul.f32 %v685, %v304
    %v687 = vmul.f32 %v685, %v305
    %v688 = vmul.f32 %v685, %v306
    %v689 = vmul.f32 %v685, %v307
    %v690 = vadd.f32 %v680, %v686
    %v691 = vadd.f32 %v681, %v687
    %v692 = vadd.f32 %v682, %v688
    %v693 = vadd.f32 %v683, %v689
    %s694 = sld [smem:[#allocation2 + $0x3f]]
    %v695 = vstv %s694
    %v696 = vmul.f32 %v695, %v364
    %v697 = vmul.f32 %v695, %v365
    %v698 = vmul.f32 %v695, %v366
    %v699 = vmul.f32 %v695, %v367
    %v700 = vadd.f32 %v690, %v696
    %v701 = vadd.f32 %v691, %v697
    %v702 = vadd.f32 %v692, %v698
    %v703 = vadd.f32 %v693, %v699
    %s704 = sld [smem:[#allocation2 + $0x40]]
    %v705 = vstv %s704
    %v706 = vmul.f32 %v705, %v424
    %v707 = vmul.f32 %v705, %v425
    %v708 = vmul.f32 %v705, %v426
    %v709 = vmul.f32 %v705, %v427
    %v710 = vadd.f32 %v700, %v706
    %v711 = vadd.f32 %v701, %v707
    %v712 = vadd.f32 %v702, %v708
    %v713 = vadd.f32 %v703, %v709
    %s714 = sld [smem:[#allocation2 + $0x45]]
    %v715 = vstv %s714
    %v716 = vadd.f32 %v710, %v715
    %v717 = vadd.f32 %v711, %v715
    %v718 = vadd.f32 %v712, %v715
    %v719 = vadd.f32 %v713, %v715
    %v720 = vmul.f32 %v716, 0.01
    %v721 = vmul.f32 %v717, 0.01
    %v722 = vmul.f32 %v718, 0.01
    %v723 = vmul.f32 %v719, 0.01
    %v724 = vmax.f32 %v716, %v720
    %v725 = vmax.f32 %v717, %v721
    %v726 = vmax.f32 %v718, %v722
    %v727 = vmax.f32 %v719, %v723
    %s728 = sld [smem:[#allocation2 + $0x46]]
    %v729 = vstv %s728
    %v730 = vmul.f32 %v729, %v484
    %v731 = vmul.f32 %v729, %v485
    %v732 = vmul.f32 %v729, %v486
    %v733 = vmul.f32 %v729, %v487
    %s734 = sld [smem:[#allocation2 + $0x47]]
    %v735 = vstv %s734
    %v736 = vmul.f32 %v735, %v544
    %v737 = vmul.f32 %v735, %v545
    %v738 = vmul.f32 %v735, %v546
    %v739 = vmul.f32 %v735, %v547
    %v740 = vadd.f32 %v730, %v736
    %v741 = vadd.f32 %v731, %v737
    %v742 = vadd.f32 %v732, %v738
    %v743 = vadd.f32 %v733, %v739
    %s744 = sld [smem:[#allocation2 + $0x48]]
    %v745 = vstv %s744
    %v746 = vmul.f32 %v745, %v604
    %v747 = vmul.f32 %v745, %v605
    %v748 = vmul.f32 %v745, %v606
    %v749 = vmul.f32 %v745, %v607
    %v750 = vadd.f32 %v740, %v746
    %v751 = vadd.f32 %v741, %v747
    %v752 = vadd.f32 %v742, %v748
    %v753 = vadd.f32 %v743, %v749
    %s754 = sld [smem:[#allocation2 + $0x49]]
    %v755 = vstv %s754
    %v756 = vmul.f32 %v755, %v664
    %v757 = vmul.f32 %v755, %v665
    %v758 = vmul.f32 %v755, %v666
    %v759 = vmul.f32 %v755, %v667
    %v760 = vadd.f32 %v750, %v756
    %v761 = vadd.f32 %v751, %v757
    %v762 = vadd.f32 %v752, %v758
    %v763 = vadd.f32 %v753, %v759
    %s764 = sld [smem:[#allocation2 + $0x4a]]
    %v765 = vstv %s764
    %v766 = vmul.f32 %v765, %v724
    %v767 = vmul.f32 %v765, %v725
    %v768 = vmul.f32 %v765, %v726
    %v769 = vmul.f32 %v765, %v727
    %v770 = vadd.f32 %v760, %v766
    %v771 = vadd.f32 %v761, %v767
    %v772 = vadd.f32 %v762, %v768
    %v773 = vadd.f32 %v763, %v769
    %s774 = sld [smem:[#allocation2 + $0x4b]]
    %v775 = vstv %s774
    %v776 = vadd.f32 %v770, %v775
    %v777 = vadd.f32 %v771, %v775
    %v778 = vadd.f32 %v772, %v775
    %v779 = vadd.f32 %v773, %v775
    %780 = vst [vmem:[%s2] sm:$0xff] %v776
    %781 = vst [vmem:[%s2 + $0x8] sm:$0xff] %v777
    %782 = vst [vmem:[%s2 + $0x10] sm:$0xff] %v778
    %783 = vst [vmem:[%s2 + $0x18] sm:$0xff] %v779
    %s784 = sadd.s32 0, 32
    %s785 = scalar_lea.vmem %s1, %s784
    %v786 = vld [vmem:[%s785] sm:$0xff]
    %v787 = vld [vmem:[%s785 + $0x8] sm:$0xff]
    %v788 = vld [vmem:[%s785 + $0x10] sm:$0xff]
    %v789 = vld [vmem:[%s785 + $0x18] sm:$0xff]
    %s790 = sld [smem:[#allocation2 + $0x4c]]
    %v791 = vstv %s790
    %v792 = vmul.f32 %v791, %v786
    %v793 = vmul.f32 %v791, %v787
    %v794 = vmul.f32 %v791, %v788
    %v795 = vmul.f32 %v791, %v789
    %s796 = sld [smem:[#allocation2 + $0x51]]
    %v797 = vstv %s796
    %v798 = vadd.f32 %v792, %v797
    %v799 = vadd.f32 %v793, %v797
    %v800 = vadd.f32 %v794, %v797
    %v801 = vadd.f32 %v795, %v797
    %v802 = vmul.f32 %v798, 0.01
    %v803 = vmul.f32 %v799, 0.01
    %v804 = vmul.f32 %v800, 0.01
    %v805 = vmul.f32 %v801, 0.01
    %v806 = vmax.f32 %v798, %v802
    %v807 = vmax.f32 %v799, %v803
    %v808 = vmax.f32 %v800, %v804
    %v809 = vmax.f32 %v801, %v805
    %s810 = sld [smem:[#allocation2 + $0x4d]]
    %v811 = vstv %s810
    %v812 = vmul.f32 %v811, %v786
    %v813 = vmul.f32 %v811, %v787
    %v814 = vmul.f32 %v811, %v788
    %v815 = vmul.f32 %v811, %v789
    %s816 = sld [smem:[#allocation2 + $0x52]]
    %v817 = vstv %s816
    %v818 = vadd.f32 %v812, %v817
    %v819 = vadd.f32 %v813, %v817
    %v820 = vadd.f32 %v814, %v817
    %v821 = vadd.f32 %v815, %v817
    %v822 = vmul.f32 %v818, 0.01
    %v823 = vmul.f32 %v819, 0.01
    %v824 = vmul.f32 %v820, 0.01
    %v825 = vmul.f32 %v821, 0.01
    %v826 = vmax.f32 %v818, %v822
    %v827 = vmax.f32 %v819, %v823
    %v828 = vmax.f32 %v820, %v824
    %v829 = vmax.f32 %v821, %v825
    %s830 = sld [smem:[#allocation2 + $0x4e]]
    %v831 = vstv %s830
    %v832 = vmul.f32 %v831, %v786
    %v833 = vmul.f32 %v831, %v787
    %v834 = vmul.f32 %v831, %v788
    %v835 = vmul.f32 %v831, %v789
    %s836 = sld [smem:[#allocation2 + $0x53]]
    %v837 = vstv %s836
    %v838 = vadd.f32 %v832, %v837
    %v839 = vadd.f32 %v833, %v837
    %v840 = vadd.f32 %v834, %v837
    %v841 = vadd.f32 %v835, %v837
    %v842 = vmul.f32 %v838, 0.01
    %v843 = vmul.f32 %v839, 0.01
    %v844 = vmul.f32 %v840, 0.01
    %v845 = vmul.f32 %v841, 0.01
    %v846 = vmax.f32 %v838, %v842
    %v847 = vmax.f32 %v839, %v843
    %v848 = vmax.f32 %v840, %v844
    %v849 = vmax.f32 %v841, %v845
    %s850 = sld [smem:[#allocation2 + $0x4f]]
    %v851 = vstv %s850
    %v852 = vmul.f32 %v851, %v786
    %v853 = vmul.f32 %v851, %v787
    %v854 = vmul.f32 %v851, %v788
    %v855 = vmul.f32 %v851, %v789
    %s856 = sld [smem:[#allocation2 + $0x54]]
    %v857 = vstv %s856
    %v858 = vadd.f32 %v852, %v857
    %v859 = vadd.f32 %v853, %v857
    %v860 = vadd.f32 %v854, %v857
    %v861 = vadd.f32 %v855, %v857
    %v862 = vmul.f32 %v858, 0.01
    %v863 = vmul.f32 %v859, 0.01
    %v864 = vmul.f32 %v860, 0.01
    %v865 = vmul.f32 %v861, 0.01
    %v866 = vmax.f32 %v858, %v862
    %v867 = vmax.f32 %v859, %v863
    %v868 = vmax.f32 %v860, %v864
    %v869 = vmax.f32 %v861, %v865
    %s870 = sld [smem:[#allocation2 + $0x50]]
    %v871 = vstv %s870
    %v872 = vmul.f32 %v871, %v786
    %v873 = vmul.f32 %v871, %v787
    %v874 = vmul.f32 %v871, %v788
    %v875 = vmul.f32 %v871, %v789
    %s876 = sld [smem:[#allocation2 + $0x55]]
    %v877 = vstv %s876
    %v878 = vadd.f32 %v872, %v877
    %v879 = vadd.f32 %v873, %v877
    %v880 = vadd.f32 %v874, %v877
    %v881 = vadd.f32 %v875, %v877
    %v882 = vmul.f32 %v878, 0.01
    %v883 = vmul.f32 %v879, 0.01
    %v884 = vmul.f32 %v880, 0.01
    %v885 = vmul.f32 %v881, 0.01
    %v886 = vmax.f32 %v878, %v882
    %v887 = vmax.f32 %v879, %v883
    %v888 = vmax.f32 %v880, %v884
    %v889 = vmax.f32 %v881, %v885
    %s890 = sld [smem:[#allocation2 + $0x56]]
    %v891 = vstv %s890
    %v892 = vmul.f32 %v891, %v806
    %v893 = vmul.f32 %v891, %v807
    %v894 = vmul.f32 %v891, %v808
    %v895 = vmul.f32 %v891, %v809
    %s896 = sld [smem:[#allocation2 + $0x57]]
    %v897 = vstv %s896
    %v898 = vmul.f32 %v897, %v826
    %v899 = vmul.f32 %v897, %v827
    %v900 = vmul.f32 %v897, %v828
    %v901 = vmul.f32 %v897, %v829
    %v902 = vadd.f32 %v892, %v898
    %v903 = vadd.f32 %v893, %v899
    %v904 = vadd.f32 %v894, %v900
    %v905 = vadd.f32 %v895, %v901
    %s906 = sld [smem:[#allocation2 + $0x58]]
    %v907 = vstv %s906
    %v908 = vmul.f32 %v907, %v846
    %v909 = vmul.f32 %v907, %v847
    %v910 = vmul.f32 %v907, %v848
    %v911 = vmul.f32 %v907, %v849
    %v912 = vadd.f32 %v902, %v908
    %v913 = vadd.f32 %v903, %v909
    %v914 = vadd.f32 %v904, %v910
    %v915 = vadd.f32 %v905, %v911
    %s916 = sld [smem:[#allocation2 + $0x59]]
    %v917 = vstv %s916
    %v918 = vmul.f32 %v917, %v866
    %v919 = vmul.f32 %v917, %v867
    %v920 = vmul.f32 %v917, %v868
    %v921 = vmul.f32 %v917, %v869
    %v922 = vadd.f32 %v912, %v918
    %v923 = vadd.f32 %v913, %v919
    %v924 = vadd.f32 %v914, %v920
    %v925 = vadd.f32 %v915, %v921
    %s926 = sld [smem:[#allocation2 + $0x5a]]
    %v927 = vstv %s926
    %v928 = vmul.f32 %v927, %v886
    %v929 = vmul.f32 %v927, %v887
    %v930 = vmul.f32 %v927, %v888
    %v931 = vmul.f32 %v927, %v889
    %v932 = vadd.f32 %v922, %v928
    %v933 = vadd.f32 %v923, %v929
    %v934 = vadd.f32 %v924, %v930
    %v935 = vadd.f32 %v925, %v931
    %s936 = sld [smem:[#allocation2 + $0x6f]]
    %v937 = vstv %s936
    %v938 = vadd.f32 %v932, %v937
    %v939 = vadd.f32 %v933, %v937
    %v940 = vadd.f32 %v934, %v937
    %v941 = vadd.f32 %v935, %v937
    %v942 = vmul.f32 %v938, 0.01
    %v943 = vmul.f32 %v939, 0.01
    %v944 = vmul.f32 %v940, 0.01
    %v945 = vmul.f32 %v941, 0.01
    %v946 = vmax.f32 %v938, %v942
    %v947 = vmax.f32 %v939, %v943
    %v948 = vmax.f32 %v940, %v944
    %v949 = vmax.f32 %v941, %v945
    %s950 = sld [smem:[#allocation2 + $0x5b]]
    %v951 = vstv %s950
    %v952 = vmul.f32 %v951, %v806
    %v953 = vmul.f32 %v951, %v807
    %v954 = vmul.f32 %v951, %v808
    %v955 = vmul.f32 %v951, %v809
    %s956 = sld [smem:[#allocation2 + $0x5c]]
    %v957 = vstv %s956
    %v958 = vmul.f32 %v957, %v826
    %v959 = vmul.f32 %v957, %v827
    %v960 = vmul.f32 %v957, %v828
    %v961 = vmul.f32 %v957, %v829
    %v962 = vadd.f32 %v952, %v958
    %v963 = vadd.f32 %v953, %v959
    %v964 = vadd.f32 %v954, %v960
    %v965 = vadd.f32 %v955, %v961
    %s966 = sld [smem:[#allocation2 + $0x5d]]
    %v967 = vstv %s966
    %v968 = vmul.f32 %v967, %v846
    %v969 = vmul.f32 %v967, %v847
    %v970 = vmul.f32 %v967, %v848
    %v971 = vmul.f32 %v967, %v849
    %v972 = vadd.f32 %v962, %v968
    %v973 = vadd.f32 %v963, %v969
    %v974 = vadd.f32 %v964, %v970
    %v975 = vadd.f32 %v965, %v971
    %s976 = sld [smem:[#allocation2 + $0x5e]]
    %v977 = vstv %s976
    %v978 = vmul.f32 %v977, %v866
    %v979 = vmul.f32 %v977, %v867
    %v980 = vmul.f32 %v977, %v868
    %v981 = vmul.f32 %v977, %v869
    %v982 = vadd.f32 %v972, %v978
    %v983 = vadd.f32 %v973, %v979
    %v984 = vadd.f32 %v974, %v980
    %v985 = vadd.f32 %v975, %v981
    %s986 = sld [smem:[#allocation2 + $0x5f]]
    %v987 = vstv %s986
    %v988 = vmul.f32 %v987, %v886
    %v989 = vmul.f32 %v987, %v887
    %v990 = vmul.f32 %v987, %v888
    %v991 = vmul.f32 %v987, %v889
    %v992 = vadd.f32 %v982, %v988
    %v993 = vadd.f32 %v983, %v989
    %v994 = vadd.f32 %v984, %v990
    %v995 = vadd.f32 %v985, %v991
    %s996 = sld [smem:[#allocation2 + $0x70]]
    %v997 = vstv %s996
    %v998 = vadd.f32 %v992, %v997
    %v999 = vadd.f32 %v993, %v997
    %v1000 = vadd.f32 %v994, %v997
    %v1001 = vadd.f32 %v995, %v997
    %v1002 = vmul.f32 %v998, 0.01
    %v1003 = vmul.f32 %v999, 0.01
    %v1004 = vmul.f32 %v1000, 0.01
    %v1005 = vmul.f32 %v1001, 0.01
    %v1006 = vmax.f32 %v998, %v1002
    %v1007 = vmax.f32 %v999, %v1003
    %v1008 = vmax.f32 %v1000, %v1004
    %v1009 = vmax.f32 %v1001, %v1005
    %s1010 = sld [smem:[#allocation2 + $0x60]]
    %v1011 = vstv %s1010
    %v1012 = vmul.f32 %v1011, %v806
    %v1013 = vmul.f32 %v1011, %v807
    %v1014 = vmul.f32 %v1011, %v808
    %v1015 = vmul.f32 %v1011, %v809
    %s1016 = sld [smem:[#allocation2 + $0x61]]
    %v1017 = vstv %s1016
    %v1018 = vmul.f32 %v1017, %v826
    %v1019 = vmul.f32 %v1017, %v827
    %v1020 = vmul.f32 %v1017, %v828
    %v1021 = vmul.f32 %v1017, %v829
    %v1022 = vadd.f32 %v1012, %v1018
    %v1023 = vadd.f32 %v1013, %v1019
    %v1024 = vadd.f32 %v1014, %v1020
    %v1025 = vadd.f32 %v1015, %v1021
    %s1026 = sld [smem:[#allocation2 + $0x62]]
    %v1027 = vstv %s1026
    %v1028 = vmul.f32 %v1027, %v846
    %v1029 = vmul.f32 %v1027, %v847
    %v1030 = vmul.f32 %v1027, %v848
    %v1031 = vmul.f32 %v1027, %v849
    %v1032 = vadd.f32 %v1022, %v1028
    %v1033 = vadd.f32 %v1023, %v1029
    %v1034 = vadd.f32 %v1024, %v1030
    %v1035 = vadd.f32 %v1025, %v1031
    %s1036 = sld [smem:[#allocation2 + $0x63]]
    %v1037 = vstv %s1036
    %v1038 = vmul.f32 %v1037, %v866
    %v1039 = vmul.f32 %v1037, %v867
    %v1040 = vmul.f32 %v1037, %v868
    %v1041 = vmul.f32 %v1037, %v869
    %v1042 = vadd.f32 %v1032, %v1038
    %v1043 = vadd.f32 %v1033, %v1039
    %v1044 = vadd.f32 %v1034, %v1040
    %v1045 = vadd.f32 %v1035, %v1041
    %s1046 = sld [smem:[#allocation2 + $0x64]]
    %v1047 = vstv %s1046
    %v1048 = vmul.f32 %v1047, %v886
    %v1049 = vmul.f32 %v1047, %v887
    %v1050 = vmul.f32 %v1047, %v888
    %v1051 = vmul.f32 %v1047, %v889
    %v1052 = vadd.f32 %v1042, %v1048
    %v1053 = vadd.f32 %v1043, %v1049
    %v1054 = vadd.f32 %v1044, %v1050
    %v1055 = vadd.f32 %v1045, %v1051
    %s1056 = sld [smem:[#allocation2 + $0x71]]
    %v1057 = vstv %s1056
    %v1058 = vadd.f32 %v1052, %v1057
    %v1059 = vadd.f32 %v1053, %v1057
    %v1060 = vadd.f32 %v1054, %v1057
    %v1061 = vadd.f32 %v1055, %v1057
    %v1062 = vmul.f32 %v1058, 0.01
    %v1063 = vmul.f32 %v1059, 0.01
    %v1064 = vmul.f32 %v1060, 0.01
    %v1065 = vmul.f32 %v1061, 0.01
    %v1066 = vmax.f32 %v1058, %v1062
    %v1067 = vmax.f32 %v1059, %v1063
    %v1068 = vmax.f32 %v1060, %v1064
    %v1069 = vmax.f32 %v1061, %v1065
    %s1070 = sld [smem:[#allocation2 + $0x65]]
    %v1071 = vstv %s1070
    %v1072 = vmul.f32 %v1071, %v806
    %v1073 = vmul.f32 %v1071, %v807
    %v1074 = vmul.f32 %v1071, %v808
    %v1075 = vmul.f32 %v1071, %v809
    %s1076 = sld [smem:[#allocation2 + $0x66]]
    %v1077 = vstv %s1076
    %v1078 = vmul.f32 %v1077, %v826
    %v1079 = vmul.f32 %v1077, %v827
    %v1080 = vmul.f32 %v1077, %v828
    %v1081 = vmul.f32 %v1077, %v829
    %v1082 = vadd.f32 %v1072, %v1078
    %v1083 = vadd.f32 %v1073, %v1079
    %v1084 = vadd.f32 %v1074, %v1080
    %v1085 = vadd.f32 %v1075, %v1081
    %s1086 = sld [smem:[#allocation2 + $0x67]]
    %v1087 = vstv %s1086
    %v1088 = vmul.f32 %v1087, %v846
    %v1089 = vmul.f32 %v1087, %v847
    %v1090 = vmul.f32 %v1087, %v848
    %v1091 = vmul.f32 %v1087, %v849
    %v1092 = vadd.f32 %v1082, %v1088
    %v1093 = vadd.f32 %v1083, %v1089
    %v1094 = vadd.f32 %v1084, %v1090
    %v1095 = vadd.f32 %v1085, %v1091
    %s1096 = sld [smem:[#allocation2 + $0x68]]
    %v1097 = vstv %s1096
    %v1098 = vmul.f32 %v1097, %v866
    %v1099 = vmul.f32 %v1097, %v867
    %v1100 = vmul.f32 %v1097, %v868
    %v1101 = vmul.f32 %v1097, %v869
    %v1102 = vadd.f32 %v1092, %v1098
    %v1103 = vadd.f32 %v1093, %v1099
    %v1104 = vadd.f32 %v1094, %v1100
    %v1105 = vadd.f32 %v1095, %v1101
    %s1106 = sld [smem:[#allocation2 + $0x69]]
    %v1107 = vstv %s1106
    %v1108 = vmul.f32 %v1107, %v886
    %v1109 = vmul.f32 %v1107, %v887
    %v1110 = vmul.f32 %v1107, %v888
    %v1111 = vmul.f32 %v1107, %v889
    %v1112 = vadd.f32 %v1102, %v1108
    %v1113 = vadd.f32 %v1103, %v1109
    %v1114 = vadd.f32 %v1104, %v1110
    %v1115 = vadd.f32 %v1105, %v1111
    %s1116 = sld [smem:[#allocation2 + $0x72]]
    %v1117 = vstv %s1116
    %v1118 = vadd.f32 %v1112, %v1117
    %v1119 = vadd.f32 %v1113, %v1117
    %v1120 = vadd.f32 %v1114, %v1117
    %v1121 = vadd.f32 %v1115, %v1117
    %v1122 = vmul.f32 %v1118, 0.01
    %v1123 = vmul.f32 %v1119, 0.01
    %v1124 = vmul.f32 %v1120, 0.01
    %v1125 = vmul.f32 %v1121, 0.01
    %v1126 = vmax.f32 %v1118, %v1122
    %v1127 = vmax.f32 %v1119, %v1123
    %v1128 = vmax.f32 %v1120, %v1124
    %v1129 = vmax.f32 %v1121, %v1125
    %s1130 = sld [smem:[#allocation2 + $0x6a]]
    %v1131 = vstv %s1130
    %v1132 = vmul.f32 %v1131, %v806
    %v1133 = vmul.f32 %v1131, %v807
    %v1134 = vmul.f32 %v1131, %v808
    %v1135 = vmul.f32 %v1131, %v809
    %s1136 = sld [smem:[#allocation2 + $0x6b]]
    %v1137 = vstv %s1136
    %v1138 = vmul.f32 %v1137, %v826
    %v1139 = vmul.f32 %v1137, %v827
    %v1140 = vmul.f32 %v1137, %v828
    %v1141 = vmul.f32 %v1137, %v829
    %v1142 = vadd.f32 %v1132, %v1138
    %v1143 = vadd.f32 %v1133, %v1139
    %v1144 = vadd.f32 %v1134, %v1140
    %v1145 = vadd.f32 %v1135, %v1141
    %s1146 = sld [smem:[#allocation2 + $0x6c]]
    %v1147 = vstv %s1146
    %v1148 = vmul.f32 %v1147, %v846
    %v1149 = vmul.f32 %v1147, %v847
    %v1150 = vmul.f32 %v1147, %v848
    %v1151 = vmul.f32 %v1147, %v849
    %v1152 = vadd.f32 %v1142, %v1148
    %v1153 = vadd.f32 %v1143, %v1149
    %v1154 = vadd.f32 %v1144, %v1150
    %v1155 = vadd.f32 %v1145, %v1151
    %s1156 = sld [smem:[#allocation2 + $0x6d]]
    %v1157 = vstv %s1156
    %v1158 = vmul.f32 %v1157, %v866
    %v1159 = vmul.f32 %v1157, %v867
    %v1160 = vmul.f32 %v1157, %v868
    %v1161 = vmul.f32 %v1157, %v869
    %v1162 = vadd.f32 %v1152, %v1158
    %v1163 = vadd.f32 %v1153, %v1159
    %v1164 = vadd.f32 %v1154, %v1160
    %v1165 = vadd.f32 %v1155, %v1161
    %s1166 = sld [smem:[#allocation2 + $0x6e]]
    %v1167 = vstv %s1166
    %v1168 = vmul.f32 %v1167, %v886
    %v1169 = vmul.f32 %v1167, %v887
    %v1170 = vmul.f32 %v1167, %v888
    %v1171 = vmul.f32 %v1167, %v889
    %v1172 = vadd.f32 %v1162, %v1168
    %v1173 = vadd.f32 %v1163, %v1169
    %v1174 = vadd.f32 %v1164, %v1170
    %v1175 = vadd.f32 %v1165, %v1171
    %s1176 = sld [smem:[#allocation2 + $0x73]]
    %v1177 = vstv %s1176
    %v1178 = vadd.f32 %v1172, %v1177
    %v1179 = vadd.f32 %v1173, %v1177
    %v1180 = vadd.f32 %v1174, %v1177
    %v1181 = vadd.f32 %v1175, %v1177
    %v1182 = vmul.f32 %v1178, 0.01
    %v1183 = vmul.f32 %v1179, 0.01
    %v1184 = vmul.f32 %v1180, 0.01
    %v1185 = vmul.f32 %v1181, 0.01
    %v1186 = vmax.f32 %v1178, %v1182
    %v1187 = vmax.f32 %v1179, %v1183
    %v1188 = vmax.f32 %v1180, %v1184
    %v1189 = vmax.f32 %v1181, %v1185
    %s1190 = sld [smem:[#allocation2 + $0x74]]
    %v1191 = vstv %s1190
    %v1192 = vmul.f32 %v1191, %v946
    %v1193 = vmul.f32 %v1191, %v947
    %v1194 = vmul.f32 %v1191, %v948
    %v1195 = vmul.f32 %v1191, %v949
    %s1196 = sld [smem:[#allocation2 + $0x75]]
    %v1197 = vstv %s1196
    %v1198 = vmul.f32 %v1197, %v1006
    %v1199 = vmul.f32 %v1197, %v1007
    %v1200 = vmul.f32 %v1197, %v1008
    %v1201 = vmul.f32 %v1197, %v1009
    %v1202 = vadd.f32 %v1192, %v1198
    %v1203 = vadd.f32 %v1193, %v1199
    %v1204 = vadd.f32 %v1194, %v1200
    %v1205 = vadd.f32 %v1195, %v1201
    %s1206 = sld [smem:[#allocation2 + $0x76]]
    %v1207 = vstv %s1206
    %v1208 = vmul.f32 %v1207, %v1066
    %v1209 = vmul.f32 %v1207, %v1067
    %v1210 = vmul.f32 %v1207, %v1068
    %v1211 = vmul.f32 %v1207, %v1069
    %v1212 = vadd.f32 %v1202, %v1208
    %v1213 = vadd.f32 %v1203, %v1209
    %v1214 = vadd.f32 %v1204, %v1210
    %v1215 = vadd.f32 %v1205, %v1211
    %s1216 = sld [smem:[#allocation2 + $0x77]]
    %v1217 = vstv %s1216
    %v1218 = vmul.f32 %v1217, %v1126
    %v1219 = vmul.f32 %v1217, %v1127
    %v1220 = vmul.f32 %v1217, %v1128
    %v1221 = vmul.f32 %v1217, %v1129
    %v1222 = vadd.f32 %v1212, %v1218
    %v1223 = vadd.f32 %v1213, %v1219
    %v1224 = vadd.f32 %v1214, %v1220
    %v1225 = vadd.f32 %v1215, %v1221
    %s1226 = sld [smem:[#allocation2 + $0x78]]
    %v1227 = vstv %s1226
    %v1228 = vmul.f32 %v1227, %v1186
    %v1229 = vmul.f32 %v1227, %v1187
    %v1230 = vmul.f32 %v1227, %v1188
    %v1231 = vmul.f32 %v1227, %v1189
    %v1232 = vadd.f32 %v1222, %v1228
    %v1233 = vadd.f32 %v1223, %v1229
    %v1234 = vadd.f32 %v1224, %v1230
    %v1235 = vadd.f32 %v1225, %v1231
    %s1236 = sld [smem:[#allocation2 + $0x8d]]
    %v1237 = vstv %s1236
    %v1238 = vadd.f32 %v1232, %v1237
    %v1239 = vadd.f32 %v1233, %v1237
    %v1240 = vadd.f32 %v1234, %v1237
    %v1241 = vadd.f32 %v1235, %v1237
    %v1242 = vmul.f32 %v1238, 0.01
    %v1243 = vmul.f32 %v1239, 0.01
    %v1244 = vmul.f32 %v1240, 0.01
    %v1245 = vmul.f32 %v1241, 0.01
    %v1246 = vmax.f32 %v1238, %v1242
    %v1247 = vmax.f32 %v1239, %v1243
    %v1248 = vmax.f32 %v1240, %v1244
    %v1249 = vmax.f32 %v1241, %v1245
    %s1250 = sld [smem:[#allocation2 + $0x79]]
    %v1251 = vstv %s1250
    %v1252 = vmul.f32 %v1251, %v946
    %v1253 = vmul.f32 %v1251, %v947
    %v1254 = vmul.f32 %v1251, %v948
    %v1255 = vmul.f32 %v1251, %v949
    %s1256 = sld [smem:[#allocation2 + $0x7a]]
    %v1257 = vstv %s1256
    %v1258 = vmul.f32 %v1257, %v1006
    %v1259 = vmul.f32 %v1257, %v1007
    %v1260 = vmul.f32 %v1257, %v1008
    %v1261 = vmul.f32 %v1257, %v1009
    %v1262 = vadd.f32 %v1252, %v1258
    %v1263 = vadd.f32 %v1253, %v1259
    %v1264 = vadd.f32 %v1254, %v1260
    %v1265 = vadd.f32 %v1255, %v1261
    %s1266 = sld [smem:[#allocation2 + $0x7b]]
    %v1267 = vstv %s1266
    %v1268 = vmul.f32 %v1267, %v1066
    %v1269 = vmul.f32 %v1267, %v1067
    %v1270 = vmul.f32 %v1267, %v1068
    %v1271 = vmul.f32 %v1267, %v1069
    %v1272 = vadd.f32 %v1262, %v1268
    %v1273 = vadd.f32 %v1263, %v1269
    %v1274 = vadd.f32 %v1264, %v1270
    %v1275 = vadd.f32 %v1265, %v1271
    %s1276 = sld [smem:[#allocation2 + $0x7c]]
    %v1277 = vstv %s1276
    %v1278 = vmul.f32 %v1277, %v1126
    %v1279 = vmul.f32 %v1277, %v1127
    %v1280 = vmul.f32 %v1277, %v1128
    %v1281 = vmul.f32 %v1277, %v1129
    %v1282 = vadd.f32 %v1272, %v1278
    %v1283 = vadd.f32 %v1273, %v1279
    %v1284 = vadd.f32 %v1274, %v1280
    %v1285 = vadd.f32 %v1275, %v1281
    %s1286 = sld [smem:[#allocation2 + $0x7d]]
    %v1287 = vstv %s1286
    %v1288 = vmul.f32 %v1287, %v1186
    %v1289 = vmul.f32 %v1287, %v1187
    %v1290 = vmul.f32 %v1287, %v1188
    %v1291 = vmul.f32 %v1287, %v1189
    %v1292 = vadd.f32 %v1282, %v1288
    %v1293 = vadd.f32 %v1283, %v1289
    %v1294 = vadd.f32 %v1284, %v1290
    %v1295 = vadd.f32 %v1285, %v1291
    %s1296 = sld [smem:[#allocation2 + $0x8e]]
    %v1297 = vstv %s1296
    %v1298 = vadd.f32 %v1292, %v1297
    %v1299 = vadd.f32 %v1293, %v1297
    %v1300 = vadd.f32 %v1294, %v1297
    %v1301 = vadd.f32 %v1295, %v1297
    %v1302 = vmul.f32 %v1298, 0.01
    %v1303 = vmul.f32 %v1299, 0.01
    %v1304 = vmul.f32 %v1300, 0.01
    %v1305 = vmul.f32 %v1301, 0.01
    %v1306 = vmax.f32 %v1298, %v1302
    %v1307 = vmax.f32 %v1299, %v1303
    %v1308 = vmax.f32 %v1300, %v1304
    %v1309 = vmax.f32 %v1301, %v1305
    %s1310 = sld [smem:[#allocation2 + $0x7e]]
    %v1311 = vstv %s1310
    %v1312 = vmul.f32 %v1311, %v946
    %v1313 = vmul.f32 %v1311, %v947
    %v1314 = vmul.f32 %v1311, %v948
    %v1315 = vmul.f32 %v1311, %v949
    %s1316 = sld [smem:[#allocation2 + $0x7f]]
    %v1317 = vstv %s1316
    %v1318 = vmul.f32 %v1317, %v1006
    %v1319 = vmul.f32 %v1317, %v1007
    %v1320 = vmul.f32 %v1317, %v1008
    %v1321 = vmul.f32 %v1317, %v1009
    %v1322 = vadd.f32 %v1312, %v1318
    %v1323 = vadd.f32 %v1313, %v1319
    %v1324 = vadd.f32 %v1314, %v1320
    %v1325 = vadd.f32 %v1315, %v1321
    %s1326 = sld [smem:[#allocation2 + $0x80]]
    %v1327 = vstv %s1326
    %v1328 = vmul.f32 %v1327, %v1066
    %v1329 = vmul.f32 %v1327, %v1067
    %v1330 = vmul.f32 %v1327, %v1068
    %v1331 = vmul.f32 %v1327, %v1069
    %v1332 = vadd.f32 %v1322, %v1328
    %v1333 = vadd.f32 %v1323, %v1329
    %v1334 = vadd.f32 %v1324, %v1330
    %v1335 = vadd.f32 %v1325, %v1331
    %s1336 = sld [smem:[#allocation2 + $0x81]]
    %v1337 = vstv %s1336
    %v1338 = vmul.f32 %v1337, %v1126
    %v1339 = vmul.f32 %v1337, %v1127
    %v1340 = vmul.f32 %v1337, %v1128
    %v1341 = vmul.f32 %v1337, %v1129
    %v1342 = vadd.f32 %v1332, %v1338
    %v1343 = vadd.f32 %v1333, %v1339
    %v1344 = vadd.f32 %v1334, %v1340
    %v1345 = vadd.f32 %v1335, %v1341
    %s1346 = sld [smem:[#allocation2 + $0x82]]
    %v1347 = vstv %s1346
    %v1348 = vmul.f32 %v1347, %v1186
    %v1349 = vmul.f32 %v1347, %v1187
    %v1350 = vmul.f32 %v1347, %v1188
    %v1351 = vmul.f32 %v1347, %v1189
    %v1352 = vadd.f32 %v1342, %v1348
    %v1353 = vadd.f32 %v1343, %v1349
    %v1354 = vadd.f32 %v1344, %v1350
    %v1355 = vadd.f32 %v1345, %v1351
    %s1356 = sld [smem:[#allocation2 + $0x8f]]
    %v1357 = vstv %s1356
    %v1358 = vadd.f32 %v1352, %v1357
    %v1359 = vadd.f32 %v1353, %v1357
    %v1360 = vadd.f32 %v1354, %v1357
    %v1361 = vadd.f32 %v1355, %v1357
    %v1362 = vmul.f32 %v1358, 0.01
    %v1363 = vmul.f32 %v1359, 0.01
    %v1364 = vmul.f32 %v1360, 0.01
    %v1365 = vmul.f32 %v1361, 0.01
    %v1366 = vmax.f32 %v1358, %v1362
    %v1367 = vmax.f32 %v1359, %v1363
    %v1368 = vmax.f32 %v1360, %v1364
    %v1369 = vmax.f32 %v1361, %v1365
    %s1370 = sld [smem:[#allocation2 + $0x83]]
    %v1371 = vstv %s1370
    %v1372 = vmul.f32 %v1371, %v946
    %v1373 = vmul.f32 %v1371, %v947
    %v1374 = vmul.f32 %v1371, %v948
    %v1375 = vmul.f32 %v1371, %v949
    %s1376 = sld [smem:[#allocation2 + $0x84]]
    %v1377 = vstv %s1376
    %v1378 = vmul.f32 %v1377, %v1006
    %v1379 = vmul.f32 %v1377, %v1007
    %v1380 = vmul.f32 %v1377, %v1008
    %v1381 = vmul.f32 %v1377, %v1009
    %v1382 = vadd.f32 %v1372, %v1378
    %v1383 = vadd.f32 %v1373, %v1379
    %v1384 = vadd.f32 %v1374, %v1380
    %v1385 = vadd.f32 %v1375, %v1381
    %s1386 = sld [smem:[#allocation2 + $0x85]]
    %v1387 = vstv %s1386
    %v1388 = vmul.f32 %v1387, %v1066
    %v1389 = vmul.f32 %v1387, %v1067
    %v1390 = vmul.f32 %v1387, %v1068
    %v1391 = vmul.f32 %v1387, %v1069
    %v1392 = vadd.f32 %v1382, %v1388
    %v1393 = vadd.f32 %v1383, %v1389
    %v1394 = vadd.f32 %v1384, %v1390
    %v1395 = vadd.f32 %v1385, %v1391
    %s1396 = sld [smem:[#allocation2 + $0x86]]
    %v1397 = vstv %s1396
    %v1398 = vmul.f32 %v1397, %v1126
    %v1399 = vmul.f32 %v1397, %v1127
    %v1400 = vmul.f32 %v1397, %v1128
    %v1401 = vmul.f32 %v1397, %v1129
    %v1402 = vadd.f32 %v1392, %v1398
    %v1403 = vadd.f32 %v1393, %v1399
    %v1404 = vadd.f32 %v1394, %v1400
    %v1405 = vadd.f32 %v1395, %v1401
    %s1406 = sld [smem:[#allocation2 + $0x87]]
    %v1407 = vstv %s1406
    %v1408 = vmul.f32 %v1407, %v1186
    %v1409 = vmul.f32 %v1407, %v1187
    %v1410 = vmul.f32 %v1407, %v1188
    %v1411 = vmul.f32 %v1407, %v1189
    %v1412 = vadd.f32 %v1402, %v1408
    %v1413 = vadd.f32 %v1403, %v1409
    %v1414 = vadd.f32 %v1404, %v1410
    %v1415 = vadd.f32 %v1405, %v1411
    %s1416 = sld [smem:[#allocation2 + $0x90]]
    %v1417 = vstv %s1416
    %v1418 = vadd.f32 %v1412, %v1417
    %v1419 = vadd.f32 %v1413, %v1417
    %v1420 = vadd.f32 %v1414, %v1417
    %v1421 = vadd.f32 %v1415, %v1417
    %v1422 = vmul.f32 %v1418, 0.01
    %v1423 = vmul.f32 %v1419, 0.01
    %v1424 = vmul.f32 %v1420, 0.01
    %v1425 = vmul.f32 %v1421, 0.01
    %v1426 = vmax.f32 %v1418, %v1422
    %v1427 = vmax.f32 %v1419, %v1423
    %v1428 = vmax.f32 %v1420, %v1424
    %v1429 = vmax.f32 %v1421, %v1425
    %s1430 = sld [smem:[#allocation2 + $0x88]]
    %v1431 = vstv %s1430
    %v1432 = vmul.f32 %v1431, %v946
    %v1433 = vmul.f32 %v1431, %v947
    %v1434 = vmul.f32 %v1431, %v948
    %v1435 = vmul.f32 %v1431, %v949
    %s1436 = sld [smem:[#allocation2 + $0x89]]
    %v1437 = vstv %s1436
    %v1438 = vmul.f32 %v1437, %v1006
    %v1439 = vmul.f32 %v1437, %v1007
    %v1440 = vmul.f32 %v1437, %v1008
    %v1441 = vmul.f32 %v1437, %v1009
    %v1442 = vadd.f32 %v1432, %v1438
    %v1443 = vadd.f32 %v1433, %v1439
    %v1444 = vadd.f32 %v1434, %v1440
    %v1445 = vadd.f32 %v1435, %v1441
    %s1446 = sld [smem:[#allocation2 + $0x8a]]
    %v1447 = vstv %s1446
    %v1448 = vmul.f32 %v1447, %v1066
    %v1449 = vmul.f32 %v1447, %v1067
    %v1450 = vmul.f32 %v1447, %v1068
    %v1451 = vmul.f32 %v1447, %v1069
    %v1452 = vadd.f32 %v1442, %v1448
    %v1453 = vadd.f32 %v1443, %v1449
    %v1454 = vadd.f32 %v1444, %v1450
    %v1455 = vadd.f32 %v1445, %v1451
    %s1456 = sld [smem:[#allocation2 + $0x8b]]
    %v1457 = vstv %s1456
    %v1458 = vmul.f32 %v1457, %v1126
    %v1459 = vmul.f32 %v1457, %v1127
    %v1460 = vmul.f32 %v1457, %v1128
    %v1461 = vmul.f32 %v1457, %v1129
    %v1462 = vadd.f32 %v1452, %v1458
    %v1463 = vadd.f32 %v1453, %v1459
    %v1464 = vadd.f32 %v1454, %v1460
    %v1465 = vadd.f32 %v1455, %v1461
    %s1466 = sld [smem:[#allocation2 + $0x8c]]
    %v1467 = vstv %s1466
    %v1468 = vmul.f32 %v1467, %v1186
    %v1469 = vmul.f32 %v1467, %v1187
    %v1470 = vmul.f32 %v1467, %v1188
    %v1471 = vmul.f32 %v1467, %v1189
    %v1472 = vadd.f32 %v1462, %v1468
    %v1473 = vadd.f32 %v1463, %v1469
    %v1474 = vadd.f32 %v1464, %v1470
    %v1475 = vadd.f32 %v1465, %v1471
    %s1476 = sld [smem:[#allocation2 + $0x91]]
    %v1477 = vstv %s1476
    %v1478 = vadd.f32 %v1472, %v1477
    %v1479 = vadd.f32 %v1473, %v1477
    %v1480 = vadd.f32 %v1474, %v1477
    %v1481 = vadd.f32 %v1475, %v1477
    %v1482 = vmul.f32 %v1478, 0.01
    %v1483 = vmul.f32 %v1479, 0.01
    %v1484 = vmul.f32 %v1480, 0.01
    %v1485 = vmul.f32 %v1481, 0.01
    %v1486 = vmax.f32 %v1478, %v1482
    %v1487 = vmax.f32 %v1479, %v1483
    %v1488 = vmax.f32 %v1480, %v1484
    %v1489 = vmax.f32 %v1481, %v1485
    %s1490 = sld [smem:[#allocation2 + $0x92]]
    %v1491 = vstv %s1490
    %v1492 = vmul.f32 %v1491, %v1246
    %v1493 = vmul.f32 %v1491, %v1247
    %v1494 = vmul.f32 %v1491, %v1248
    %v1495 = vmul.f32 %v1491, %v1249
    %s1496 = sld [smem:[#allocation2 + $0x93]]
    %v1497 = vstv %s1496
    %v1498 = vmul.f32 %v1497, %v1306
    %v1499 = vmul.f32 %v1497, %v1307
    %v1500 = vmul.f32 %v1497, %v1308
    %v1501 = vmul.f32 %v1497, %v1309
    %v1502 = vadd.f32 %v1492, %v1498
    %v1503 = vadd.f32 %v1493, %v1499
    %v1504 = vadd.f32 %v1494, %v1500
    %v1505 = vadd.f32 %v1495, %v1501
    %s1506 = sld [smem:[#allocation2 + $0x94]]
    %v1507 = vstv %s1506
    %v1508 = vmul.f32 %v1507, %v1366
    %v1509 = vmul.f32 %v1507, %v1367
    %v1510 = vmul.f32 %v1507, %v1368
    %v1511 = vmul.f32 %v1507, %v1369
    %v1512 = vadd.f32 %v1502, %v1508
    %v1513 = vadd.f32 %v1503, %v1509
    %v1514 = vadd.f32 %v1504, %v1510
    %v1515 = vadd.f32 %v1505, %v1511
    %s1516 = sld [smem:[#allocation2 + $0x95]]
    %v1517 = vstv %s1516
    %v1518 = vmul.f32 %v1517, %v1426
    %v1519 = vmul.f32 %v1517, %v1427
    %v1520 = vmul.f32 %v1517, %v1428
    %v1521 = vmul.f32 %v1517, %v1429
    %v1522 = vadd.f32 %v1512, %v1518
    %v1523 = vadd.f32 %v1513, %v1519
    %v1524 = vadd.f32 %v1514, %v1520
    %v1525 = vadd.f32 %v1515, %v1521
    %s1526 = sld [smem:[#allocation2 + $0x96]]
    %v1527 = vstv %s1526
    %v1528 = vmul.f32 %v1527, %v1486
    %v1529 = vmul.f32 %v1527, %v1487
    %v1530 = vmul.f32 %v1527, %v1488
    %v1531 = vmul.f32 %v1527, %v1489
    %v1532 = vadd.f32 %v1522, %v1528
    %v1533 = vadd.f32 %v1523, %v1529
    %v1534 = vadd.f32 %v1524, %v1530
    %v1535 = vadd.f32 %v1525, %v1531
    %s1536 = sld [smem:[#allocation2 + $0x97]]
    %v1537 = vstv %s1536
    %v1538 = vadd.f32 %v1532, %v1537
    %v1539 = vadd.f32 %v1533, %v1537
    %v1540 = vadd.f32 %v1534, %v1537
    %v1541 = vadd.f32 %v1535, %v1537
    %s1542 = scalar_lea.vmem %s2, %s784
    %1543 = vst [vmem:[%s1542] sm:$0xff] %v1538
    %1544 = vst [vmem:[%s1542 + $0x8] sm:$0xff] %v1539
    %1545 = vst [vmem:[%s1542 + $0x10] sm:$0xff] %v1540
    %1546 = vst [vmem:[%s1542 + $0x18] sm:$0xff] %v1541
    %s1547 = sadd.s32 0, 64
    %s1548 = scalar_lea.vmem %s1, %s1547
    %v1549 = vld [vmem:[%s1548] sm:$0xff]
    %v1550 = vld [vmem:[%s1548 + $0x8] sm:$0xff]
    %v1551 = vld [vmem:[%s1548 + $0x10] sm:$0xff]
    %v1552 = vld [vmem:[%s1548 + $0x18] sm:$0xff]
    %s1553 = sld [smem:[#allocation2 + $0x98]]
    %v1554 = vstv %s1553
    %v1555 = vmul.f32 %v1554, %v1549
    %v1556 = vmul.f32 %v1554, %v1550
    %v1557 = vmul.f32 %v1554, %v1551
    %v1558 = vmul.f32 %v1554, %v1552
    %s1559 = sld [smem:[#allocation2 + $0x9d]]
    %v1560 = vstv %s1559
    %v1561 = vadd.f32 %v1555, %v1560
    %v1562 = vadd.f32 %v1556, %v1560
    %v1563 = vadd.f32 %v1557, %v1560
    %v1564 = vadd.f32 %v1558, %v1560
    %v1565 = vmul.f32 %v1561, 0.01
    %v1566 = vmul.f32 %v1562, 0.01
    %v1567 = vmul.f32 %v1563, 0.01
    %v1568 = vmul.f32 %v1564, 0.01
    %v1569 = vmax.f32 %v1561, %v1565
    %v1570 = vmax.f32 %v1562, %v1566
    %v1571 = vmax.f32 %v1563, %v1567
    %v1572 = vmax.f32 %v1564, %v1568
    %s1573 = sld [smem:[#allocation2 + $0x99]]
    %v1574 = vstv %s1573
    %v1575 = vmul.f32 %v1574, %v1549
    %v1576 = vmul.f32 %v1574, %v1550
    %v1577 = vmul.f32 %v1574, %v1551
    %v1578 = vmul.f32 %v1574, %v1552
    %s1579 = sld [smem:[#allocation2 + $0x9e]]
    %v1580 = vstv %s1579
    %v1581 = vadd.f32 %v1575, %v1580
    %v1582 = vadd.f32 %v1576, %v1580
    %v1583 = vadd.f32 %v1577, %v1580
    %v1584 = vadd.f32 %v1578, %v1580
    %v1585 = vmul.f32 %v1581, 0.01
    %v1586 = vmul.f32 %v1582, 0.01
    %v1587 = vmul.f32 %v1583, 0.01
    %v1588 = vmul.f32 %v1584, 0.01
    %v1589 = vmax.f32 %v1581, %v1585
    %v1590 = vmax.f32 %v1582, %v1586
    %v1591 = vmax.f32 %v1583, %v1587
    %v1592 = vmax.f32 %v1584, %v1588
    %s1593 = sld [smem:[#allocation2 + $0x9a]]
    %v1594 = vstv %s1593
    %v1595 = vmul.f32 %v1594, %v1549
    %v1596 = vmul.f32 %v1594, %v1550
    %v1597 = vmul.f32 %v1594, %v1551
    %v1598 = vmul.f32 %v1594, %v1552
    %s1599 = sld [smem:[#allocation2 + $0x9f]]
    %v1600 = vstv %s1599
    %v1601 = vadd.f32 %v1595, %v1600
    %v1602 = vadd.f32 %v1596, %v1600
    %v1603 = vadd.f32 %v1597, %v1600
    %v1604 = vadd.f32 %v1598, %v1600
    %v1605 = vmul.f32 %v1601, 0.01
    %v1606 = vmul.f32 %v1602, 0.01
    %v1607 = vmul.f32 %v1603, 0.01
    %v1608 = vmul.f32 %v1604, 0.01
    %v1609 = vmax.f32 %v1601, %v1605
    %v1610 = vmax.f32 %v1602, %v1606
    %v1611 = vmax.f32 %v1603, %v1607
    %v1612 = vmax.f32 %v1604, %v1608
    %s1613 = sld [smem:[#allocation2 + $0x9b]]
    %v1614 = vstv %s1613
    %v1615 = vmul.f32 %v1614, %v1549
    %v1616 = vmul.f32 %v1614, %v1550
    %v1617 = vmul.f32 %v1614, %v1551
    %v1618 = vmul.f32 %v1614, %v1552
    %s1619 = sld [smem:[#allocation2 + $0xa0]]
    %v1620 = vstv %s1619
    %v1621 = vadd.f32 %v1615, %v1620
    %v1622 = vadd.f32 %v1616, %v1620
    %v1623 = vadd.f32 %v1617, %v1620
    %v1624 = vadd.f32 %v1618, %v1620
    %v1625 = vmul.f32 %v1621, 0.01
    %v1626 = vmul.f32 %v1622, 0.01
    %v1627 = vmul.f32 %v1623, 0.01
    %v1628 = vmul.f32 %v1624, 0.01
    %v1629 = vmax.f32 %v1621, %v1625
    %v1630 = vmax.f32 %v1622, %v1626
    %v1631 = vmax.f32 %v1623, %v1627
    %v1632 = vmax.f32 %v1624, %v1628
    %s1633 = sld [smem:[#allocation2 + $0x9c]]
    %v1634 = vstv %s1633
    %v1635 = vmul.f32 %v1634, %v1549
    %v1636 = vmul.f32 %v1634, %v1550
    %v1637 = vmul.f32 %v1634, %v1551
    %v1638 = vmul.f32 %v1634, %v1552
    %s1639 = sld [smem:[#allocation2 + $0xa1]]
    %v1640 = vstv %s1639
    %v1641 = vadd.f32 %v1635, %v1640
    %v1642 = vadd.f32 %v1636, %v1640
    %v1643 = vadd.f32 %v1637, %v1640
    %v1644 = vadd.f32 %v1638, %v1640
    %v1645 = vmul.f32 %v1641, 0.01
    %v1646 = vmul.f32 %v1642, 0.01
    %v1647 = vmul.f32 %v1643, 0.01
    %v1648 = vmul.f32 %v1644, 0.01
    %v1649 = vmax.f32 %v1641, %v1645
    %v1650 = vmax.f32 %v1642, %v1646
    %v1651 = vmax.f32 %v1643, %v1647
    %v1652 = vmax.f32 %v1644, %v1648
    %s1653 = sld [smem:[#allocation2 + $0xa2]]
    %v1654 = vstv %s1653
    %v1655 = vmul.f32 %v1654, %v1569
    %v1656 = vmul.f32 %v1654, %v1570
    %v1657 = vmul.f32 %v1654, %v1571
    %v1658 = vmul.f32 %v1654, %v1572
    %s1659 = sld [smem:[#allocation2 + $0xa3]]
    %v1660 = vstv %s1659
    %v1661 = vmul.f32 %v1660, %v1589
    %v1662 = vmul.f32 %v1660, %v1590
    %v1663 = vmul.f32 %v1660, %v1591
    %v1664 = vmul.f32 %v1660, %v1592
    %v1665 = vadd.f32 %v1655, %v1661
    %v1666 = vadd.f32 %v1656, %v1662
    %v1667 = vadd.f32 %v1657, %v1663
    %v1668 = vadd.f32 %v1658, %v1664
    %s1669 = sld [smem:[#allocation2 + $0xa4]]
    %v1670 = vstv %s1669
    %v1671 = vmul.f32 %v1670, %v1609
    %v1672 = vmul.f32 %v1670, %v1610
    %v1673 = vmul.f32 %v1670, %v1611
    %v1674 = vmul.f32 %v1670, %v1612
    %v1675 = vadd.f32 %v1665, %v1671
    %v1676 = vadd.f32 %v1666, %v1672
    %v1677 = vadd.f32 %v1667, %v1673
    %v1678 = vadd.f32 %v1668, %v1674
    %s1679 = sld [smem:[#allocation2 + $0xa5]]
    %v1680 = vstv %s1679
    %v1681 = vmul.f32 %v1680, %v1629
    %v1682 = vmul.f32 %v1680, %v1630
    %v1683 = vmul.f32 %v1680, %v1631
    %v1684 = vmul.f32 %v1680, %v1632
    %v1685 = vadd.f32 %v1675, %v1681
    %v1686 = vadd.f32 %v1676, %v1682
    %v1687 = vadd.f32 %v1677, %v1683
    %v1688 = vadd.f32 %v1678, %v1684
    %s1689 = sld [smem:[#allocation2 + $0xa6]]
    %v1690 = vstv %s1689
    %v1691 = vmul.f32 %v1690, %v1649
    %v1692 = vmul.f32 %v1690, %v1650
    %v1693 = vmul.f32 %v1690, %v1651
    %v1694 = vmul.f32 %v1690, %v1652
    %v1695 = vadd.f32 %v1685, %v1691
    %v1696 = vadd.f32 %v1686, %v1692
    %v1697 = vadd.f32 %v1687, %v1693
    %v1698 = vadd.f32 %v1688, %v1694
    %s1699 = sld [smem:[#allocation2 + $0xbb]]
    %v1700 = vstv %s1699
    %v1701 = vadd.f32 %v1695, %v1700
    %v1702 = vadd.f32 %v1696, %v1700
    %v1703 = vadd.f32 %v1697, %v1700
    %v1704 = vadd.f32 %v1698, %v1700
    %v1705 = vmul.f32 %v1701, 0.01
    %v1706 = vmul.f32 %v1702, 0.01
    %v1707 = vmul.f32 %v1703, 0.01
    %v1708 = vmul.f32 %v1704, 0.01
    %v1709 = vmax.f32 %v1701, %v1705
    %v1710 = vmax.f32 %v1702, %v1706
    %v1711 = vmax.f32 %v1703, %v1707
    %v1712 = vmax.f32 %v1704, %v1708
    %s1713 = sld [smem:[#allocation2 + $0xa7]]
    %v1714 = vstv %s1713
    %v1715 = vmul.f32 %v1714, %v1569
    %v1716 = vmul.f32 %v1714, %v1570
    %v1717 = vmul.f32 %v1714, %v1571
    %v1718 = vmul.f32 %v1714, %v1572
    %s1719 = sld [smem:[#allocation2 + $0xa8]]
    %v1720 = vstv %s1719
    %v1721 = vmul.f32 %v1720, %v1589
    %v1722 = vmul.f32 %v1720, %v1590
    %v1723 = vmul.f32 %v1720, %v1591
    %v1724 = vmul.f32 %v1720, %v1592
    %v1725 = vadd.f32 %v1715, %v1721
    %v1726 = vadd.f32 %v1716, %v1722
    %v1727 = vadd.f32 %v1717, %v1723
    %v1728 = vadd.f32 %v1718, %v1724
    %s1729 = sld [smem:[#allocation2 + $0xa9]]
    %v1730 = vstv %s1729
    %v1731 = vmul.f32 %v1730, %v1609
    %v1732 = vmul.f32 %v1730, %v1610
    %v1733 = vmul.f32 %v1730, %v1611
    %v1734 = vmul.f32 %v1730, %v1612
    %v1735 = vadd.f32 %v1725, %v1731
    %v1736 = vadd.f32 %v1726, %v1732
    %v1737 = vadd.f32 %v1727, %v1733
    %v1738 = vadd.f32 %v1728, %v1734
    %s1739 = sld [smem:[#allocation2 + $0xaa]]
    %v1740 = vstv %s1739
    %v1741 = vmul.f32 %v1740, %v1629
    %v1742 = vmul.f32 %v1740, %v1630
    %v1743 = vmul.f32 %v1740, %v1631
    %v1744 = vmul.f32 %v1740, %v1632
    %v1745 = vadd.f32 %v1735, %v1741
    %v1746 = vadd.f32 %v1736, %v1742
    %v1747 = vadd.f32 %v1737, %v1743
    %v1748 = vadd.f32 %v1738, %v1744
    %s1749 = sld [smem:[#allocation2 + $0xab]]
    %v1750 = vstv %s1749
    %v1751 = vmul.f32 %v1750, %v1649
    %v1752 = vmul.f32 %v1750, %v1650
    %v1753 = vmul.f32 %v1750, %v1651
    %v1754 = vmul.f32 %v1750, %v1652
    %v1755 = vadd.f32 %v1745, %v1751
    %v1756 = vadd.f32 %v1746, %v1752
    %v1757 = vadd.f32 %v1747, %v1753
    %v1758 = vadd.f32 %v1748, %v1754
    %s1759 = sld [smem:[#allocation2 + $0xbc]]
    %v1760 = vstv %s1759
    %v1761 = vadd.f32 %v1755, %v1760
    %v1762 = vadd.f32 %v1756, %v1760
    %v1763 = vadd.f32 %v1757, %v1760
    %v1764 = vadd.f32 %v1758, %v1760
    %v1765 = vmul.f32 %v1761, 0.01
    %v1766 = vmul.f32 %v1762, 0.01
    %v1767 = vmul.f32 %v1763, 0.01
    %v1768 = vmul.f32 %v1764, 0.01
    %v1769 = vmax.f32 %v1761, %v1765
    %v1770 = vmax.f32 %v1762, %v1766
    %v1771 = vmax.f32 %v1763, %v1767
    %v1772 = vmax.f32 %v1764, %v1768
    %s1773 = sld [smem:[#allocation2 + $0xac]]
    %v1774 = vstv %s1773
    %v1775 = vmul.f32 %v1774, %v1569
    %v1776 = vmul.f32 %v1774, %v1570
    %v1777 = vmul.f32 %v1774, %v1571
    %v1778 = vmul.f32 %v1774, %v1572
    %s1779 = sld [smem:[#allocation2 + $0xad]]
    %v1780 = vstv %s1779
    %v1781 = vmul.f32 %v1780, %v1589
    %v1782 = vmul.f32 %v1780, %v1590
    %v1783 = vmul.f32 %v1780, %v1591
    %v1784 = vmul.f32 %v1780, %v1592
    %v1785 = vadd.f32 %v1775, %v1781
    %v1786 = vadd.f32 %v1776, %v1782
    %v1787 = vadd.f32 %v1777, %v1783
    %v1788 = vadd.f32 %v1778, %v1784
    %s1789 = sld [smem:[#allocation2 + $0xae]]
    %v1790 = vstv %s1789
    %v1791 = vmul.f32 %v1790, %v1609
    %v1792 = vmul.f32 %v1790, %v1610
    %v1793 = vmul.f32 %v1790, %v1611
    %v1794 = vmul.f32 %v1790, %v1612
    %v1795 = vadd.f32 %v1785, %v1791
    %v1796 = vadd.f32 %v1786, %v1792
    %v1797 = vadd.f32 %v1787, %v1793
    %v1798 = vadd.f32 %v1788, %v1794
    %s1799 = sld [smem:[#allocation2 + $0xaf]]
    %v1800 = vstv %s1799
    %v1801 = vmul.f32 %v1800, %v1629
    %v1802 = vmul.f32 %v1800, %v1630
    %v1803 = vmul.f32 %v1800, %v1631
    %v1804 = vmul.f32 %v1800, %v1632
    %v1805 = vadd.f32 %v1795, %v1801
    %v1806 = vadd.f32 %v1796, %v1802
    %v1807 = vadd.f32 %v1797, %v1803
    %v1808 = vadd.f32 %v1798, %v1804
    %s1809 = sld [smem:[#allocation2 + $0xb0]]
    %v1810 = vstv %s1809
    %v1811 = vmul.f32 %v1810, %v1649
    %v1812 = vmul.f32 %v1810, %v1650
    %v1813 = vmul.f32 %v1810, %v1651
    %v1814 = vmul.f32 %v1810, %v1652
    %v1815 = vadd.f32 %v1805, %v1811
    %v1816 = vadd.f32 %v1806, %v1812
    %v1817 = vadd.f32 %v1807, %v1813
    %v1818 = vadd.f32 %v1808, %v1814
    %s1819 = sld [smem:[#allocation2 + $0xbd]]
    %v1820 = vstv %s1819
    %v1821 = vadd.f32 %v1815, %v1820
    %v1822 = vadd.f32 %v1816, %v1820
    %v1823 = vadd.f32 %v1817, %v1820
    %v1824 = vadd.f32 %v1818, %v1820
    %v1825 = vmul.f32 %v1821, 0.01
    %v1826 = vmul.f32 %v1822, 0.01
    %v1827 = vmul.f32 %v1823, 0.01
    %v1828 = vmul.f32 %v1824, 0.01
    %v1829 = vmax.f32 %v1821, %v1825
    %v1830 = vmax.f32 %v1822, %v1826
    %v1831 = vmax.f32 %v1823, %v1827
    %v1832 = vmax.f32 %v1824, %v1828
    %s1833 = sld [smem:[#allocation2 + $0xb1]]
    %v1834 = vstv %s1833
    %v1835 = vmul.f32 %v1834, %v1569
    %v1836 = vmul.f32 %v1834, %v1570
    %v1837 = vmul.f32 %v1834, %v1571
    %v1838 = vmul.f32 %v1834, %v1572
    %s1839 = sld [smem:[#allocation2 + $0xb2]]
    %v1840 = vstv %s1839
    %v1841 = vmul.f32 %v1840, %v1589
    %v1842 = vmul.f32 %v1840, %v1590
    %v1843 = vmul.f32 %v1840, %v1591
    %v1844 = vmul.f32 %v1840, %v1592
    %v1845 = vadd.f32 %v1835, %v1841
    %v1846 = vadd.f32 %v1836, %v1842
    %v1847 = vadd.f32 %v1837, %v1843
    %v1848 = vadd.f32 %v1838, %v1844
    %s1849 = sld [smem:[#allocation2 + $0xb3]]
    %v1850 = vstv %s1849
    %v1851 = vmul.f32 %v1850, %v1609
    %v1852 = vmul.f32 %v1850, %v1610
    %v1853 = vmul.f32 %v1850, %v1611
    %v1854 = vmul.f32 %v1850, %v1612
    %v1855 = vadd.f32 %v1845, %v1851
    %v1856 = vadd.f32 %v1846, %v1852
    %v1857 = vadd.f32 %v1847, %v1853
    %v1858 = vadd.f32 %v1848, %v1854
    %s1859 = sld [smem:[#allocation2 + $0xb4]]
    %v1860 = vstv %s1859
    %v1861 = vmul.f32 %v1860, %v1629
    %v1862 = vmul.f32 %v1860, %v1630
    %v1863 = vmul.f32 %v1860, %v1631
    %v1864 = vmul.f32 %v1860, %v1632
    %v1865 = vadd.f32 %v1855, %v1861
    %v1866 = vadd.f32 %v1856, %v1862
    %v1867 = vadd.f32 %v1857, %v1863
    %v1868 = vadd.f32 %v1858, %v1864
    %s1869 = sld [smem:[#allocation2 + $0xb5]]
    %v1870 = vstv %s1869
    %v1871 = vmul.f32 %v1870, %v1649
    %v1872 = vmul.f32 %v1870, %v1650
    %v1873 = vmul.f32 %v1870, %v1651
    %v1874 = vmul.f32 %v1870, %v1652
    %v1875 = vadd.f32 %v1865, %v1871
    %v1876 = vadd.f32 %v1866, %v1872
    %v1877 = vadd.f32 %v1867, %v1873
    %v1878 = vadd.f32 %v1868, %v1874
    %s1879 = sld [smem:[#allocation2 + $0xbe]]
    %v1880 = vstv %s1879
    %v1881 = vadd.f32 %v1875, %v1880
    %v1882 = vadd.f32 %v1876, %v1880
    %v1883 = vadd.f32 %v1877, %v1880
    %v1884 = vadd.f32 %v1878, %v1880
    %v1885 = vmul.f32 %v1881, 0.01
    %v1886 = vmul.f32 %v1882, 0.01
    %v1887 = vmul.f32 %v1883, 0.01
    %v1888 = vmul.f32 %v1884, 0.01
    %v1889 = vmax.f32 %v1881, %v1885
    %v1890 = vmax.f32 %v1882, %v1886
    %v1891 = vmax.f32 %v1883, %v1887
    %v1892 = vmax.f32 %v1884, %v1888
    %s1893 = sld [smem:[#allocation2 + $0xb6]]
    %v1894 = vstv %s1893
    %v1895 = vmul.f32 %v1894, %v1569
    %v1896 = vmul.f32 %v1894, %v1570
    %v1897 = vmul.f32 %v1894, %v1571
    %v1898 = vmul.f32 %v1894, %v1572
    %s1899 = sld [smem:[#allocation2 + $0xb7]]
    %v1900 = vstv %s1899
    %v1901 = vmul.f32 %v1900, %v1589
    %v1902 = vmul.f32 %v1900, %v1590
    %v1903 = vmul.f32 %v1900, %v1591
    %v1904 = vmul.f32 %v1900, %v1592
    %v1905 = vadd.f32 %v1895, %v1901
    %v1906 = vadd.f32 %v1896, %v1902
    %v1907 = vadd.f32 %v1897, %v1903
    %v1908 = vadd.f32 %v1898, %v1904
    %s1909 = sld [smem:[#allocation2 + $0xb8]]
    %v1910 = vstv %s1909
    %v1911 = vmul.f32 %v1910, %v1609
    %v1912 = vmul.f32 %v1910, %v1610
    %v1913 = vmul.f32 %v1910, %v1611
    %v1914 = vmul.f32 %v1910, %v1612
    %v1915 = vadd.f32 %v1905, %v1911
    %v1916 = vadd.f32 %v1906, %v1912
    %v1917 = vadd.f32 %v1907, %v1913
    %v1918 = vadd.f32 %v1908, %v1914
    %s1919 = sld [smem:[#allocation2 + $0xb9]]
    %v1920 = vstv %s1919
    %v1921 = vmul.f32 %v1920, %v1629
    %v1922 = vmul.f32 %v1920, %v1630
    %v1923 = vmul.f32 %v1920, %v1631
    %v1924 = vmul.f32 %v1920, %v1632
    %v1925 = vadd.f32 %v1915, %v1921
    %v1926 = vadd.f32 %v1916, %v1922
    %v1927 = vadd.f32 %v1917, %v1923
    %v1928 = vadd.f32 %v1918, %v1924
    %s1929 = sld [smem:[#allocation2 + $0xba]]
    %v1930 = vstv %s1929
    %v1931 = vmul.f32 %v1930, %v1649
    %v1932 = vmul.f32 %v1930, %v1650
    %v1933 = vmul.f32 %v1930, %v1651
    %v1934 = vmul.f32 %v1930, %v1652
    %v1935 = vadd.f32 %v1925, %v1931
    %v1936 = vadd.f32 %v1926, %v1932
    %v1937 = vadd.f32 %v1927, %v1933
    %v1938 = vadd.f32 %v1928, %v1934
    %s1939 = sld [smem:[#allocation2 + $0xbf]]
    %v1940 = vstv %s1939
    %v1941 = vadd.f32 %v1935, %v1940
    %v1942 = vadd.f32 %v1936, %v1940
    %v1943 = vadd.f32 %v1937, %v1940
    %v1944 = vadd.f32 %v1938, %v1940
    %v1945 = vmul.f32 %v1941, 0.01
    %v1946 = vmul.f32 %v1942, 0.01
    %v1947 = vmul.f32 %v1943, 0.01
    %v1948 = vmul.f32 %v1944, 0.01
    %v1949 = vmax.f32 %v1941, %v1945
    %v1950 = vmax.f32 %v1942, %v1946
    %v1951 = vmax.f32 %v1943, %v1947
    %v1952 = vmax.f32 %v1944, %v1948
    %s1953 = sld [smem:[#allocation2 + $0xc0]]
    %v1954 = vstv %s1953
    %v1955 = vmul.f32 %v1954, %v1709
    %v1956 = vmul.f32 %v1954, %v1710
    %v1957 = vmul.f32 %v1954, %v1711
    %v1958 = vmul.f32 %v1954, %v1712
    %s1959 = sld [smem:[#allocation2 + $0xc1]]
    %v1960 = vstv %s1959
    %v1961 = vmul.f32 %v1960, %v1769
    %v1962 = vmul.f32 %v1960, %v1770
    %v1963 = vmul.f32 %v1960, %v1771
    %v1964 = vmul.f32 %v1960, %v1772
    %v1965 = vadd.f32 %v1955, %v1961
    %v1966 = vadd.f32 %v1956, %v1962
    %v1967 = vadd.f32 %v1957, %v1963
    %v1968 = vadd.f32 %v1958, %v1964
    %s1969 = sld [smem:[#allocation2 + $0xc2]]
    %v1970 = vstv %s1969
    %v1971 = vmul.f32 %v1970, %v1829
    %v1972 = vmul.f32 %v1970, %v1830
    %v1973 = vmul.f32 %v1970, %v1831
    %v1974 = vmul.f32 %v1970, %v1832
    %v1975 = vadd.f32 %v1965, %v1971
    %v1976 = vadd.f32 %v1966, %v1972
    %v1977 = vadd.f32 %v1967, %v1973
    %v1978 = vadd.f32 %v1968, %v1974
    %s1979 = sld [smem:[#allocation2 + $0xc3]]
    %v1980 = vstv %s1979
    %v1981 = vmul.f32 %v1980, %v1889
    %v1982 = vmul.f32 %v1980, %v1890
    %v1983 = vmul.f32 %v1980, %v1891
    %v1984 = vmul.f32 %v1980, %v1892
    %v1985 = vadd.f32 %v1975, %v1981
    %v1986 = vadd.f32 %v1976, %v1982
    %v1987 = vadd.f32 %v1977, %v1983
    %v1988 = vadd.f32 %v1978, %v1984
    %s1989 = sld [smem:[#allocation2 + $0xc4]]
    %v1990 = vstv %s1989
    %v1991 = vmul.f32 %v1990, %v1949
    %v1992 = vmul.f32 %v1990, %v1950
    %v1993 = vmul.f32 %v1990, %v1951
    %v1994 = vmul.f32 %v1990, %v1952
    %v1995 = vadd.f32 %v1985, %v1991
    %v1996 = vadd.f32 %v1986, %v1992
    %v1997 = vadd.f32 %v1987, %v1993
    %v1998 = vadd.f32 %v1988, %v1994
    %s1999 = sld [smem:[#allocation2 + $0xd9]]
    %v2000 = vstv %s1999
    %v2001 = vadd.f32 %v1995, %v2000
    %v2002 = vadd.f32 %v1996, %v2000
    %v2003 = vadd.f32 %v1997, %v2000
    %v2004 = vadd.f32 %v1998, %v2000
    %v2005 = vmul.f32 %v2001, 0.01
    %v2006 = vmul.f32 %v2002, 0.01
    %v2007 = vmul.f32 %v2003, 0.01
    %v2008 = vmul.f32 %v2004, 0.01
    %v2009 = vmax.f32 %v2001, %v2005
    %v2010 = vmax.f32 %v2002, %v2006
    %v2011 = vmax.f32 %v2003, %v2007
    %v2012 = vmax.f32 %v2004, %v2008
    %s2013 = sld [smem:[#allocation2 + $0xc5]]
    %v2014 = vstv %s2013
    %v2015 = vmul.f32 %v2014, %v1709
    %v2016 = vmul.f32 %v2014, %v1710
    %v2017 = vmul.f32 %v2014, %v1711
    %v2018 = vmul.f32 %v2014, %v1712
    %s2019 = sld [smem:[#allocation2 + $0xc6]]
    %v2020 = vstv %s2019
    %v2021 = vmul.f32 %v2020, %v1769
    %v2022 = vmul.f32 %v2020, %v1770
    %v2023 = vmul.f32 %v2020, %v1771
    %v2024 = vmul.f32 %v2020, %v1772
    %v2025 = vadd.f32 %v2015, %v2021
    %v2026 = vadd.f32 %v2016, %v2022
    %v2027 = vadd.f32 %v2017, %v2023
    %v2028 = vadd.f32 %v2018, %v2024
    %s2029 = sld [smem:[#allocation2 + $0xc7]]
    %v2030 = vstv %s2029
    %v2031 = vmul.f32 %v2030, %v1829
    %v2032 = vmul.f32 %v2030, %v1830
    %v2033 = vmul.f32 %v2030, %v1831
    %v2034 = vmul.f32 %v2030, %v1832
    %v2035 = vadd.f32 %v2025, %v2031
    %v2036 = vadd.f32 %v2026, %v2032
    %v2037 = vadd.f32 %v2027, %v2033
    %v2038 = vadd.f32 %v2028, %v2034
    %s2039 = sld [smem:[#allocation2 + $0xc8]]
    %v2040 = vstv %s2039
    %v2041 = vmul.f32 %v2040, %v1889
    %v2042 = vmul.f32 %v2040, %v1890
    %v2043 = vmul.f32 %v2040, %v1891
    %v2044 = vmul.f32 %v2040, %v1892
    %v2045 = vadd.f32 %v2035, %v2041
    %v2046 = vadd.f32 %v2036, %v2042
    %v2047 = vadd.f32 %v2037, %v2043
    %v2048 = vadd.f32 %v2038, %v2044
    %s2049 = sld [smem:[#allocation2 + $0xc9]]
    %v2050 = vstv %s2049
    %v2051 = vmul.f32 %v2050, %v1949
    %v2052 = vmul.f32 %v2050, %v1950
    %v2053 = vmul.f32 %v2050, %v1951
    %v2054 = vmul.f32 %v2050, %v1952
    %v2055 = vadd.f32 %v2045, %v2051
    %v2056 = vadd.f32 %v2046, %v2052
    %v2057 = vadd.f32 %v2047, %v2053
    %v2058 = vadd.f32 %v2048, %v2054
    %s2059 = sld [smem:[#allocation2 + $0xda]]
    %v2060 = vstv %s2059
    %v2061 = vadd.f32 %v2055, %v2060
    %v2062 = vadd.f32 %v2056, %v2060
    %v2063 = vadd.f32 %v2057, %v2060
    %v2064 = vadd.f32 %v2058, %v2060
    %v2065 = vmul.f32 %v2061, 0.01
    %v2066 = vmul.f32 %v2062, 0.01
    %v2067 = vmul.f32 %v2063, 0.01
    %v2068 = vmul.f32 %v2064, 0.01
    %v2069 = vmax.f32 %v2061, %v2065
    %v2070 = vmax.f32 %v2062, %v2066
    %v2071 = vmax.f32 %v2063, %v2067
    %v2072 = vmax.f32 %v2064, %v2068
    %s2073 = sld [smem:[#allocation2 + $0xca]]
    %v2074 = vstv %s2073
    %v2075 = vmul.f32 %v2074, %v1709
    %v2076 = vmul.f32 %v2074, %v1710
    %v2077 = vmul.f32 %v2074, %v1711
    %v2078 = vmul.f32 %v2074, %v1712
    %s2079 = sld [smem:[#allocation2 + $0xcb]]
    %v2080 = vstv %s2079
    %v2081 = vmul.f32 %v2080, %v1769
    %v2082 = vmul.f32 %v2080, %v1770
    %v2083 = vmul.f32 %v2080, %v1771
    %v2084 = vmul.f32 %v2080, %v1772
    %v2085 = vadd.f32 %v2075, %v2081
    %v2086 = vadd.f32 %v2076, %v2082
    %v2087 = vadd.f32 %v2077, %v2083
    %v2088 = vadd.f32 %v2078, %v2084
    %s2089 = sld [smem:[#allocation2 + $0xcc]]
    %v2090 = vstv %s2089
    %v2091 = vmul.f32 %v2090, %v1829
    %v2092 = vmul.f32 %v2090, %v1830
    %v2093 = vmul.f32 %v2090, %v1831
    %v2094 = vmul.f32 %v2090, %v1832
    %v2095 = vadd.f32 %v2085, %v2091
    %v2096 = vadd.f32 %v2086, %v2092
    %v2097 = vadd.f32 %v2087, %v2093
    %v2098 = vadd.f32 %v2088, %v2094
    %s2099 = sld [smem:[#allocation2 + $0xcd]]
    %v2100 = vstv %s2099
    %v2101 = vmul.f32 %v2100, %v1889
    %v2102 = vmul.f32 %v2100, %v1890
    %v2103 = vmul.f32 %v2100, %v1891
    %v2104 = vmul.f32 %v2100, %v1892
    %v2105 = vadd.f32 %v2095, %v2101
    %v2106 = vadd.f32 %v2096, %v2102
    %v2107 = vadd.f32 %v2097, %v2103
    %v2108 = vadd.f32 %v2098, %v2104
    %s2109 = sld [smem:[#allocation2 + $0xce]]
    %v2110 = vstv %s2109
    %v2111 = vmul.f32 %v2110, %v1949
    %v2112 = vmul.f32 %v2110, %v1950
    %v2113 = vmul.f32 %v2110, %v1951
    %v2114 = vmul.f32 %v2110, %v1952
    %v2115 = vadd.f32 %v2105, %v2111
    %v2116 = vadd.f32 %v2106, %v2112
    %v2117 = vadd.f32 %v2107, %v2113
    %v2118 = vadd.f32 %v2108, %v2114
    %s2119 = sld [smem:[#allocation2 + $0xdb]]
    %v2120 = vstv %s2119
    %v2121 = vadd.f32 %v2115, %v2120
    %v2122 = vadd.f32 %v2116, %v2120
    %v2123 = vadd.f32 %v2117, %v2120
    %v2124 = vadd.f32 %v2118, %v2120
    %v2125 = vmul.f32 %v2121, 0.01
    %v2126 = vmul.f32 %v2122, 0.01
    %v2127 = vmul.f32 %v2123, 0.01
    %v2128 = vmul.f32 %v2124, 0.01
    %v2129 = vmax.f32 %v2121, %v2125
    %v2130 = vmax.f32 %v2122, %v2126
    %v2131 = vmax.f32 %v2123, %v2127
    %v2132 = vmax.f32 %v2124, %v2128
    %s2133 = sld [smem:[#allocation2 + $0xcf]]
    %v2134 = vstv %s2133
    %v2135 = vmul.f32 %v2134, %v1709
    %v2136 = vmul.f32 %v2134, %v1710
    %v2137 = vmul.f32 %v2134, %v1711
    %v2138 = vmul.f32 %v2134, %v1712
    %s2139 = sld [smem:[#allocation2 + $0xd0]]
    %v2140 = vstv %s2139
    %v2141 = vmul.f32 %v2140, %v1769
    %v2142 = vmul.f32 %v2140, %v1770
    %v2143 = vmul.f32 %v2140, %v1771
    %v2144 = vmul.f32 %v2140, %v1772
    %v2145 = vadd.f32 %v2135, %v2141
    %v2146 = vadd.f32 %v2136, %v2142
    %v2147 = vadd.f32 %v2137, %v2143
    %v2148 = vadd.f32 %v2138, %v2144
    %s2149 = sld [smem:[#allocation2 + $0xd1]]
    %v2150 = vstv %s2149
    %v2151 = vmul.f32 %v2150, %v1829
    %v2152 = vmul.f32 %v2150, %v1830
    %v2153 = vmul.f32 %v2150, %v1831
    %v2154 = vmul.f32 %v2150, %v1832
    %v2155 = vadd.f32 %v2145, %v2151
    %v2156 = vadd.f32 %v2146, %v2152
    %v2157 = vadd.f32 %v2147, %v2153
    %v2158 = vadd.f32 %v2148, %v2154
    %s2159 = sld [smem:[#allocation2 + $0xd2]]
    %v2160 = vstv %s2159
    %v2161 = vmul.f32 %v2160, %v1889
    %v2162 = vmul.f32 %v2160, %v1890
    %v2163 = vmul.f32 %v2160, %v1891
    %v2164 = vmul.f32 %v2160, %v1892
    %v2165 = vadd.f32 %v2155, %v2161
    %v2166 = vadd.f32 %v2156, %v2162
    %v2167 = vadd.f32 %v2157, %v2163
    %v2168 = vadd.f32 %v2158, %v2164
    %s2169 = sld [smem:[#allocation2 + $0xd3]]
    %v2170 = vstv %s2169
    %v2171 = vmul.f32 %v2170, %v1949
    %v2172 = vmul.f32 %v2170, %v1950
    %v2173 = vmul.f32 %v2170, %v1951
    %v2174 = vmul.f32 %v2170, %v1952
    %v2175 = vadd.f32 %v2165, %v2171
    %v2176 = vadd.f32 %v2166, %v2172
    %v2177 = vadd.f32 %v2167, %v2173
    %v2178 = vadd.f32 %v2168, %v2174
    %s2179 = sld [smem:[#allocation2 + $0xdc]]
    %v2180 = vstv %s2179
    %v2181 = vadd.f32 %v2175, %v2180
    %v2182 = vadd.f32 %v2176, %v2180
    %v2183 = vadd.f32 %v2177, %v2180
    %v2184 = vadd.f32 %v2178, %v2180
    %v2185 = vmul.f32 %v2181, 0.01
    %v2186 = vmul.f32 %v2182, 0.01
    %v2187 = vmul.f32 %v2183, 0.01
    %v2188 = vmul.f32 %v2184, 0.01
    %v2189 = vmax.f32 %v2181, %v2185
    %v2190 = vmax.f32 %v2182, %v2186
    %v2191 = vmax.f32 %v2183, %v2187
    %v2192 = vmax.f32 %v2184, %v2188
    %s2193 = sld [smem:[#allocation2 + $0xd4]]
    %v2194 = vstv %s2193
    %v2195 = vmul.f32 %v2194, %v1709
    %v2196 = vmul.f32 %v2194, %v1710
    %v2197 = vmul.f32 %v2194, %v1711
    %v2198 = vmul.f32 %v2194, %v1712
    %s2199 = sld [smem:[#allocation2 + $0xd5]]
    %v2200 = vstv %s2199
    %v2201 = vmul.f32 %v2200, %v1769
    %v2202 = vmul.f32 %v2200, %v1770
    %v2203 = vmul.f32 %v2200, %v1771
    %v2204 = vmul.f32 %v2200, %v1772
    %v2205 = vadd.f32 %v2195, %v2201
    %v2206 = vadd.f32 %v2196, %v2202
    %v2207 = vadd.f32 %v2197, %v2203
    %v2208 = vadd.f32 %v2198, %v2204
    %s2209 = sld [smem:[#allocation2 + $0xd6]]
    %v2210 = vstv %s2209
    %v2211 = vmul.f32 %v2210, %v1829
    %v2212 = vmul.f32 %v2210, %v1830
    %v2213 = vmul.f32 %v2210, %v1831
    %v2214 = vmul.f32 %v2210, %v1832
    %v2215 = vadd.f32 %v2205, %v2211
    %v2216 = vadd.f32 %v2206, %v2212
    %v2217 = vadd.f32 %v2207, %v2213
    %v2218 = vadd.f32 %v2208, %v2214
    %s2219 = sld [smem:[#allocation2 + $0xd7]]
    %v2220 = vstv %s2219
    %v2221 = vmul.f32 %v2220, %v1889
    %v2222 = vmul.f32 %v2220, %v1890
    %v2223 = vmul.f32 %v2220, %v1891
    %v2224 = vmul.f32 %v2220, %v1892
    %v2225 = vadd.f32 %v2215, %v2221
    %v2226 = vadd.f32 %v2216, %v2222
    %v2227 = vadd.f32 %v2217, %v2223
    %v2228 = vadd.f32 %v2218, %v2224
    %s2229 = sld [smem:[#allocation2 + $0xd8]]
    %v2230 = vstv %s2229
    %v2231 = vmul.f32 %v2230, %v1949
    %v2232 = vmul.f32 %v2230, %v1950
    %v2233 = vmul.f32 %v2230, %v1951
    %v2234 = vmul.f32 %v2230, %v1952
    %v2235 = vadd.f32 %v2225, %v2231
    %v2236 = vadd.f32 %v2226, %v2232
    %v2237 = vadd.f32 %v2227, %v2233
    %v2238 = vadd.f32 %v2228, %v2234
    %s2239 = sld [smem:[#allocation2 + $0xdd]]
    %v2240 = vstv %s2239
    %v2241 = vadd.f32 %v2235, %v2240
    %v2242 = vadd.f32 %v2236, %v2240
    %v2243 = vadd.f32 %v2237, %v2240
    %v2244 = vadd.f32 %v2238, %v2240
    %v2245 = vmul.f32 %v2241, 0.01
    %v2246 = vmul.f32 %v2242, 0.01
    %v2247 = vmul.f32 %v2243, 0.01
    %v2248 = vmul.f32 %v2244, 0.01
    %v2249 = vmax.f32 %v2241, %v2245
    %v2250 = vmax.f32 %v2242, %v2246
    %v2251 = vmax.f32 %v2243, %v2247
    %v2252 = vmax.f32 %v2244, %v2248
    %s2253 = sld [smem:[#allocation2 + $0xde]]
    %v2254 = vstv %s2253
    %v2255 = vmul.f32 %v2254, %v2009
    %v2256 = vmul.f32 %v2254, %v2010
    %v2257 = vmul.f32 %v2254, %v2011
    %v2258 = vmul.f32 %v2254, %v2012
    %s2259 = sld [smem:[#allocation2 + $0xdf]]
    %v2260 = vstv %s2259
    %v2261 = vmul.f32 %v2260, %v2069
    %v2262 = vmul.f32 %v2260, %v2070
    %v2263 = vmul.f32 %v2260, %v2071
    %v2264 = vmul.f32 %v2260, %v2072
    %v2265 = vadd.f32 %v2255, %v2261
    %v2266 = vadd.f32 %v2256, %v2262
    %v2267 = vadd.f32 %v2257, %v2263
    %v2268 = vadd.f32 %v2258, %v2264
    %s2269 = sld [smem:[#allocation2 + $0xe0]]
    %v2270 = vstv %s2269
    %v2271 = vmul.f32 %v2270, %v2129
    %v2272 = vmul.f32 %v2270, %v2130
    %v2273 = vmul.f32 %v2270, %v2131
    %v2274 = vmul.f32 %v2270, %v2132
    %v2275 = vadd.f32 %v2265, %v2271
    %v2276 = vadd.f32 %v2266, %v2272
    %v2277 = vadd.f32 %v2267, %v2273
    %v2278 = vadd.f32 %v2268, %v2274
    %s2279 = sld [smem:[#allocation2 + $0xe1]]
    %v2280 = vstv %s2279
    %v2281 = vmul.f32 %v2280, %v2189
    %v2282 = vmul.f32 %v2280, %v2190
    %v2283 = vmul.f32 %v2280, %v2191
    %v2284 = vmul.f32 %v2280, %v2192
    %v2285 = vadd.f32 %v2275, %v2281
    %v2286 = vadd.f32 %v2276, %v2282
    %v2287 = vadd.f32 %v2277, %v2283
    %v2288 = vadd.f32 %v2278, %v2284
    %s2289 = sld [smem:[#allocation2 + $0xe2]]
    %v2290 = vstv %s2289
    %v2291 = vmul.f32 %v2290, %v2249
    %v2292 = vmul.f32 %v2290, %v2250
    %v2293 = vmul.f32 %v2290, %v2251
    %v2294 = vmul.f32 %v2290, %v2252
    %v2295 = vadd.f32 %v2285, %v2291
    %v2296 = vadd.f32 %v2286, %v2292
    %v2297 = vadd.f32 %v2287, %v2293
    %v2298 = vadd.f32 %v2288, %v2294
    %s2299 = sld [smem:[#allocation2 + $0xe3]]
    %v2300 = vstv %s2299
    %v2301 = vadd.f32 %v2295, %v2300
    %v2302 = vadd.f32 %v2296, %v2300
    %v2303 = vadd.f32 %v2297, %v2300
    %v2304 = vadd.f32 %v2298, %v2300
    %s2305 = scalar_lea.vmem %s2, %s1547
    %2306 = vst [vmem:[%s2305] sm:$0xff] %v2301
    %2307 = vst [vmem:[%s2305 + $0x8] sm:$0xff] %v2302
    %2308 = vst [vmem:[%s2305 + $0x10] sm:$0xff] %v2303
    %2309 = vst [vmem:[%s2305 + $0x18] sm:$0xff] %v2304
    // Predicated region
    $region14: #{autoencoder_forward.1} parent=1 // pred_check
      _
    $region15: #{autoencoder_forward.1} parent=1 // pred_check_branch
      %2311 = sbr.rel (0) target = $region17
    $region16: #{autoencoder_forward.1} parent=1 // pred_region
      _
    $region17: #{autoencoder_forward.1} parent=1 // pred_fallthru
      _
    // Predicated region
    $region18: #{autoencoder_forward.1} parent=1 // pred_check
      _
    $region19: #{autoencoder_forward.1} parent=1 // pred_check_branch
      %2313 = sbr.rel (0) target = $region21
    $region20: #{autoencoder_forward.1} parent=1 // pred_region
      _
    $region21: #{autoencoder_forward.1} parent=1 // pred_fallthru
      _
    %2314 = vsyncpa [#allocation3], 1

</llo_original>
